<compile_context>
chip_gen: v7x
topology: tpu7x:2x2x1
jax: 0.10.0
libtpu: 0.0.40
codegen_flags: <defaults>
</compile_context>

<pallas_src>
import functools

import jax
import jax.numpy as jnp
from jax.experimental import pallas as pl
from jax.experimental.pallas import tpu as pltpu


def _double_conv_kernel(x_ref, w1_ref, b1_ref, g1_ref, be1_ref,
                        w2_ref, b2_ref, g2_ref, be2_ref, out_ref,
                        xpad, ypad, *, N, H, W, Cin, Cout, eps, slope):
    """Fused (conv3x3 + bias + LeakyReLU + BN) x 2, everything in VMEM.

    x_ref   : (N*H, W*Cin)               lane-dense input
    w*_ref  : (9, W*Cin_or_out, W*Cout)  block-diagonal per-tap weights
    b*_ref  : (1, W*Cout)                conv bias, pre-tiled over W lanes
    g*/be*  : (1, Cout)                  BN gamma / beta (per channel)
    out_ref : (N*H, W*Cout)              lane-dense output slab
    xpad    : (N, H+2, (W+2)*Cin)  VMEM  zero-halo padded input
    ypad    : (N, H+2, (W+2)*Cout) VMEM  zero-halo padded intermediate
    """
    NH = N * H
    inv_cnt = 1.0 / float(N * H * W)

    def pad_into(pad_ref, y_ld, C):
        # Zero ONLY the 1-pixel halo (4 thin strips); interior is fully
        # overwritten right after, so no full-buffer zero pass is needed.
        PL = (W + 2) * C
        pad_ref[:, 0:1, :] = jnp.zeros((N, 1, PL), jnp.float32)
        pad_ref[:, H + 1:H + 2, :] = jnp.zeros((N, 1, PL), jnp.float32)
        pad_ref[:, :, 0:C] = jnp.zeros((N, H + 2, C), jnp.float32)
        pad_ref[:, :, (W + 1) * C:] = jnp.zeros((N, H + 2, C), jnp.float32)
        pad_ref[:, 1:H + 1, C:(W + 1) * C] = y_ld.reshape(N, H, W * C)

    def conv3x3(pad_ref, w_ref, C):
        # 9-tap shift-and-accumulate: each tap is one lane-dense MXU matmul
        # (NH, W*C) @ (W*C, W*Cout) accumulated in f32 (no im2col scratch).
        acc = jnp.zeros((NH, W * Cout), jnp.float32)
        for t in range(9):
            dh, dw = t // 3, t % 3
            patch = pad_ref[:, dh:dh + H, dw * C:(dw + W) * C]   # (N,H,W*C)
            acc = acc + jnp.dot(patch.reshape(NH, W * C), w_ref[t],
                                preferred_element_type=jnp.float32)
        return acc

    def fold_lanes(v):
        # (1, W*Cout) per-lane stats -> (1, Cout) per-channel stats.
        s = v[:, 0:Cout]
        for w in range(1, W):
            s = s + v[:, w * Cout:(w + 1) * Cout]
        return s

    def tile_lanes(v):
        # (1, Cout) -> (1, W*Cout), matching lane order w*Cout + c.
        return jnp.concatenate([v] * W, axis=1)

    def bias_leaky_bn(y, b_ld_ref, g_ref, be_ref):
        y = y + b_ld_ref[...]                               # conv bias
        y = jnp.where(y > 0, y, slope * y)                  # LeakyReLU(0.2)
        # One-pass BatchNorm2d (training mode, biased variance), f32 stats.
        s_ld = jnp.sum(y, axis=0, keepdims=True)            # (1, W*Cout)
        q_ld = jnp.sum(y * y, axis=0, keepdims=True)        # (1, W*Cout)
        mean_c = fold_lanes(s_ld) * inv_cnt                 # (1, Cout)
        ex2_c = fold_lanes(q_ld) * inv_cnt
        var_c = jnp.maximum(ex2_c - mean_c * mean_c, 0.0)   # clamp >= 0
        scale_c = g_ref[...] * jax.lax.rsqrt(var_c + eps)
        shift_c = be_ref[...] - mean_c * scale_c
        return y * tile_lanes(scale_c) + tile_lanes(shift_c)

    # ---- block 1: pad -> conv -> bias/LeakyReLU/BN -------------------------
    pad_into(xpad, x_ref[...], Cin)
    y1 = bias_leaky_bn(conv3x3(xpad, w1_ref, Cin), b1_ref, g1_ref, be1_ref)

    # ---- block 2: intermediate never leaves VMEM ---------------------------
    pad_into(ypad, y1, Cout)
    y2 = bias_leaky_bn(conv3x3(ypad, w2_ref, Cout), b2_ref, g2_ref, be2_ref)

    # ---- lane-dense output: single dense store -----------------------------
    out_ref[...] = y2


def double_conv_block(x_nchw, params, *, eps=1e-5, slope=0.2):
    """DoubleConvBlock forward. Input/output NCHW (PyTorch convention)."""
    x = jnp.transpose(x_nchw, (0, 2, 3, 1)).astype(jnp.float32)   # NHWC
    (w1, b1, g1, be1), (w2, b2, g2, be2) = params
    N, H, W, Cin = x.shape
    Cout = w1.shape[-1]
    NH = N * H

    # Lane-dense input view: free, identical HBM layout to NHWC.
    x_ld = x.reshape(NH, W * Cin)

    eyeW = jnp.eye(W, dtype=jnp.float32)

    def pack_w(w_hwio, c):
        # HWIO (3,3,c,Cout) -> 9 block-diagonal (W*c, W*Cout) tap matrices:
        # tap t's (c,Cout) weight is placed at blocks (w,w), turning the
        # per-pixel contraction into one lane-dense MXU matmul per tap.
        taps = w_hwio.astype(jnp.float32).reshape(9, c, Cout)
        bd = jnp.einsum('wv,tij->twivj', eyeW, taps)
        return bd.reshape(9, W * c, W * Cout)

    w1p = pack_w(w1, Cin)
    w2p = pack_w(w2, Cout)

    tile_b = lambda v: jnp.tile(v.reshape(1, Cout).astype(jnp.float32), (1, W))
    vec = lambda v: v.reshape(1, Cout).astype(jnp.float32)

    args = (x_ld, w1p, tile_b(b1), vec(g1), vec(be1),
            w2p, tile_b(b2), vec(g2), vec(be2))

    kernel = functools.partial(_double_conv_kernel, N=N, H=H, W=W,
                               Cin=Cin, Cout=Cout, eps=eps, slope=slope)

    def full(a):
        nd = a.ndim
        return pl.BlockSpec(a.shape, lambda i: (0,) * nd)

    out = pl.pallas_call(
        kernel,
        out_shape=jax.ShapeDtypeStruct((NH, W * Cout), jnp.float32),
        grid_spec=pltpu.PrefetchScalarGridSpec(
            num_scalar_prefetch=0,
            grid=(1,),
            in_specs=[full(a) for a in args],
            out_specs=pl.BlockSpec((NH, W * Cout), lambda i: (0, 0)),
            scratch_shapes=[
                pltpu.VMEM((N, H + 2, (W + 2) * Cin), jnp.float32),   # xpad
                pltpu.VMEM((N, H + 2, (W + 2) * Cout), jnp.float32),  # ypad
            ]),
        compiler_params=pltpu.CompilerParams(
            dimension_semantics=("arbitrary",),
            vmem_limit_bytes=32 * 1024 * 1024),
    )(*args)

    y = out.reshape(N, H, W, Cout)            # free: same HBM layout as NHWC
    return jnp.transpose(y, (0, 3, 1, 2))     # NHWC -> NCHW


# ---------------- pure-JAX reference (for correctness check) ----------------
def _ref_conv_block(x_nhwc, w_hwio, b, gamma, beta, eps=1e-5, slope=0.2):
    y = jax.lax.conv_general_dilated(
        x_nhwc, w_hwio, window_strides=(1, 1), padding=((1, 1), (1, 1)),
        dimension_numbers=("NHWC", "HWIO", "NHWC")) + b
    y = jnp.where(y > 0, y, slope * y)
    mean = jnp.mean(y, axis=(0, 1, 2), keepdims=True)
    var = jnp.mean(jnp.square(y - mean), axis=(0, 1, 2), keepdims=True)
    return (y - mean) * jax.lax.rsqrt(var + eps) * gamma + beta


def _ref_double_conv_block(x_nchw, params):
    x = jnp.transpose(x_nchw, (0, 2, 3, 1))
    (w1, b1, g1, be1), (w2, b2, g2, be2) = params
    y = _ref_conv_block(x, w1, b1, g1, be1)
    y = _ref_conv_block(y, w2, b2, g2, be2)
    return jnp.transpose(y, (0, 3, 1, 2))


def _init_params(key, in_channels, out_channels):
    """Deterministic synthetic params (Conv2d weight OIHW -> HWIO)."""
    def one_block(k, cin, cout):
        kw, kb, kg, kbe = jax.random.split(k, 4)
        fan_in = cin * 9
        w_oihw = jax.random.normal(kw, (cout, cin, 3, 3), jnp.float32)
        w_oihw = w_oihw * (1.0 / jnp.sqrt(fan_in))
        w_hwio = jnp.transpose(w_oihw, (2, 3, 1, 0))          # HWIO
        b = 0.1 * jax.random.normal(kb, (cout,), jnp.float32)
        gamma = 1.0 + 0.1 * jax.random.normal(kg, (cout,), jnp.float32)
        beta = 0.1 * jax.random.normal(kbe, (cout,), jnp.float32)
        return (w_hwio, b, gamma, beta)

    k1, k2 = jax.random.split(key)
    return (one_block(k1, in_channels, out_channels),
            one_block(k2, out_channels, out_channels))


if __name__ == "__main__":
    key = jax.random.PRNGKey(0)
    kx, kp = jax.random.split(key)

    N, Cin, Cout, H, W = 2, 4, 8, 16, 16
    x = jax.random.normal(kx, (N, Cin, H, W), jnp.float32)    # NCHW input
    params = _init_params(kp, Cin, Cout)

    out = jax.block_until_ready(double_conv_block(x, params))
    ref = _ref_double_conv_block(x, params)

    assert out.shape == (N, Cout, H, W), out.shape
    max_err = float(jnp.max(jnp.abs(out - ref)))
    assert jnp.allclose(out, ref, atol=2e-3, rtol=2e-3), max_err

    print("KERNEL_OK")
</pallas_src>

<mosaic_0001>
module attributes {stable_mosaic.version = 11 : i64} {
  func.func @_double_conv_kernel(%arg0: i32, %arg1: memref<32x64xf32, #tpu.memory_space<vmem>>, %arg2: memref<9x64x128xf32, #tpu.memory_space<vmem>>, %arg3: memref<1x128xf32, #tpu.memory_space<vmem>>, %arg4: memref<1x8xf32, #tpu.memory_space<vmem>>, %arg5: memref<1x8xf32, #tpu.memory_space<vmem>>, %arg6: memref<9x128x128xf32, #tpu.memory_space<vmem>>, %arg7: memref<1x128xf32, #tpu.memory_space<vmem>>, %arg8: memref<1x8xf32, #tpu.memory_space<vmem>>, %arg9: memref<1x8xf32, #tpu.memory_space<vmem>>, %arg10: memref<32x128xf32, #tpu.memory_space<vmem>>, %arg11: memref<2x18x72xf32, #tpu.memory_space<vmem>>, %arg12: memref<2x18x144xf32, #tpu.memory_space<vmem>>) attributes {dimension_semantics = [#tpu.dimension_semantics<arbitrary>], iteration_bounds = array<i64: 1>, scalar_prefetch = 0 : i64, scratch_operands = 2 : i64, tpu.core_type = #tpu.core_type<tc>, window_params = [{pipeline_mode = #tpu.pipeline_mode<synchronous>, transform_indices = @transform_0, window_bounds = array<i64: 32, 64>}, {pipeline_mode = #tpu.pipeline_mode<synchronous>, transform_indices = @transform_1, window_bounds = array<i64: 9, 64, 128>}, {pipeline_mode = #tpu.pipeline_mode<synchronous>, transform_indices = @transform_2, window_bounds = array<i64: 1, 128>}, {pipeline_mode = #tpu.pipeline_mode<synchronous>, transform_indices = @transform_3, window_bounds = array<i64: 1, 8>}, {pipeline_mode = #tpu.pipeline_mode<synchronous>, transform_indices = @transform_4, window_bounds = array<i64: 1, 8>}, {pipeline_mode = #tpu.pipeline_mode<synchronous>, transform_indices = @transform_5, window_bounds = array<i64: 9, 128, 128>}, {pipeline_mode = #tpu.pipeline_mode<synchronous>, transform_indices = @transform_6, window_bounds = array<i64: 1, 128>}, {pipeline_mode = #tpu.pipeline_mode<synchronous>, transform_indices = @transform_7, window_bounds = array<i64: 1, 8>}, {pipeline_mode = #tpu.pipeline_mode<synchronous>, transform_indices = @transform_8, window_bounds = array<i64: 1, 8>}, {pipeline_mode = #tpu.pipeline_mode<synchronous>, transform_indices = @transform_9, window_bounds = array<i64: 32, 128>}]} {
    %c0 = arith.constant 0 : index
    %c0_0 = arith.constant 0 : index
    %0 = vector.load %arg1[%c0, %c0_0] : memref<32x64xf32, #tpu.memory_space<vmem>>, vector<32x64xf32>
    %cst = arith.constant 0.000000e+00 : f32
    %1 = vector.broadcast %cst : f32 to vector<2x1x72xf32>
    %c0_1 = arith.constant 0 : index
    %c0_2 = arith.constant 0 : index
    %c0_3 = arith.constant 0 : index
    %2 = vector.load %arg11[%c0_1, %c0_2, %c0_3] : memref<2x18x72xf32, #tpu.memory_space<vmem>>, vector<2x1x72xf32>
    tpu.vector_store %arg11[%c0_1, %c0_2, %c0_3], %1 {strides = array<i32>} : memref<2x18x72xf32, #tpu.memory_space<vmem>>, vector<2x1x72xf32>,
    %cst_4 = arith.constant 0.000000e+00 : f32
    %3 = vector.broadcast %cst_4 : f32 to vector<2x1x72xf32>
    %c0_5 = arith.constant 0 : index
    %c17 = arith.constant 17 : index
    %c0_6 = arith.constant 0 : index
    %4 = vector.load %arg11[%c0_5, %c17, %c0_6] : memref<2x18x72xf32, #tpu.memory_space<vmem>>, vector<2x1x72xf32>
    tpu.vector_store %arg11[%c0_5, %c17, %c0_6], %3 {strides = array<i32>} : memref<2x18x72xf32, #tpu.memory_space<vmem>>, vector<2x1x72xf32>,
    %cst_7 = arith.constant 0.000000e+00 : f32
    %5 = vector.broadcast %cst_7 : f32 to vector<2x18x4xf32>
    %c0_8 = arith.constant 0 : index
    %c0_9 = arith.constant 0 : index
    %c0_10 = arith.constant 0 : index
    %6 = vector.load %arg11[%c0_8, %c0_9, %c0_10] : memref<2x18x72xf32, #tpu.memory_space<vmem>>, vector<2x18x4xf32>
    tpu.vector_store %arg11[%c0_8, %c0_9, %c0_10], %5 {strides = array<i32>} : memref<2x18x72xf32, #tpu.memory_space<vmem>>, vector<2x18x4xf32>,
    %cst_11 = arith.constant 0.000000e+00 : f32
    %7 = vector.broadcast %cst_11 : f32 to vector<2x18x4xf32>
    %c0_12 = arith.constant 0 : index
    %c0_13 = arith.constant 0 : index
    %c68 = arith.constant 68 : index
    %8 = vector.load %arg11[%c0_12, %c0_13, %c68] : memref<2x18x72xf32, #tpu.memory_space<vmem>>, vector<2x18x4xf32>
    tpu.vector_store %arg11[%c0_12, %c0_13, %c68], %7 {strides = array<i32>} : memref<2x18x72xf32, #tpu.memory_space<vmem>>, vector<2x18x4xf32>,
    %9 = vector.shape_cast %0 : vector<32x64xf32> to vector<2x16x64xf32>
    %c0_14 = arith.constant 0 : index
    %c1 = arith.constant 1 : index
    %c4 = arith.constant 4 : index
    %10 = vector.load %arg11[%c0_14, %c1, %c4] : memref<2x18x72xf32, #tpu.memory_space<vmem>>, vector<2x16x64xf32>
    tpu.vector_store %arg11[%c0_14, %c1, %c4], %9 {strides = array<i32>} : memref<2x18x72xf32, #tpu.memory_space<vmem>>, vector<2x16x64xf32>,
    %cst_15 = arith.constant 0.000000e+00 : f32
    %11 = vector.broadcast %cst_15 : f32 to vector<32x128xf32>
    %c0_16 = arith.constant 0 : index
    %c0_17 = arith.constant 0 : index
    %c0_18 = arith.constant 0 : index
    %12 = vector.load %arg11[%c0_16, %c0_17, %c0_18] : memref<2x18x72xf32, #tpu.memory_space<vmem>>, vector<2x16x64xf32>
    %13 = vector.shape_cast %12 : vector<2x16x64xf32> to vector<32x64xf32>
    %c0_19 = arith.constant 0 : index
    %c0_20 = arith.constant 0 : index
    %c0_21 = arith.constant 0 : index
    %14 = vector.load %arg2[%c0_19, %c0_20, %c0_21] : memref<9x64x128xf32, #tpu.memory_space<vmem>>, vector<1x64x128xf32>
    %15 = vector.shape_cast %14 : vector<1x64x128xf32> to vector<64x128xf32>
    %cst_22 = arith.constant dense<0.000000e+00> : vector<32x128xf32>
    %16 = tpu.matmul %13, %15, %cst_22 {dimension_numbers = #tpu.dot_dimension_numbers<[1], [0], [0], [1], [0, 0, 1, 1], [], []>} : vector<32x64xf32>, vector<64x128xf32>, vector<32x128xf32> -> vector<32x128xf32>
    %17 = arith.addf %11, %16 : vector<32x128xf32>
    %c0_23 = arith.constant 0 : index
    %c0_24 = arith.constant 0 : index
    %c4_25 = arith.constant 4 : index
    %18 = vector.load %arg11[%c0_23, %c0_24, %c4_25] : memref<2x18x72xf32, #tpu.memory_space<vmem>>, vector<2x16x64xf32>
    %19 = vector.shape_cast %18 : vector<2x16x64xf32> to vector<32x64xf32>
    %c1_26 = arith.constant 1 : index
    %c0_27 = arith.constant 0 : index
    %c0_28 = arith.constant 0 : index
    %20 = vector.load %arg2[%c1_26, %c0_27, %c0_28] : memref<9x64x128xf32, #tpu.memory_space<vmem>>, vector<1x64x128xf32>
    %21 = vector.shape_cast %20 : vector<1x64x128xf32> to vector<64x128xf32>
    %cst_29 = arith.constant dense<0.000000e+00> : vector<32x128xf32>
    %22 = tpu.matmul %19, %21, %cst_29 {dimension_numbers = #tpu.dot_dimension_numbers<[1], [0], [0], [1], [0, 0, 1, 1], [], []>} : vector<32x64xf32>, vector<64x128xf32>, vector<32x128xf32> -> vector<32x128xf32>
    %23 = arith.addf %17, %22 : vector<32x128xf32>
    %c0_30 = arith.constant 0 : index
    %c0_31 = arith.constant 0 : index
    %c8 = arith.constant 8 : index
    %24 = vector.load %arg11[%c0_30, %c0_31, %c8] : memref<2x18x72xf32, #tpu.memory_space<vmem>>, vector<2x16x64xf32>
    %25 = vector.shape_cast %24 : vector<2x16x64xf32> to vector<32x64xf32>
    %c2 = arith.constant 2 : index
    %c0_32 = arith.constant 0 : index
    %c0_33 = arith.constant 0 : index
    %26 = vector.load %arg2[%c2, %c0_32, %c0_33] : memref<9x64x128xf32, #tpu.memory_space<vmem>>, vector<1x64x128xf32>
    %27 = vector.shape_cast %26 : vector<1x64x128xf32> to vector<64x128xf32>
    %cst_34 = arith.constant dense<0.000000e+00> : vector<32x128xf32>
    %28 = tpu.matmul %25, %27, %cst_34 {dimension_numbers = #tpu.dot_dimension_numbers<[1], [0], [0], [1], [0, 0, 1, 1], [], []>} : vector<32x64xf32>, vector<64x128xf32>, vector<32x128xf32> -> vector<32x128xf32>
    %29 = arith.addf %23, %28 : vector<32x128xf32>
    %c0_35 = arith.constant 0 : index
    %c1_36 = arith.constant 1 : index
    %c0_37 = arith.constant 0 : index
    %30 = vector.load %arg11[%c0_35, %c1_36, %c0_37] : memref<2x18x72xf32, #tpu.memory_space<vmem>>, vector<2x16x64xf32>
    %31 = vector.shape_cast %30 : vector<2x16x64xf32> to vector<32x64xf32>
    %c3 = arith.constant 3 : index
    %c0_38 = arith.constant 0 : index
    %c0_39 = arith.constant 0 : index
    %32 = vector.load %arg2[%c3, %c0_38, %c0_39] : memref<9x64x128xf32, #tpu.memory_space<vmem>>, vector<1x64x128xf32>
    %33 = vector.shape_cast %32 : vector<1x64x128xf32> to vector<64x128xf32>
    %cst_40 = arith.constant dense<0.000000e+00> : vector<32x128xf32>
    %34 = tpu.matmul %31, %33, %cst_40 {dimension_numbers = #tpu.dot_dimension_numbers<[1], [0], [0], [1], [0, 0, 1, 1], [], []>} : vector<32x64xf32>, vector<64x128xf32>, vector<32x128xf32> -> vector<32x128xf32>
    %35 = arith.addf %29, %34 : vector<32x128xf32>
    %c0_41 = arith.constant 0 : index
    %c1_42 = arith.constant 1 : index
    %c4_43 = arith.constant 4 : index
    %36 = vector.load %arg11[%c0_41, %c1_42, %c4_43] : memref<2x18x72xf32, #tpu.memory_space<vmem>>, vector<2x16x64xf32>
    %37 = vector.shape_cast %36 : vector<2x16x64xf32> to vector<32x64xf32>
    %c4_44 = arith.constant 4 : index
    %c0_45 = arith.constant 0 : index
    %c0_46 = arith.constant 0 : index
    %38 = vector.load %arg2[%c4_44, %c0_45, %c0_46] : memref<9x64x128xf32, #tpu.memory_space<vmem>>, vector<1x64x128xf32>
    %39 = vector.shape_cast %38 : vector<1x64x128xf32> to vector<64x128xf32>
    %cst_47 = arith.constant dense<0.000000e+00> : vector<32x128xf32>
    %40 = tpu.matmul %37, %39, %cst_47 {dimension_numbers = #tpu.dot_dimension_numbers<[1], [0], [0], [1], [0, 0, 1, 1], [], []>} : vector<32x64xf32>, vector<64x128xf32>, vector<32x128xf32> -> vector<32x128xf32>
    %41 = arith.addf %35, %40 : vector<32x128xf32>
    %c0_48 = arith.constant 0 : index
    %c1_49 = arith.constant 1 : index
    %c8_50 = arith.constant 8 : index
    %42 = vector.load %arg11[%c0_48, %c1_49, %c8_50] : memref<2x18x72xf32, #tpu.memory_space<vmem>>, vector<2x16x64xf32>
    %43 = vector.shape_cast %42 : vector<2x16x64xf32> to vector<32x64xf32>
    %c5 = arith.constant 5 : index
    %c0_51 = arith.constant 0 : index
    %c0_52 = arith.constant 0 : index
    %44 = vector.load %arg2[%c5, %c0_51, %c0_52] : memref<9x64x128xf32, #tpu.memory_space<vmem>>, vector<1x64x128xf32>
    %45 = vector.shape_cast %44 : vector<1x64x128xf32> to vector<64x128xf32>
    %cst_53 = arith.constant dense<0.000000e+00> : vector<32x128xf32>
    %46 = tpu.matmul %43, %45, %cst_53 {dimension_numbers = #tpu.dot_dimension_numbers<[1], [0], [0], [1], [0, 0, 1, 1], [], []>} : vector<32x64xf32>, vector<64x128xf32>, vector<32x128xf32> -> vector<32x128xf32>
    %47 = arith.addf %41, %46 : vector<32x128xf32>
    %c0_54 = arith.constant 0 : index
    %c2_55 = arith.constant 2 : index
    %c0_56 = arith.constant 0 : index
    %48 = vector.load %arg11[%c0_54, %c2_55, %c0_56] : memref<2x18x72xf32, #tpu.memory_space<vmem>>, vector<2x16x64xf32>
    %49 = vector.shape_cast %48 : vector<2x16x64xf32> to vector<32x64xf32>
    %c6 = arith.constant 6 : index
    %c0_57 = arith.constant 0 : index
    %c0_58 = arith.constant 0 : index
    %50 = vector.load %arg2[%c6, %c0_57, %c0_58] : memref<9x64x128xf32, #tpu.memory_space<vmem>>, vector<1x64x128xf32>
    %51 = vector.shape_cast %50 : vector<1x64x128xf32> to vector<64x128xf32>
    %cst_59 = arith.constant dense<0.000000e+00> : vector<32x128xf32>
    %52 = tpu.matmul %49, %51, %cst_59 {dimension_numbers = #tpu.dot_dimension_numbers<[1], [0], [0], [1], [0, 0, 1, 1], [], []>} : vector<32x64xf32>, vector<64x128xf32>, vector<32x128xf32> -> vector<32x128xf32>
    %53 = arith.addf %47, %52 : vector<32x128xf32>
    %c0_60 = arith.constant 0 : index
    %c2_61 = arith.constant 2 : index
    %c4_62 = arith.constant 4 : index
    %54 = vector.load %arg11[%c0_60, %c2_61, %c4_62] : memref<2x18x72xf32, #tpu.memory_space<vmem>>, vector<2x16x64xf32>
    %55 = vector.shape_cast %54 : vector<2x16x64xf32> to vector<32x64xf32>
    %c7 = arith.constant 7 : index
    %c0_63 = arith.constant 0 : index
    %c0_64 = arith.constant 0 : index
    %56 = vector.load %arg2[%c7, %c0_63, %c0_64] : memref<9x64x128xf32, #tpu.memory_space<vmem>>, vector<1x64x128xf32>
    %57 = vector.shape_cast %56 : vector<1x64x128xf32> to vector<64x128xf32>
    %cst_65 = arith.constant dense<0.000000e+00> : vector<32x128xf32>
    %58 = tpu.matmul %55, %57, %cst_65 {dimension_numbers = #tpu.dot_dimension_numbers<[1], [0], [0], [1], [0, 0, 1, 1], [], []>} : vector<32x64xf32>, vector<64x128xf32>, vector<32x128xf32> -> vector<32x128xf32>
    %59 = arith.addf %53, %58 : vector<32x128xf32>
    %c0_66 = arith.constant 0 : index
    %c2_67 = arith.constant 2 : index
    %c8_68 = arith.constant 8 : index
    %60 = vector.load %arg11[%c0_66, %c2_67, %c8_68] : memref<2x18x72xf32, #tpu.memory_space<vmem>>, vector<2x16x64xf32>
    %61 = vector.shape_cast %60 : vector<2x16x64xf32> to vector<32x64xf32>
    %c8_69 = arith.constant 8 : index
    %c0_70 = arith.constant 0 : index
    %c0_71 = arith.constant 0 : index
    %62 = vector.load %arg2[%c8_69, %c0_70, %c0_71] : memref<9x64x128xf32, #tpu.memory_space<vmem>>, vector<1x64x128xf32>
    %63 = vector.shape_cast %62 : vector<1x64x128xf32> to vector<64x128xf32>
    %cst_72 = arith.constant dense<0.000000e+00> : vector<32x128xf32>
    %64 = tpu.matmul %61, %63, %cst_72 {dimension_numbers = #tpu.dot_dimension_numbers<[1], [0], [0], [1], [0, 0, 1, 1], [], []>} : vector<32x64xf32>, vector<64x128xf32>, vector<32x128xf32> -> vector<32x128xf32>
    %65 = arith.addf %59, %64 : vector<32x128xf32>
    %c0_73 = arith.constant 0 : index
    %c0_74 = arith.constant 0 : index
    %66 = vector.load %arg3[%c0_73, %c0_74] : memref<1x128xf32, #tpu.memory_space<vmem>>, vector<1x128xf32>
    %67 = vector.broadcast %66 : vector<1x128xf32> to vector<32x128xf32>
    %68 = arith.addf %65, %67 : vector<32x128xf32>
    %cst_75 = arith.constant 0.000000e+00 : f32
    %69 = vector.broadcast %cst_75 : f32 to vector<32x128xf32>
    %70 = arith.cmpf ogt, %68, %69 : vector<32x128xf32>
    %cst_76 = arith.constant 2.000000e-01 : f32
    %71 = vector.broadcast %cst_76 : f32 to vector<32x128xf32>
    %72 = arith.mulf %71, %68 : vector<32x128xf32>
    %73 = arith.select %70, %68, %72 : vector<32x128xi1>, vector<32x128xf32>
    %cst_77 = arith.constant dense<0.000000e+00> : vector<128xf32>
    %74 = vector.multi_reduction <add>, %73, %cst_77 [0] : vector<32x128xf32> to vector<128xf32>
    %75 = vector.shape_cast %74 : vector<128xf32> to vector<1x128xf32>
    %76 = arith.mulf %73, %73 : vector<32x128xf32>
    %cst_78 = arith.constant dense<0.000000e+00> : vector<128xf32>
    %77 = vector.multi_reduction <add>, %76, %cst_78 [0] : vector<32x128xf32> to vector<128xf32>
    %78 = vector.shape_cast %77 : vector<128xf32> to vector<1x128xf32>
    %79 = vector.extract_strided_slice %75 {offsets = [0, 0], sizes = [1, 8], strides = [1, 1]} : vector<1x128xf32> to vector<1x8xf32>
    %80 = vector.extract_strided_slice %75 {offsets = [0, 8], sizes = [1, 8], strides = [1, 1]} : vector<1x128xf32> to vector<1x8xf32>
    %81 = arith.addf %79, %80 : vector<1x8xf32>
    %82 = vector.extract_strided_slice %75 {offsets = [0, 16], sizes = [1, 8], strides = [1, 1]} : vector<1x128xf32> to vector<1x8xf32>
    %83 = arith.addf %81, %82 : vector<1x8xf32>
    %84 = vector.extract_strided_slice %75 {offsets = [0, 24], sizes = [1, 8], strides = [1, 1]} : vector<1x128xf32> to vector<1x8xf32>
    %85 = arith.addf %83, %84 : vector<1x8xf32>
    %86 = vector.extract_strided_slice %75 {offsets = [0, 32], sizes = [1, 8], strides = [1, 1]} : vector<1x128xf32> to vector<1x8xf32>
    %87 = arith.addf %85, %86 : vector<1x8xf32>
    %88 = vector.extract_strided_slice %75 {offsets = [0, 40], sizes = [1, 8], strides = [1, 1]} : vector<1x128xf32> to vector<1x8xf32>
    %89 = arith.addf %87, %88 : vector<1x8xf32>
    %90 = vector.extract_strided_slice %75 {offsets = [0, 48], sizes = [1, 8], strides = [1, 1]} : vector<1x128xf32> to vector<1x8xf32>
    %91 = arith.addf %89, %90 : vector<1x8xf32>
    %92 = vector.extract_strided_slice %75 {offsets = [0, 56], sizes = [1, 8], strides = [1, 1]} : vector<1x128xf32> to vector<1x8xf32>
    %93 = arith.addf %91, %92 : vector<1x8xf32>
    %94 = vector.extract_strided_slice %75 {offsets = [0, 64], sizes = [1, 8], strides = [1, 1]} : vector<1x128xf32> to vector<1x8xf32>
    %95 = arith.addf %93, %94 : vector<1x8xf32>
    %96 = vector.extract_strided_slice %75 {offsets = [0, 72], sizes = [1, 8], strides = [1, 1]} : vector<1x128xf32> to vector<1x8xf32>
    %97 = arith.addf %95, %96 : vector<1x8xf32>
    %98 = vector.extract_strided_slice %75 {offsets = [0, 80], sizes = [1, 8], strides = [1, 1]} : vector<1x128xf32> to vector<1x8xf32>
    %99 = arith.addf %97, %98 : vector<1x8xf32>
    %100 = vector.extract_strided_slice %75 {offsets = [0, 88], sizes = [1, 8], strides = [1, 1]} : vector<1x128xf32> to vector<1x8xf32>
    %101 = arith.addf %99, %100 : vector<1x8xf32>
    %102 = vector.extract_strided_slice %75 {offsets = [0, 96], sizes = [1, 8], strides = [1, 1]} : vector<1x128xf32> to vector<1x8xf32>
    %103 = arith.addf %101, %102 : vector<1x8xf32>
    %104 = vector.extract_strided_slice %75 {offsets = [0, 104], sizes = [1, 8], strides = [1, 1]} : vector<1x128xf32> to vector<1x8xf32>
    %105 = arith.addf %103, %104 : vector<1x8xf32>
    %106 = vector.extract_strided_slice %75 {offsets = [0, 112], sizes = [1, 8], strides = [1, 1]} : vector<1x128xf32> to vector<1x8xf32>
    %107 = arith.addf %105, %106 : vector<1x8xf32>
    %108 = vector.extract_strided_slice %75 {offsets = [0, 120], sizes = [1, 8], strides = [1, 1]} : vector<1x128xf32> to vector<1x8xf32>
    %109 = arith.addf %107, %108 : vector<1x8xf32>
    %cst_79 = arith.constant 0.001953125 : f32
    %110 = vector.broadcast %cst_79 : f32 to vector<1x8xf32>
    %111 = arith.mulf %109, %110 : vector<1x8xf32>
    %112 = vector.extract_strided_slice %78 {offsets = [0, 0], sizes = [1, 8], strides = [1, 1]} : vector<1x128xf32> to vector<1x8xf32>
    %113 = vector.extract_strided_slice %78 {offsets = [0, 8], sizes = [1, 8], strides = [1, 1]} : vector<1x128xf32> to vector<1x8xf32>
    %114 = arith.addf %112, %113 : vector<1x8xf32>
    %115 = vector.extract_strided_slice %78 {offsets = [0, 16], sizes = [1, 8], strides = [1, 1]} : vector<1x128xf32> to vector<1x8xf32>
    %116 = arith.addf %114, %115 : vector<1x8xf32>
    %117 = vector.extract_strided_slice %78 {offsets = [0, 24], sizes = [1, 8], strides = [1, 1]} : vector<1x128xf32> to vector<1x8xf32>
    %118 = arith.addf %116, %117 : vector<1x8xf32>
    %119 = vector.extract_strided_slice %78 {offsets = [0, 32], sizes = [1, 8], strides = [1, 1]} : vector<1x128xf32> to vector<1x8xf32>
    %120 = arith.addf %118, %119 : vector<1x8xf32>
    %121 = vector.extract_strided_slice %78 {offsets = [0, 40], sizes = [1, 8], strides = [1, 1]} : vector<1x128xf32> to vector<1x8xf32>
    %122 = arith.addf %120, %121 : vector<1x8xf32>
    %123 = vector.extract_strided_slice %78 {offsets = [0, 48], sizes = [1, 8], strides = [1, 1]} : vector<1x128xf32> to vector<1x8xf32>
    %124 = arith.addf %122, %123 : vector<1x8xf32>
    %125 = vector.extract_strided_slice %78 {offsets = [0, 56], sizes = [1, 8], strides = [1, 1]} : vector<1x128xf32> to vector<1x8xf32>
    %126 = arith.addf %124, %125 : vector<1x8xf32>
    %127 = vector.extract_strided_slice %78 {offsets = [0, 64], sizes = [1, 8], strides = [1, 1]} : vector<1x128xf32> to vector<1x8xf32>
    %128 = arith.addf %126, %127 : vector<1x8xf32>
    %129 = vector.extract_strided_slice %78 {offsets = [0, 72], sizes = [1, 8], strides = [1, 1]} : vector<1x128xf32> to vector<1x8xf32>
    %130 = arith.addf %128, %129 : vector<1x8xf32>
    %131 = vector.extract_strided_slice %78 {offsets = [0, 80], sizes = [1, 8], strides = [1, 1]} : vector<1x128xf32> to vector<1x8xf32>
    %132 = arith.addf %130, %131 : vector<1x8xf32>
    %133 = vector.extract_strided_slice %78 {offsets = [0, 88], sizes = [1, 8], strides = [1, 1]} : vector<1x128xf32> to vector<1x8xf32>
    %134 = arith.addf %132, %133 : vector<1x8xf32>
    %135 = vector.extract_strided_slice %78 {offsets = [0, 96], sizes = [1, 8], strides = [1, 1]} : vector<1x128xf32> to vector<1x8xf32>
    %136 = arith.addf %134, %135 : vector<1x8xf32>
    %137 = vector.extract_strided_slice %78 {offsets = [0, 104], sizes = [1, 8], strides = [1, 1]} : vector<1x128xf32> to vector<1x8xf32>
    %138 = arith.addf %136, %137 : vector<1x8xf32>
    %139 = vector.extract_strided_slice %78 {offsets = [0, 112], sizes = [1, 8], strides = [1, 1]} : vector<1x128xf32> to vector<1x8xf32>
    %140 = arith.addf %138, %139 : vector<1x8xf32>
    %141 = vector.extract_strided_slice %78 {offsets = [0, 120], sizes = [1, 8], strides = [1, 1]} : vector<1x128xf32> to vector<1x8xf32>
    %142 = arith.addf %140, %141 : vector<1x8xf32>
    %cst_80 = arith.constant 0.001953125 : f32
    %143 = vector.broadcast %cst_80 : f32 to vector<1x8xf32>
    %144 = arith.mulf %142, %143 : vector<1x8xf32>
    %145 = arith.mulf %111, %111 : vector<1x8xf32>
    %146 = arith.subf %144, %145 : vector<1x8xf32>
    %cst_81 = arith.constant 0.000000e+00 : f32
    %147 = vector.broadcast %cst_81 : f32 to vector<1x8xf32>
    %148 = arith.maximumf %146, %147 : vector<1x8xf32>
    %c0_82 = arith.constant 0 : index
    %c0_83 = arith.constant 0 : index
    %149 = vector.load %arg4[%c0_82, %c0_83] : memref<1x8xf32, #tpu.memory_space<vmem>>, vector<1x8xf32>
    %cst_84 = arith.constant 9.99999974E-6 : f32
    %150 = vector.broadcast %cst_84 : f32 to vector<1x8xf32>
    %151 = arith.addf %148, %150 : vector<1x8xf32>
    %152 = math.rsqrt %151 : vector<1x8xf32>
    %153 = arith.mulf %149, %152 : vector<1x8xf32>
    %c0_85 = arith.constant 0 : index
    %c0_86 = arith.constant 0 : index
    %154 = vector.load %arg5[%c0_85, %c0_86] : memref<1x8xf32, #tpu.memory_space<vmem>>, vector<1x8xf32>
    %155 = arith.mulf %111, %153 : vector<1x8xf32>
    %156 = arith.subf %154, %155 : vector<1x8xf32>
    %157 = tpu.concatenate %153, %153, %153, %153, %153, %153, %153, %153, %153, %153, %153, %153, %153, %153, %153, %153 in 1 : vector<1x8xf32>, vector<1x8xf32>, vector<1x8xf32>, vector<1x8xf32>, vector<1x8xf32>, vector<1x8xf32>, vector<1x8xf32>, vector<1x8xf32>, vector<1x8xf32>, vector<1x8xf32>, vector<1x8xf32>, vector<1x8xf32>, vector<1x8xf32>, vector<1x8xf32>, vector<1x8xf32>, vector<1x8xf32> -> vector<1x128xf32>
    %158 = vector.broadcast %157 : vector<1x128xf32> to vector<32x128xf32>
    %159 = arith.mulf %73, %158 : vector<32x128xf32>
    %160 = tpu.concatenate %156, %156, %156, %156, %156, %156, %156, %156, %156, %156, %156, %156, %156, %156, %156, %156 in 1 : vector<1x8xf32>, vector<1x8xf32>, vector<1x8xf32>, vector<1x8xf32>, vector<1x8xf32>, vector<1x8xf32>, vector<1x8xf32>, vector<1x8xf32>, vector<1x8xf32>, vector<1x8xf32>, vector<1x8xf32>, vector<1x8xf32>, vector<1x8xf32>, vector<1x8xf32>, vector<1x8xf32>, vector<1x8xf32> -> vector<1x128xf32>
    %161 = vector.broadcast %160 : vector<1x128xf32> to vector<32x128xf32>
    %162 = arith.addf %159, %161 : vector<32x128xf32>
    %cst_87 = arith.constant 0.000000e+00 : f32
    %163 = vector.broadcast %cst_87 : f32 to vector<2x1x144xf32>
    %c0_88 = arith.constant 0 : index
    %c0_89 = arith.constant 0 : index
    %c0_90 = arith.constant 0 : index
    %164 = vector.load %arg12[%c0_88, %c0_89, %c0_90] : memref<2x18x144xf32, #tpu.memory_space<vmem>>, vector<2x1x144xf32>
    tpu.vector_store %arg12[%c0_88, %c0_89, %c0_90], %163 {strides = array<i32>} : memref<2x18x144xf32, #tpu.memory_space<vmem>>, vector<2x1x144xf32>,
    %cst_91 = arith.constant 0.000000e+00 : f32
    %165 = vector.broadcast %cst_91 : f32 to vector<2x1x144xf32>
    %c0_92 = arith.constant 0 : index
    %c17_93 = arith.constant 17 : index
    %c0_94 = arith.constant 0 : index
    %166 = vector.load %arg12[%c0_92, %c17_93, %c0_94] : memref<2x18x144xf32, #tpu.memory_space<vmem>>, vector<2x1x144xf32>
    tpu.vector_store %arg12[%c0_92, %c17_93, %c0_94], %165 {strides = array<i32>} : memref<2x18x144xf32, #tpu.memory_space<vmem>>, vector<2x1x144xf32>,
    %cst_95 = arith.constant 0.000000e+00 : f32
    %167 = vector.broadcast %cst_95 : f32 to vector<2x18x8xf32>
    %c0_96 = arith.constant 0 : index
    %c0_97 = arith.constant 0 : index
    %c0_98 = arith.constant 0 : index
    %168 = vector.load %arg12[%c0_96, %c0_97, %c0_98] : memref<2x18x144xf32, #tpu.memory_space<vmem>>, vector<2x18x8xf32>
    tpu.vector_store %arg12[%c0_96, %c0_97, %c0_98], %167 {strides = array<i32>} : memref<2x18x144xf32, #tpu.memory_space<vmem>>, vector<2x18x8xf32>,
    %cst_99 = arith.constant 0.000000e+00 : f32
    %169 = vector.broadcast %cst_99 : f32 to vector<2x18x8xf32>
    %c0_100 = arith.constant 0 : index
    %c0_101 = arith.constant 0 : index
    %c136 = arith.constant 136 : index
    %170 = vector.load %arg12[%c0_100, %c0_101, %c136] : memref<2x18x144xf32, #tpu.memory_space<vmem>>, vector<2x18x8xf32>
    tpu.vector_store %arg12[%c0_100, %c0_101, %c136], %169 {strides = array<i32>} : memref<2x18x144xf32, #tpu.memory_space<vmem>>, vector<2x18x8xf32>,
    %171 = vector.shape_cast %162 : vector<32x128xf32> to vector<2x16x128xf32>
    %c0_102 = arith.constant 0 : index
    %c1_103 = arith.constant 1 : index
    %c8_104 = arith.constant 8 : index
    %172 = vector.load %arg12[%c0_102, %c1_103, %c8_104] : memref<2x18x144xf32, #tpu.memory_space<vmem>>, vector<2x16x128xf32>
    tpu.vector_store %arg12[%c0_102, %c1_103, %c8_104], %171 {strides = array<i32>} : memref<2x18x144xf32, #tpu.memory_space<vmem>>, vector<2x16x128xf32>,
    %cst_105 = arith.constant 0.000000e+00 : f32
    %173 = vector.broadcast %cst_105 : f32 to vector<32x128xf32>
    %c0_106 = arith.constant 0 : index
    %c0_107 = arith.constant 0 : index
    %c0_108 = arith.constant 0 : index
    %174 = vector.load %arg12[%c0_106, %c0_107, %c0_108] : memref<2x18x144xf32, #tpu.memory_space<vmem>>, vector<2x16x128xf32>
    %175 = vector.shape_cast %174 : vector<2x16x128xf32> to vector<32x128xf32>
    %c0_109 = arith.constant 0 : index
    %c0_110 = arith.constant 0 : index
    %c0_111 = arith.constant 0 : index
    %176 = vector.load %arg6[%c0_109, %c0_110, %c0_111] : memref<9x128x128xf32, #tpu.memory_space<vmem>>, vector<1x128x128xf32>
    %177 = vector.shape_cast %176 : vector<1x128x128xf32> to vector<128x128xf32>
    %cst_112 = arith.constant dense<0.000000e+00> : vector<32x128xf32>
    %178 = tpu.matmul %175, %177, %cst_112 {dimension_numbers = #tpu.dot_dimension_numbers<[1], [0], [0], [1], [0, 0, 1, 1], [], []>} : vector<32x128xf32>, vector<128x128xf32>, vector<32x128xf32> -> vector<32x128xf32>
    %179 = arith.addf %173, %178 : vector<32x128xf32>
    %c0_113 = arith.constant 0 : index
    %c0_114 = arith.constant 0 : index
    %c8_115 = arith.constant 8 : index
    %180 = vector.load %arg12[%c0_113, %c0_114, %c8_115] : memref<2x18x144xf32, #tpu.memory_space<vmem>>, vector<2x16x128xf32>
    %181 = vector.shape_cast %180 : vector<2x16x128xf32> to vector<32x128xf32>
    %c1_116 = arith.constant 1 : index
    %c0_117 = arith.constant 0 : index
    %c0_118 = arith.constant 0 : index
    %182 = vector.load %arg6[%c1_116, %c0_117, %c0_118] : memref<9x128x128xf32, #tpu.memory_space<vmem>>, vector<1x128x128xf32>
    %183 = vector.shape_cast %182 : vector<1x128x128xf32> to vector<128x128xf32>
    %cst_119 = arith.constant dense<0.000000e+00> : vector<32x128xf32>
    %184 = tpu.matmul %181, %183, %cst_119 {dimension_numbers = #tpu.dot_dimension_numbers<[1], [0], [0], [1], [0, 0, 1, 1], [], []>} : vector<32x128xf32>, vector<128x128xf32>, vector<32x128xf32> -> vector<32x128xf32>
    %185 = arith.addf %179, %184 : vector<32x128xf32>
    %c0_120 = arith.constant 0 : index
    %c0_121 = arith.constant 0 : index
    %c16 = arith.constant 16 : index
    %186 = vector.load %arg12[%c0_120, %c0_121, %c16] : memref<2x18x144xf32, #tpu.memory_space<vmem>>, vector<2x16x128xf32>
    %187 = vector.shape_cast %186 : vector<2x16x128xf32> to vector<32x128xf32>
    %c2_122 = arith.constant 2 : index
    %c0_123 = arith.constant 0 : index
    %c0_124 = arith.constant 0 : index
    %188 = vector.load %arg6[%c2_122, %c0_123, %c0_124] : memref<9x128x128xf32, #tpu.memory_space<vmem>>, vector<1x128x128xf32>
    %189 = vector.shape_cast %188 : vector<1x128x128xf32> to vector<128x128xf32>
    %cst_125 = arith.constant dense<0.000000e+00> : vector<32x128xf32>
    %190 = tpu.matmul %187, %189, %cst_125 {dimension_numbers = #tpu.dot_dimension_numbers<[1], [0], [0], [1], [0, 0, 1, 1], [], []>} : vector<32x128xf32>, vector<128x128xf32>, vector<32x128xf32> -> vector<32x128xf32>
    %191 = arith.addf %185, %190 : vector<32x128xf32>
    %c0_126 = arith.constant 0 : index
    %c1_127 = arith.constant 1 : index
    %c0_128 = arith.constant 0 : index
    %192 = vector.load %arg12[%c0_126, %c1_127, %c0_128] : memref<2x18x144xf32, #tpu.memory_space<vmem>>, vector<2x16x128xf32>
    %193 = vector.shape_cast %192 : vector<2x16x128xf32> to vector<32x128xf32>
    %c3_129 = arith.constant 3 : index
    %c0_130 = arith.constant 0 : index
    %c0_131 = arith.constant 0 : index
    %194 = vector.load %arg6[%c3_129, %c0_130, %c0_131] : memref<9x128x128xf32, #tpu.memory_space<vmem>>, vector<1x128x128xf32>
    %195 = vector.shape_cast %194 : vector<1x128x128xf32> to vector<128x128xf32>
    %cst_132 = arith.constant dense<0.000000e+00> : vector<32x128xf32>
    %196 = tpu.matmul %193, %195, %cst_132 {dimension_numbers = #tpu.dot_dimension_numbers<[1], [0], [0], [1], [0, 0, 1, 1], [], []>} : vector<32x128xf32>, vector<128x128xf32>, vector<32x128xf32> -> vector<32x128xf32>
    %197 = arith.addf %191, %196 : vector<32x128xf32>
    %c0_133 = arith.constant 0 : index
    %c1_134 = arith.constant 1 : index
    %c8_135 = arith.constant 8 : index
    %198 = vector.load %arg12[%c0_133, %c1_134, %c8_135] : memref<2x18x144xf32, #tpu.memory_space<vmem>>, vector<2x16x128xf32>
    %199 = vector.shape_cast %198 : vector<2x16x128xf32> to vector<32x128xf32>
    %c4_136 = arith.constant 4 : index
    %c0_137 = arith.constant 0 : index
    %c0_138 = arith.constant 0 : index
    %200 = vector.load %arg6[%c4_136, %c0_137, %c0_138] : memref<9x128x128xf32, #tpu.memory_space<vmem>>, vector<1x128x128xf32>
    %201 = vector.shape_cast %200 : vector<1x128x128xf32> to vector<128x128xf32>
    %cst_139 = arith.constant dense<0.000000e+00> : vector<32x128xf32>
    %202 = tpu.matmul %199, %201, %cst_139 {dimension_numbers = #tpu.dot_dimension_numbers<[1], [0], [0], [1], [0, 0, 1, 1], [], []>} : vector<32x128xf32>, vector<128x128xf32>, vector<32x128xf32> -> vector<32x128xf32>
    %203 = arith.addf %197, %202 : vector<32x128xf32>
    %c0_140 = arith.constant 0 : index
    %c1_141 = arith.constant 1 : index
    %c16_142 = arith.constant 16 : index
    %204 = vector.load %arg12[%c0_140, %c1_141, %c16_142] : memref<2x18x144xf32, #tpu.memory_space<vmem>>, vector<2x16x128xf32>
    %205 = vector.shape_cast %204 : vector<2x16x128xf32> to vector<32x128xf32>
    %c5_143 = arith.constant 5 : index
    %c0_144 = arith.constant 0 : index
    %c0_145 = arith.constant 0 : index
    %206 = vector.load %arg6[%c5_143, %c0_144, %c0_145] : memref<9x128x128xf32, #tpu.memory_space<vmem>>, vector<1x128x128xf32>
    %207 = vector.shape_cast %206 : vector<1x128x128xf32> to vector<128x128xf32>
    %cst_146 = arith.constant dense<0.000000e+00> : vector<32x128xf32>
    %208 = tpu.matmul %205, %207, %cst_146 {dimension_numbers = #tpu.dot_dimension_numbers<[1], [0], [0], [1], [0, 0, 1, 1], [], []>} : vector<32x128xf32>, vector<128x128xf32>, vector<32x128xf32> -> vector<32x128xf32>
    %209 = arith.addf %203, %208 : vector<32x128xf32>
    %c0_147 = arith.constant 0 : index
    %c2_148 = arith.constant 2 : index
    %c0_149 = arith.constant 0 : index
    %210 = vector.load %arg12[%c0_147, %c2_148, %c0_149] : memref<2x18x144xf32, #tpu.memory_space<vmem>>, vector<2x16x128xf32>
    %211 = vector.shape_cast %210 : vector<2x16x128xf32> to vector<32x128xf32>
    %c6_150 = arith.constant 6 : index
    %c0_151 = arith.constant 0 : index
    %c0_152 = arith.constant 0 : index
    %212 = vector.load %arg6[%c6_150, %c0_151, %c0_152] : memref<9x128x128xf32, #tpu.memory_space<vmem>>, vector<1x128x128xf32>
    %213 = vector.shape_cast %212 : vector<1x128x128xf32> to vector<128x128xf32>
    %cst_153 = arith.constant dense<0.000000e+00> : vector<32x128xf32>
    %214 = tpu.matmul %211, %213, %cst_153 {dimension_numbers = #tpu.dot_dimension_numbers<[1], [0], [0], [1], [0, 0, 1, 1], [], []>} : vector<32x128xf32>, vector<128x128xf32>, vector<32x128xf32> -> vector<32x128xf32>
    %215 = arith.addf %209, %214 : vector<32x128xf32>
    %c0_154 = arith.constant 0 : index
    %c2_155 = arith.constant 2 : index
    %c8_156 = arith.constant 8 : index
    %216 = vector.load %arg12[%c0_154, %c2_155, %c8_156] : memref<2x18x144xf32, #tpu.memory_space<vmem>>, vector<2x16x128xf32>
    %217 = vector.shape_cast %216 : vector<2x16x128xf32> to vector<32x128xf32>
    %c7_157 = arith.constant 7 : index
    %c0_158 = arith.constant 0 : index
    %c0_159 = arith.constant 0 : index
    %218 = vector.load %arg6[%c7_157, %c0_158, %c0_159] : memref<9x128x128xf32, #tpu.memory_space<vmem>>, vector<1x128x128xf32>
    %219 = vector.shape_cast %218 : vector<1x128x128xf32> to vector<128x128xf32>
    %cst_160 = arith.constant dense<0.000000e+00> : vector<32x128xf32>
    %220 = tpu.matmul %217, %219, %cst_160 {dimension_numbers = #tpu.dot_dimension_numbers<[1], [0], [0], [1], [0, 0, 1, 1], [], []>} : vector<32x128xf32>, vector<128x128xf32>, vector<32x128xf32> -> vector<32x128xf32>
    %221 = arith.addf %215, %220 : vector<32x128xf32>
    %c0_161 = arith.constant 0 : index
    %c2_162 = arith.constant 2 : index
    %c16_163 = arith.constant 16 : index
    %222 = vector.load %arg12[%c0_161, %c2_162, %c16_163] : memref<2x18x144xf32, #tpu.memory_space<vmem>>, vector<2x16x128xf32>
    %223 = vector.shape_cast %222 : vector<2x16x128xf32> to vector<32x128xf32>
    %c8_164 = arith.constant 8 : index
    %c0_165 = arith.constant 0 : index
    %c0_166 = arith.constant 0 : index
    %224 = vector.load %arg6[%c8_164, %c0_165, %c0_166] : memref<9x128x128xf32, #tpu.memory_space<vmem>>, vector<1x128x128xf32>
    %225 = vector.shape_cast %224 : vector<1x128x128xf32> to vector<128x128xf32>
    %cst_167 = arith.constant dense<0.000000e+00> : vector<32x128xf32>
    %226 = tpu.matmul %223, %225, %cst_167 {dimension_numbers = #tpu.dot_dimension_numbers<[1], [0], [0], [1], [0, 0, 1, 1], [], []>} : vector<32x128xf32>, vector<128x128xf32>, vector<32x128xf32> -> vector<32x128xf32>
    %227 = arith.addf %221, %226 : vector<32x128xf32>
    %c0_168 = arith.constant 0 : index
    %c0_169 = arith.constant 0 : index
    %228 = vector.load %arg7[%c0_168, %c0_169] : memref<1x128xf32, #tpu.memory_space<vmem>>, vector<1x128xf32>
    %229 = vector.broadcast %228 : vector<1x128xf32> to vector<32x128xf32>
    %230 = arith.addf %227, %229 : vector<32x128xf32>
    %cst_170 = arith.constant 0.000000e+00 : f32
    %231 = vector.broadcast %cst_170 : f32 to vector<32x128xf32>
    %232 = arith.cmpf ogt, %230, %231 : vector<32x128xf32>
    %cst_171 = arith.constant 2.000000e-01 : f32
    %233 = vector.broadcast %cst_171 : f32 to vector<32x128xf32>
    %234 = arith.mulf %233, %230 : vector<32x128xf32>
    %235 = arith.select %232, %230, %234 : vector<32x128xi1>, vector<32x128xf32>
    %cst_172 = arith.constant dense<0.000000e+00> : vector<128xf32>
    %236 = vector.multi_reduction <add>, %235, %cst_172 [0] : vector<32x128xf32> to vector<128xf32>
    %237 = vector.shape_cast %236 : vector<128xf32> to vector<1x128xf32>
    %238 = arith.mulf %235, %235 : vector<32x128xf32>
    %cst_173 = arith.constant dense<0.000000e+00> : vector<128xf32>
    %239 = vector.multi_reduction <add>, %238, %cst_173 [0] : vector<32x128xf32> to vector<128xf32>
    %240 = vector.shape_cast %239 : vector<128xf32> to vector<1x128xf32>
    %241 = vector.extract_strided_slice %237 {offsets = [0, 0], sizes = [1, 8], strides = [1, 1]} : vector<1x128xf32> to vector<1x8xf32>
    %242 = vector.extract_strided_slice %237 {offsets = [0, 8], sizes = [1, 8], strides = [1, 1]} : vector<1x128xf32> to vector<1x8xf32>
    %243 = arith.addf %241, %242 : vector<1x8xf32>
    %244 = vector.extract_strided_slice %237 {offsets = [0, 16], sizes = [1, 8], strides = [1, 1]} : vector<1x128xf32> to vector<1x8xf32>
    %245 = arith.addf %243, %244 : vector<1x8xf32>
    %246 = vector.extract_strided_slice %237 {offsets = [0, 24], sizes = [1, 8], strides = [1, 1]} : vector<1x128xf32> to vector<1x8xf32>
    %247 = arith.addf %245, %246 : vector<1x8xf32>
    %248 = vector.extract_strided_slice %237 {offsets = [0, 32], sizes = [1, 8], strides = [1, 1]} : vector<1x128xf32> to vector<1x8xf32>
    %249 = arith.addf %247, %248 : vector<1x8xf32>
    %250 = vector.extract_strided_slice %237 {offsets = [0, 40], sizes = [1, 8], strides = [1, 1]} : vector<1x128xf32> to vector<1x8xf32>
    %251 = arith.addf %249, %250 : vector<1x8xf32>
    %252 = vector.extract_strided_slice %237 {offsets = [0, 48], sizes = [1, 8], strides = [1, 1]} : vector<1x128xf32> to vector<1x8xf32>
    %253 = arith.addf %251, %252 : vector<1x8xf32>
    %254 = vector.extract_strided_slice %237 {offsets = [0, 56], sizes = [1, 8], strides = [1, 1]} : vector<1x128xf32> to vector<1x8xf32>
    %255 = arith.addf %253, %254 : vector<1x8xf32>
    %256 = vector.extract_strided_slice %237 {offsets = [0, 64], sizes = [1, 8], strides = [1, 1]} : vector<1x128xf32> to vector<1x8xf32>
    %257 = arith.addf %255, %256 : vector<1x8xf32>
    %258 = vector.extract_strided_slice %237 {offsets = [0, 72], sizes = [1, 8], strides = [1, 1]} : vector<1x128xf32> to vector<1x8xf32>
    %259 = arith.addf %257, %258 : vector<1x8xf32>
    %260 = vector.extract_strided_slice %237 {offsets = [0, 80], sizes = [1, 8], strides = [1, 1]} : vector<1x128xf32> to vector<1x8xf32>
    %261 = arith.addf %259, %260 : vector<1x8xf32>
    %262 = vector.extract_strided_slice %237 {offsets = [0, 88], sizes = [1, 8], strides = [1, 1]} : vector<1x128xf32> to vector<1x8xf32>
    %263 = arith.addf %261, %262 : vector<1x8xf32>
    %264 = vector.extract_strided_slice %237 {offsets = [0, 96], sizes = [1, 8], strides = [1, 1]} : vector<1x128xf32> to vector<1x8xf32>
    %265 = arith.addf %263, %264 : vector<1x8xf32>
    %266 = vector.extract_strided_slice %237 {offsets = [0, 104], sizes = [1, 8], strides = [1, 1]} : vector<1x128xf32> to vector<1x8xf32>
    %267 = arith.addf %265, %266 : vector<1x8xf32>
    %268 = vector.extract_strided_slice %237 {offsets = [0, 112], sizes = [1, 8], strides = [1, 1]} : vector<1x128xf32> to vector<1x8xf32>
    %269 = arith.addf %267, %268 : vector<1x8xf32>
    %270 = vector.extract_strided_slice %237 {offsets = [0, 120], sizes = [1, 8], strides = [1, 1]} : vector<1x128xf32> to vector<1x8xf32>
    %271 = arith.addf %269, %270 : vector<1x8xf32>
    %cst_174 = arith.constant 0.001953125 : f32
    %272 = vector.broadcast %cst_174 : f32 to vector<1x8xf32>
    %273 = arith.mulf %271, %272 : vector<1x8xf32>
    %274 = vector.extract_strided_slice %240 {offsets = [0, 0], sizes = [1, 8], strides = [1, 1]} : vector<1x128xf32> to vector<1x8xf32>
    %275 = vector.extract_strided_slice %240 {offsets = [0, 8], sizes = [1, 8], strides = [1, 1]} : vector<1x128xf32> to vector<1x8xf32>
    %276 = arith.addf %274, %275 : vector<1x8xf32>
    %277 = vector.extract_strided_slice %240 {offsets = [0, 16], sizes = [1, 8], strides = [1, 1]} : vector<1x128xf32> to vector<1x8xf32>
    %278 = arith.addf %276, %277 : vector<1x8xf32>
    %279 = vector.extract_strided_slice %240 {offsets = [0, 24], sizes = [1, 8], strides = [1, 1]} : vector<1x128xf32> to vector<1x8xf32>
    %280 = arith.addf %278, %279 : vector<1x8xf32>
    %281 = vector.extract_strided_slice %240 {offsets = [0, 32], sizes = [1, 8], strides = [1, 1]} : vector<1x128xf32> to vector<1x8xf32>
    %282 = arith.addf %280, %281 : vector<1x8xf32>
    %283 = vector.extract_strided_slice %240 {offsets = [0, 40], sizes = [1, 8], strides = [1, 1]} : vector<1x128xf32> to vector<1x8xf32>
    %284 = arith.addf %282, %283 : vector<1x8xf32>
    %285 = vector.extract_strided_slice %240 {offsets = [0, 48], sizes = [1, 8], strides = [1, 1]} : vector<1x128xf32> to vector<1x8xf32>
    %286 = arith.addf %284, %285 : vector<1x8xf32>
    %287 = vector.extract_strided_slice %240 {offsets = [0, 56], sizes = [1, 8], strides = [1, 1]} : vector<1x128xf32> to vector<1x8xf32>
    %288 = arith.addf %286, %287 : vector<1x8xf32>
    %289 = vector.extract_strided_slice %240 {offsets = [0, 64], sizes = [1, 8], strides = [1, 1]} : vector<1x128xf32> to vector<1x8xf32>
    %290 = arith.addf %288, %289 : vector<1x8xf32>
    %291 = vector.extract_strided_slice %240 {offsets = [0, 72], sizes = [1, 8], strides = [1, 1]} : vector<1x128xf32> to vector<1x8xf32>
    %292 = arith.addf %290, %291 : vector<1x8xf32>
    %293 = vector.extract_strided_slice %240 {offsets = [0, 80], sizes = [1, 8], strides = [1, 1]} : vector<1x128xf32> to vector<1x8xf32>
    %294 = arith.addf %292, %293 : vector<1x8xf32>
    %295 = vector.extract_strided_slice %240 {offsets = [0, 88], sizes = [1, 8], strides = [1, 1]} : vector<1x128xf32> to vector<1x8xf32>
    %296 = arith.addf %294, %295 : vector<1x8xf32>
    %297 = vector.extract_strided_slice %240 {offsets = [0, 96], sizes = [1, 8], strides = [1, 1]} : vector<1x128xf32> to vector<1x8xf32>
    %298 = arith.addf %296, %297 : vector<1x8xf32>
    %299 = vector.extract_strided_slice %240 {offsets = [0, 104], sizes = [1, 8], strides = [1, 1]} : vector<1x128xf32> to vector<1x8xf32>
    %300 = arith.addf %298, %299 : vector<1x8xf32>
    %301 = vector.extract_strided_slice %240 {offsets = [0, 112], sizes = [1, 8], strides = [1, 1]} : vector<1x128xf32> to vector<1x8xf32>
    %302 = arith.addf %300, %301 : vector<1x8xf32>
    %303 = vector.extract_strided_slice %240 {offsets = [0, 120], sizes = [1, 8], strides = [1, 1]} : vector<1x128xf32> to vector<1x8xf32>
    %304 = arith.addf %302, %303 : vector<1x8xf32>
    %cst_175 = arith.constant 0.001953125 : f32
    %305 = vector.broadcast %cst_175 : f32 to vector<1x8xf32>
    %306 = arith.mulf %304, %305 : vector<1x8xf32>
    %307 = arith.mulf %273, %273 : vector<1x8xf32>
    %308 = arith.subf %306, %307 : vector<1x8xf32>
    %cst_176 = arith.constant 0.000000e+00 : f32
    %309 = vector.broadcast %cst_176 : f32 to vector<1x8xf32>
    %310 = arith.maximumf %308, %309 : vector<1x8xf32>
    %c0_177 = arith.constant 0 : index
    %c0_178 = arith.constant 0 : index
    %311 = vector.load %arg8[%c0_177, %c0_178] : memref<1x8xf32, #tpu.memory_space<vmem>>, vector<1x8xf32>
    %cst_179 = arith.constant 9.99999974E-6 : f32
    %312 = vector.broadcast %cst_179 : f32 to vector<1x8xf32>
    %313 = arith.addf %310, %312 : vector<1x8xf32>
    %314 = math.rsqrt %313 : vector<1x8xf32>
    %315 = arith.mulf %311, %314 : vector<1x8xf32>
    %c0_180 = arith.constant 0 : index
    %c0_181 = arith.constant 0 : index
    %316 = vector.load %arg9[%c0_180, %c0_181] : memref<1x8xf32, #tpu.memory_space<vmem>>, vector<1x8xf32>
    %317 = arith.mulf %273, %315 : vector<1x8xf32>
    %318 = arith.subf %316, %317 : vector<1x8xf32>
    %319 = tpu.concatenate %315, %315, %315, %315, %315, %315, %315, %315, %315, %315, %315, %315, %315, %315, %315, %315 in 1 : vector<1x8xf32>, vector<1x8xf32>, vector<1x8xf32>, vector<1x8xf32>, vector<1x8xf32>, vector<1x8xf32>, vector<1x8xf32>, vector<1x8xf32>, vector<1x8xf32>, vector<1x8xf32>, vector<1x8xf32>, vector<1x8xf32>, vector<1x8xf32>, vector<1x8xf32>, vector<1x8xf32>, vector<1x8xf32> -> vector<1x128xf32>
    %320 = vector.broadcast %319 : vector<1x128xf32> to vector<32x128xf32>
    %321 = arith.mulf %235, %320 : vector<32x128xf32>
    %322 = tpu.concatenate %318, %318, %318, %318, %318, %318, %318, %318, %318, %318, %318, %318, %318, %318, %318, %318 in 1 : vector<1x8xf32>, vector<1x8xf32>, vector<1x8xf32>, vector<1x8xf32>, vector<1x8xf32>, vector<1x8xf32>, vector<1x8xf32>, vector<1x8xf32>, vector<1x8xf32>, vector<1x8xf32>, vector<1x8xf32>, vector<1x8xf32>, vector<1x8xf32>, vector<1x8xf32>, vector<1x8xf32>, vector<1x8xf32> -> vector<1x128xf32>
    %323 = vector.broadcast %322 : vector<1x128xf32> to vector<32x128xf32>
    %324 = arith.addf %321, %323 : vector<32x128xf32>
    %c0_182 = arith.constant 0 : index
    %c0_183 = arith.constant 0 : index
    %325 = vector.load %arg10[%c0_182, %c0_183] : memref<32x128xf32, #tpu.memory_space<vmem>>, vector<32x128xf32>
    tpu.vector_store %arg10[%c0_182, %c0_183], %324 {strides = array<i32>} : memref<32x128xf32, #tpu.memory_space<vmem>>, vector<32x128xf32>,
    return
  }
  func.func @transform_0(%arg0: i32) -> (i32, i32) {
    %c0_i32 = arith.constant 0 : i32
    %c0_i32_0 = arith.constant 0 : i32
    %c0_i32_1 = arith.constant 0 : i32
    return %c0_i32, %c0_i32_0 : i32, i32
  }
  func.func @transform_1(%arg0: i32) -> (i32, i32, i32) {
    %c0_i32 = arith.constant 0 : i32
    %c0_i32_0 = arith.constant 0 : i32
    %c0_i32_1 = arith.constant 0 : i32
    %c0_i32_2 = arith.constant 0 : i32
    return %c0_i32, %c0_i32_0, %c0_i32_1 : i32, i32, i32
  }
  func.func @transform_2(%arg0: i32) -> (i32, i32) {
    %c0_i32 = arith.constant 0 : i32
    %c0_i32_0 = arith.constant 0 : i32
    %c0_i32_1 = arith.constant 0 : i32
    return %c0_i32, %c0_i32_0 : i32, i32
  }
  func.func @transform_3(%arg0: i32) -> (i32, i32) {
    %c0_i32 = arith.constant 0 : i32
    %c0_i32_0 = arith.constant 0 : i32
    %c0_i32_1 = arith.constant 0 : i32
    return %c0_i32, %c0_i32_0 : i32, i32
  }
  func.func @transform_4(%arg0: i32) -> (i32, i32) {
    %c0_i32 = arith.constant 0 : i32
    %c0_i32_0 = arith.constant 0 : i32
    %c0_i32_1 = arith.constant 0 : i32
    return %c0_i32, %c0_i32_0 : i32, i32
  }
  func.func @transform_5(%arg0: i32) -> (i32, i32, i32) {
    %c0_i32 = arith.constant 0 : i32
    %c0_i32_0 = arith.constant 0 : i32
    %c0_i32_1 = arith.constant 0 : i32
    %c0_i32_2 = arith.constant 0 : i32
    return %c0_i32, %c0_i32_0, %c0_i32_1 : i32, i32, i32
  }
  func.func @transform_6(%arg0: i32) -> (i32, i32) {
    %c0_i32 = arith.constant 0 : i32
    %c0_i32_0 = arith.constant 0 : i32
    %c0_i32_1 = arith.constant 0 : i32
    return %c0_i32, %c0_i32_0 : i32, i32
  }
  func.func @transform_7(%arg0: i32) -> (i32, i32) {
    %c0_i32 = arith.constant 0 : i32
    %c0_i32_0 = arith.constant 0 : i32
    %c0_i32_1 = arith.constant 0 : i32
    return %c0_i32, %c0_i32_0 : i32, i32
  }
  func.func @transform_8(%arg0: i32) -> (i32, i32) {
    %c0_i32 = arith.constant 0 : i32
    %c0_i32_0 = arith.constant 0 : i32
    %c0_i32_1 = arith.constant 0 : i32
    return %c0_i32, %c0_i32_0 : i32, i32
  }
  func.func @transform_9(%arg0: i32) -> (i32, i32) {
    %c0_i32 = arith.constant 0 : i32
    %c0_i32_0 = arith.constant 0 : i32
    %c0_i32_1 = arith.constant 0 : i32
    return %c0_i32, %c0_i32_0 : i32, i32
  }
}

</mosaic_0001>

<llo_original>
// kernel: tpu_custom_call.1
$region0: #{tpu_custom_call.1}
  #allocation0 [shape = 'u32[]', space=smem, size = 0x4, offset = 0x4, fixed_abs, tag = 'smem constant byte address 0x4 - core index']
  #allocation1 [shape = 'u32[144,128]{1,0:T(1,128)}', space=vmem, size = 0x12000, scoped, tag = 'internal scratch']
  #allocation2 [shape = 'f32[2,18,72]{2,1,0:T(8,128)}', space=vmem, size = 0x6000, scoped, tag = 'scratch operand']
  #allocation3 [shape = 'f32[2,18,144]{2,1,0:T(8,128)}', space=vmem, size = 0xc000, scoped, tag = 'scratch operand']
  %s0 = inlined_call_operand.hbm [shape: f32[32,64], index: 0, kind: input, shape index: {}]
  %s1 = inlined_call_operand.hbm [shape: f32[9,64,128], index: 1, kind: input, shape index: {}]
  %s2 = inlined_call_operand.vmem [shape: f32[1,128], index: 2, kind: input, shape index: {}]
  %s3 = inlined_call_operand.vmem [shape: f32[1,8], index: 3, kind: input, shape index: {}]
  %s4 = inlined_call_operand.vmem [shape: f32[1,8], index: 4, kind: input, shape index: {}]
  %s5 = inlined_call_operand.hbm [shape: f32[9,128,128], index: 5, kind: input, shape index: {}]
  %s6 = inlined_call_operand.vmem [shape: f32[1,128], index: 6, kind: input, shape index: {}]
  %s7 = inlined_call_operand.vmem [shape: f32[1,8], index: 7, kind: input, shape index: {}]
  %s8 = inlined_call_operand.vmem [shape: f32[1,8], index: 8, kind: input, shape index: {}]
  %s9 = inlined_call_operand.hbm [shape: f32[32,128], index: 9, kind: output, shape index: {}]
  %s10 = sld [smem:[#allocation0]]
  $region58: #{tpu_custom_call.1} parent=0
    _
  %s12 = ssub.s32 1, %s10
  %s13 = scalar_select 0, %s12, %s10
  $region1: #{tpu_custom_call.1} parent=0
    #allocation4 [shape = 'u8[16384]{0}', space=vmem, size = 0x4000, scoped, tag = 'input window, operand 0, single buffered']
    #allocation5 [shape = 's32[1]{0}', space=sflag, size = 0x4, scoped, tag = 'scoped memory for tpu_custom_call.1']
    #allocation6 [shape = 's32[1]{0}', space=sflag, size = 0x4, scoped, tag = 'scoped memory for tpu_custom_call.1']
    #allocation7 [shape = 'u8[294912]{0}', space=vmem, size = 0x48000, scoped, tag = 'input window, operand 1, single buffered']
    #allocation8 [shape = 's32[1]{0}', space=sflag, size = 0x4, scoped, tag = 'scoped memory for tpu_custom_call.1']
    #allocation9 [shape = 'u8[589824]{0}', space=vmem, size = 0x90000, scoped, tag = 'input window, operand 5, single buffered']
    #allocation10 [shape = 'u8[16384]{0}', space=vmem, size = 0x4000, scoped, tag = 'output window, operand 0, single buffered']
    %14 = vsyncpa [#allocation5], 0
    %15 = vsyncpa [#allocation8], 0
    %16 = vsyncpa [#allocation6], 0
    // Predicated region
    $region2: #{tpu_custom_call.1} parent=1 // pred_check
      _
    $region3: #{tpu_custom_call.1} parent=1 // pred_check_branch
      %18 = sbr.rel (0) target = $region5
    $region4: #{tpu_custom_call.1} parent=1 // pred_region
      %s20 = ssub.s32 512, 512
      %21 = vsyncadd [#allocation5], %s20
      %s22 = sshll.u32 [#allocation4], 4
      %s23 = int_to_ptr.vmem [resolvable:$true] %s22
      %28 = dma.hbm_to_vmem [thread:$0]  %s0, 512, %s23, [#allocation5], 128, 128, 8
    $region5: #{tpu_custom_call.1} parent=1 // pred_fallthru
      _
    // Predicated region
    $region6: #{tpu_custom_call.1} parent=1 // pred_check
      _
    $region7: #{tpu_custom_call.1} parent=1 // pred_check_branch
      %30 = sbr.rel (0) target = $region9
    $region8: #{tpu_custom_call.1} parent=1 // pred_region
      %s32 = ssub.s32 9216, 9216
      %33 = vsyncadd [#allocation8], %s32
      %s34 = sshll.u32 [#allocation7], 4
      %s35 = int_to_ptr.vmem [resolvable:$true] %s34
      %40 = dma.hbm_to_vmem [thread:$0]  %s1, 9216, %s35, [#allocation8], 128, 128, 8
    $region9: #{tpu_custom_call.1} parent=1 // pred_fallthru
      _
    // Predicated region
    $region10: #{tpu_custom_call.1} parent=1 // pred_check
      _
    $region11: #{tpu_custom_call.1} parent=1 // pred_check_branch
      %42 = sbr.rel (0) target = $region13
    $region12: #{tpu_custom_call.1} parent=1 // pred_region
      _
    $region13: #{tpu_custom_call.1} parent=1 // pred_fallthru
      _
    // Predicated region
    $region14: #{tpu_custom_call.1} parent=1 // pred_check
      _
    $region15: #{tpu_custom_call.1} parent=1 // pred_check_branch
      %44 = sbr.rel (0) target = $region17
    $region16: #{tpu_custom_call.1} parent=1 // pred_region
      _
    $region17: #{tpu_custom_call.1} parent=1 // pred_fallthru
      _
    // Predicated region
    $region18: #{tpu_custom_call.1} parent=1 // pred_check
      _
    $region19: #{tpu_custom_call.1} parent=1 // pred_check_branch
      %46 = sbr.rel (0) target = $region21
    $region20: #{tpu_custom_call.1} parent=1 // pred_region
      _
    $region21: #{tpu_custom_call.1} parent=1 // pred_fallthru
      _
    // Predicated region
    $region22: #{tpu_custom_call.1} parent=1 // pred_check
      _
    $region23: #{tpu_custom_call.1} parent=1 // pred_check_branch
      %48 = sbr.rel (0) target = $region25
    $region24: #{tpu_custom_call.1} parent=1 // pred_region
      %s50 = ssub.s32 18432, 18432
      %51 = vsyncadd [#allocation8], %s50
      %s52 = sshll.u32 [#allocation9], 4
      %s53 = int_to_ptr.vmem [resolvable:$true] %s52
      %58 = dma.hbm_to_vmem [thread:$0]  %s5, 18432, %s53, [#allocation8], 128, 128, 8
    $region25: #{tpu_custom_call.1} parent=1 // pred_fallthru
      _
    // Predicated region
    $region26: #{tpu_custom_call.1} parent=1 // pred_check
      _
    $region27: #{tpu_custom_call.1} parent=1 // pred_check_branch
      %60 = sbr.rel (0) target = $region29
    $region28: #{tpu_custom_call.1} parent=1 // pred_region
      _
    $region29: #{tpu_custom_call.1} parent=1 // pred_fallthru
      _
    // Predicated region
    $region30: #{tpu_custom_call.1} parent=1 // pred_check
      _
    $region31: #{tpu_custom_call.1} parent=1 // pred_check_branch
      %62 = sbr.rel (0) target = $region33
    $region32: #{tpu_custom_call.1} parent=1 // pred_region
      _
    $region33: #{tpu_custom_call.1} parent=1 // pred_fallthru
      _
    // Predicated region
    $region34: #{tpu_custom_call.1} parent=1 // pred_check
      _
    $region35: #{tpu_custom_call.1} parent=1 // pred_check_branch
      %64 = sbr.rel (0) target = $region37
    $region36: #{tpu_custom_call.1} parent=1 // pred_region
      _
    $region37: #{tpu_custom_call.1} parent=1 // pred_fallthru
      _
    // Predicated region
    $region38: #{tpu_custom_call.1} parent=1 // pred_check
      _
    $region39: #{tpu_custom_call.1} parent=1 // pred_check_branch
      %66 = sbr.rel (0) target = $region41
    $region40: #{tpu_custom_call.1} parent=1 // pred_region
      %67 = dma.done [#allocation5], 512
    $region41: #{tpu_custom_call.1} parent=1 // pred_fallthru
      _
    // Predicated region
    $region42: #{tpu_custom_call.1} parent=1 // pred_check
      _
    $region43: #{tpu_custom_call.1} parent=1 // pred_check_branch
      %69 = sbr.rel (0) target = $region45
    $region44: #{tpu_custom_call.1} parent=1 // pred_region
      %70 = dma.done [#allocation8], 9216
    $region45: #{tpu_custom_call.1} parent=1 // pred_fallthru
      _
    // Predicated region
    $region46: #{tpu_custom_call.1} parent=1 // pred_check
      _
    $region47: #{tpu_custom_call.1} parent=1 // pred_check_branch
      %72 = sbr.rel (0) target = $region49
    $region48: #{tpu_custom_call.1} parent=1 // pred_region
      %73 = dma.done [#allocation8], 18432
    $region49: #{tpu_custom_call.1} parent=1 // pred_fallthru
      _
    %v74 = vld [vmem:[#allocation4] sm:$0xff]
    %v75 = vld [vmem:[#allocation4 + $0x8] sm:$0xff]
    %v76 = vld [vmem:[#allocation4 + $0x10] sm:$0xff]
    %v77 = vld [vmem:[#allocation4 + $0x18] sm:$0xff]
    %vm78 = vcmask 581632
    %79 = vst.msk [vmem:[#allocation2] sm:$0x1] %vm78, 0.0
    %80 = vst.msk [vmem:[#allocation2 + $0x18] sm:$0x1] %vm78, 0.0
    %81 = vst.msk [vmem:[#allocation2 + $0x11] sm:$0x1] %vm78, 0.0
    %82 = vst.msk [vmem:[#allocation2 + $0x29] sm:$0x1] %vm78, 0.0
    %vm83 = vcmask 31744
    %84 = vst.msk [vmem:[#allocation2] sm:$0xff] %vm83, 0.0
    %85 = vst.msk [vmem:[#allocation2 + $0x8] sm:$0xff] %vm83, 0.0
    %vm86 = vcmask 25600
    %87 = vst.msk [vmem:[#allocation2 + $0x10] sm:$0x3] %vm86, 0.0
    %88 = vst.msk [vmem:[#allocation2 + $0x18] sm:$0xff] %vm83, 0.0
    %89 = vst.msk [vmem:[#allocation2 + $0x20] sm:$0xff] %vm83, 0.0
    %90 = vst.msk [vmem:[#allocation2 + $0x28] sm:$0x3] %vm86, 0.0
    %vm91 = vcmask 589344
    %92 = vst.msk [vmem:[#allocation2] sm:$0xff] %vm91, 0.0
    %93 = vst.msk [vmem:[#allocation2 + $0x8] sm:$0xff] %vm91, 0.0
    %vm94 = vcmask 583200
    %95 = vst.msk [vmem:[#allocation2 + $0x10] sm:$0x3] %vm94, 0.0
    %96 = vst.msk [vmem:[#allocation2 + $0x18] sm:$0xff] %vm91, 0.0
    %97 = vst.msk [vmem:[#allocation2 + $0x20] sm:$0xff] %vm91, 0.0
    %98 = vst.msk [vmem:[#allocation2 + $0x28] sm:$0x3] %vm94, 0.0
    %103 = vrot.lane.b32.xlu0 %v74, 4
    %v104 = vpop.permute.xlu0 %103
    %105 = vrot.lane.b32.xlu0 %v75, 4
    %v106 = vpop.permute.xlu0 %105
    %107 = vrot.lane.b32.xlu0 %v76, 4
    %v108 = vpop.permute.xlu0 %107
    %109 = vrot.lane.b32.xlu0 %v77, 4
    %v110 = vpop.permute.xlu0 %109
    %vm115 = vcmask 556064
    %116 = vst.msk [vmem:[#allocation2 + $0x1] sm:$0xff] %vm115, %v104
    %117 = vst.msk [vmem:[#allocation2 + $0x9] sm:$0xff] %vm115, %v106
    %118 = vst.msk [vmem:[#allocation2 + $0x19] sm:$0xff] %vm115, %v108
    %119 = vst.msk [vmem:[#allocation2 + $0x21] sm:$0xff] %vm115, %v110
    %v120 = vld [vmem:[#allocation2] sm:$0xff]
    %v121 = vld [vmem:[#allocation2 + $0x8] sm:$0xff]
    %v122 = vld [vmem:[#allocation2 + $0x18] sm:$0xff]
    %v123 = vld [vmem:[#allocation2 + $0x20] sm:$0xff]
    %v124 = vld [vmem:[#allocation7] sm:$0xff]
    %v125 = vld [vmem:[#allocation7 + $0x8] sm:$0xff]
    %v126 = vld [vmem:[#allocation7 + $0x10] sm:$0xff]
    %v127 = vld [vmem:[#allocation7 + $0x18] sm:$0xff]
    %v128 = vld [vmem:[#allocation7 + $0x20] sm:$0xff]
    %v129 = vld [vmem:[#allocation7 + $0x28] sm:$0xff]
    %v130 = vld [vmem:[#allocation7 + $0x30] sm:$0xff]
    %v131 = vld [vmem:[#allocation7 + $0x38] sm:$0xff]
    %s132 = scalar_lea.vmem [#allocation7], 64
    %v133 = vld [vmem:[%s132] sm:$0xff]
    %v134 = vld [vmem:[%s132 + $0x8] sm:$0xff]
    %v135 = vld [vmem:[%s132 + $0x10] sm:$0xff]
    %v136 = vld [vmem:[%s132 + $0x18] sm:$0xff]
    %v137 = vld [vmem:[%s132 + $0x20] sm:$0xff]
    %v138 = vld [vmem:[%s132 + $0x28] sm:$0xff]
    %v139 = vld [vmem:[%s132 + $0x30] sm:$0xff]
    %v140 = vld [vmem:[%s132 + $0x38] sm:$0xff]
    %145 = vrot.lane.b32.xlu0 %v120, 124
    %v146 = vpop.permute.xlu0 %145
    %147 = vrot.lane.b32.xlu0 %v121, 124
    %v148 = vpop.permute.xlu0 %147
    %149 = vrot.lane.b32.xlu0 %v122, 124
    %v150 = vpop.permute.xlu0 %149
    %151 = vrot.lane.b32.xlu0 %v123, 124
    %v152 = vpop.permute.xlu0 %151
    %vm153 = vcmask 523264
    %v154 = vsel %vm153, %v146, 0
    %v156 = vsel %vm153, %v148, 0
    %v158 = vsel %vm153, %v150, 0
    %v160 = vsel %vm153, %v152, 0
    %162 = vmatprep.subr.mxu0 0.0
    %163 = vmatpush1.msra.mxu0 %v133
    %164 = vmatprep.subr.mxu0 0.0
    %165 = vmatpush1.msra.mxu0 %v134
    %166 = vmatprep.subr.mxu0 0.0
    %167 = vmatpush1.msra.mxu0 %v135
    %168 = vmatprep.subr.mxu0 0.0
    %169 = vmatpush1.msra.mxu0 %v136
    %170 = vmatprep.subr.mxu0 0.0
    %171 = vmatpush1.msra.mxu0 %v137
    %172 = vmatprep.subr.mxu0 0.0
    %173 = vmatpush1.msra.mxu0 %v138
    %174 = vmatprep.subr.mxu0 0.0
    %175 = vmatpush1.msra.mxu0 %v139
    %176 = vmatprep.subr.mxu0 0.0
    %177 = vmatpush1.msra.mxu0 %v140
    %178 = vmatprep.subr.mxu0 0.0
    %179 = vmatpush1.msra.mxu0 0.0
    %180 = vmatprep.subr.mxu0 0.0
    %181 = vmatpush1.msra.mxu0 0.0
    %182 = vmatprep.subr.mxu0 0.0
    %183 = vmatpush1.msra.mxu0 0.0
    %184 = vmatprep.subr.mxu0 0.0
    %185 = vmatpush1.msra.mxu0 0.0
    %186 = vmatprep.subr.mxu0 0.0
    %187 = vmatpush1.msra.mxu0 0.0
    %188 = vmatprep.subr.mxu0 0.0
    %189 = vmatpush1.msra.mxu0 0.0
    %190 = vmatprep.subr.mxu0 0.0
    %191 = vmatpush1.msra.mxu0 0.0
    %192 = vmatprep.subr.mxu0 0.0
    %193 = vmatpush1.msra.mxu0 0.0
    %194 = vmatprep.subr.mxu0 0.0
    %195 = vmatpush1.msra.mxu0 0.0
    %196 = vmatprep.subr.mxu0 0.0
    %197 = vmatpush1.msra.mxu0 0.0
    %198 = vmatprep.subr.mxu0 0.0
    %199 = vmatpush1.msra.mxu0 0.0
    %200 = vmatprep.subr.mxu0 0.0
    %201 = vmatpush1.msra.mxu0 0.0
    %202 = vmatprep.subr.mxu0 0.0
    %203 = vmatpush1.msra.mxu0 0.0
    %204 = vmatprep.subr.mxu0 0.0
    %205 = vmatpush1.msra.mxu0 0.0
    %206 = vmatprep.subr.mxu0 0.0
    %207 = vmatpush1.msra.mxu0 0.0
    %208 = vmatprep.subr.mxu0 0.0
    %209 = vmatpush1.msra.mxu0 0.0
    %210 = vmatprep.subr.mxu0 0.0
    %211 = vmatpush1.msra.mxu0 0.0
    %212 = vmatprep.subr.mxu0 0.0
    %213 = vmatpush1.msra.mxu0 0.0
    %214 = vmatprep.subr.mxu0 0.0
    %215 = vmatpush1.msra.mxu0 0.0
    %216 = vmatprep.subr.mxu0 0.0
    %217 = vmatpush1.msra.mxu0 0.0
    %218 = vmatprep.subr.mxu0 0.0
    %219 = vmatpush1.msra.mxu0 0.0
    %220 = vmatprep.subr.mxu0 0.0
    %221 = vmatpush1.msra.mxu0 0.0
    %222 = vmatprep.subr.mxu0 0.0
    %223 = vmatpush1.msra.mxu0 0.0
    %224 = vmatprep.subr.mxu0 0.0
    %225 = vmatpush1.msra.mxu0 0.0
    %226 = vmatprep.mubr.f32.mxu0 0.0
    %227 = vmatmul.mubr.f32.gmra.mrb[0].mxu0 %v154
    %v228 = vpop.f32.mrb[0].mxu0
    %v229 = vadd.f32 0.0, %v228
    %v230 = vpop.f32.mrb[0].mxu0
    %231 = vmatprep.mubr.f32.mxu0 0.0
    %232 = vmatmul.mubr.f32.gmra.mrb[0].mxu0 %v156
    %v233 = vpop.f32.mrb[0].mxu0
    %v234 = vadd.f32 0.0, %v233
    %v235 = vpop.f32.mrb[0].mxu0
    %236 = vmatprep.mubr.f32.mxu0 0.0
    %237 = vmatmul.mubr.f32.gmra.mrb[0].mxu0 %v158
    %v238 = vpop.f32.mrb[0].mxu0
    %v239 = vadd.f32 0.0, %v238
    %v240 = vpop.f32.mrb[0].mxu0
    %241 = vmatprep.mubr.f32.mxu0 0.0
    %242 = vmatmul.mubr.f32.gmra.mrb[0].mxu0 %v160
    %v243 = vpop.f32.mrb[0].mxu0
    %v244 = vadd.f32 0.0, %v243
    %v245 = vpop.f32.mrb[0].mxu0
    %246 = vdwg.mxu0
    %v247 = vsel %vm153, %v120, 0
    %v249 = vsel %vm153, %v121, 0
    %v251 = vsel %vm153, %v122, 0
    %v253 = vsel %vm153, %v123, 0
    %255 = vmatprep.subr.mxu0 0.0
    %256 = vmatpush1.msra.mxu0 %v124
    %257 = vmatprep.subr.mxu0 0.0
    %258 = vmatpush1.msra.mxu0 %v125
    %259 = vmatprep.subr.mxu0 0.0
    %260 = vmatpush1.msra.mxu0 %v126
    %261 = vmatprep.subr.mxu0 0.0
    %262 = vmatpush1.msra.mxu0 %v127
    %263 = vmatprep.subr.mxu0 0.0
    %264 = vmatpush1.msra.mxu0 %v128
    %265 = vmatprep.subr.mxu0 0.0
    %266 = vmatpush1.msra.mxu0 %v129
    %267 = vmatprep.subr.mxu0 0.0
    %268 = vmatpush1.msra.mxu0 %v130
    %269 = vmatprep.subr.mxu0 0.0
    %270 = vmatpush1.msra.mxu0 %v131
    %271 = vmatprep.subr.mxu0 0.0
    %272 = vmatpush1.msra.mxu0 0.0
    %273 = vmatprep.subr.mxu0 0.0
    %274 = vmatpush1.msra.mxu0 0.0
    %275 = vmatprep.subr.mxu0 0.0
    %276 = vmatpush1.msra.mxu0 0.0
    %277 = vmatprep.subr.mxu0 0.0
    %278 = vmatpush1.msra.mxu0 0.0
    %279 = vmatprep.subr.mxu0 0.0
    %280 = vmatpush1.msra.mxu0 0.0
    %281 = vmatprep.subr.mxu0 0.0
    %282 = vmatpush1.msra.mxu0 0.0
    %283 = vmatprep.subr.mxu0 0.0
    %284 = vmatpush1.msra.mxu0 0.0
    %285 = vmatprep.subr.mxu0 0.0
    %286 = vmatpush1.msra.mxu0 0.0
    %287 = vmatprep.subr.mxu0 0.0
    %288 = vmatpush1.msra.mxu0 0.0
    %289 = vmatprep.subr.mxu0 0.0
    %290 = vmatpush1.msra.mxu0 0.0
    %291 = vmatprep.subr.mxu0 0.0
    %292 = vmatpush1.msra.mxu0 0.0
    %293 = vmatprep.subr.mxu0 0.0
    %294 = vmatpush1.msra.mxu0 0.0
    %295 = vmatprep.subr.mxu0 0.0
    %296 = vmatpush1.msra.mxu0 0.0
    %297 = vmatprep.subr.mxu0 0.0
    %298 = vmatpush1.msra.mxu0 0.0
    %299 = vmatprep.subr.mxu0 0.0
    %300 = vmatpush1.msra.mxu0 0.0
    %301 = vmatprep.subr.mxu0 0.0
    %302 = vmatpush1.msra.mxu0 0.0
    %303 = vmatprep.subr.mxu0 0.0
    %304 = vmatpush1.msra.mxu0 0.0
    %305 = vmatprep.subr.mxu0 0.0
    %306 = vmatpush1.msra.mxu0 0.0
    %307 = vmatprep.subr.mxu0 0.0
    %308 = vmatpush1.msra.mxu0 0.0
    %309 = vmatprep.subr.mxu0 0.0
    %310 = vmatpush1.msra.mxu0 0.0
    %311 = vmatprep.subr.mxu0 0.0
    %312 = vmatpush1.msra.mxu0 0.0
    %313 = vmatprep.subr.mxu0 0.0
    %314 = vmatpush1.msra.mxu0 0.0
    %315 = vmatprep.subr.mxu0 0.0
    %316 = vmatpush1.msra.mxu0 0.0
    %317 = vmatprep.subr.mxu0 0.0
    %318 = vmatpush1.msra.mxu0 0.0
    %319 = vmatprep.mubr.f32.mxu0 0.0
    %320 = vmatmul.mubr.f32.gmra.mrb[0].mxu0 %v247
    %v321 = vpop.f32.mrb[0].mxu0
    %v322 = vadd.f32 %v229, %v321
    %v323 = vpop.f32.mrb[0].mxu0
    %324 = vmatprep.mubr.f32.mxu0 0.0
    %325 = vmatmul.mubr.f32.gmra.mrb[0].mxu0 %v249
    %v326 = vpop.f32.mrb[0].mxu0
    %v327 = vadd.f32 %v234, %v326
    %v328 = vpop.f32.mrb[0].mxu0
    %329 = vmatprep.mubr.f32.mxu0 0.0
    %330 = vmatmul.mubr.f32.gmra.mrb[0].mxu0 %v251
    %v331 = vpop.f32.mrb[0].mxu0
    %v332 = vadd.f32 %v239, %v331
    %v333 = vpop.f32.mrb[0].mxu0
    %334 = vmatprep.mubr.f32.mxu0 0.0
    %335 = vmatmul.mubr.f32.gmra.mrb[0].mxu0 %v253
    %v336 = vpop.f32.mrb[0].mxu0
    %v337 = vadd.f32 %v244, %v336
    %v338 = vpop.f32.mrb[0].mxu0
    %339 = vdwg.mxu0
    %s340 = scalar_lea.vmem [#allocation7], 128
    %v341 = vld [vmem:[%s340] sm:$0xff]
    %v342 = vld [vmem:[%s340 + $0x8] sm:$0xff]
    %v343 = vld [vmem:[%s340 + $0x10] sm:$0xff]
    %v344 = vld [vmem:[%s340 + $0x18] sm:$0xff]
    %v345 = vld [vmem:[%s340 + $0x20] sm:$0xff]
    %v346 = vld [vmem:[%s340 + $0x28] sm:$0xff]
    %v347 = vld [vmem:[%s340 + $0x30] sm:$0xff]
    %v348 = vld [vmem:[%s340 + $0x38] sm:$0xff]
    %349 = vrot.lane.b32.xlu0 %v120, 120
    %v350 = vpop.permute.xlu0 %349
    %351 = vrot.lane.b32.xlu0 %v121, 120
    %v352 = vpop.permute.xlu0 %351
    %353 = vrot.lane.b32.xlu0 %v122, 120
    %v354 = vpop.permute.xlu0 %353
    %355 = vrot.lane.b32.xlu0 %v123, 120
    %v356 = vpop.permute.xlu0 %355
    %v357 = vsel %vm153, %v350, 0
    %v359 = vsel %vm153, %v352, 0
    %v361 = vsel %vm153, %v354, 0
    %v363 = vsel %vm153, %v356, 0
    %365 = vmatprep.subr.mxu0 0.0
    %366 = vmatpush1.msra.mxu0 %v341
    %367 = vmatprep.subr.mxu0 0.0
    %368 = vmatpush1.msra.mxu0 %v342
    %369 = vmatprep.subr.mxu0 0.0
    %370 = vmatpush1.msra.mxu0 %v343
    %371 = vmatprep.subr.mxu0 0.0
    %372 = vmatpush1.msra.mxu0 %v344
    %373 = vmatprep.subr.mxu0 0.0
    %374 = vmatpush1.msra.mxu0 %v345
    %375 = vmatprep.subr.mxu0 0.0
    %376 = vmatpush1.msra.mxu0 %v346
    %377 = vmatprep.subr.mxu0 0.0
    %378 = vmatpush1.msra.mxu0 %v347
    %379 = vmatprep.subr.mxu0 0.0
    %380 = vmatpush1.msra.mxu0 %v348
    %381 = vmatprep.subr.mxu0 0.0
    %382 = vmatpush1.msra.mxu0 0.0
    %383 = vmatprep.subr.mxu0 0.0
    %384 = vmatpush1.msra.mxu0 0.0
    %385 = vmatprep.subr.mxu0 0.0
    %386 = vmatpush1.msra.mxu0 0.0
    %387 = vmatprep.subr.mxu0 0.0
    %388 = vmatpush1.msra.mxu0 0.0
    %389 = vmatprep.subr.mxu0 0.0
    %390 = vmatpush1.msra.mxu0 0.0
    %391 = vmatprep.subr.mxu0 0.0
    %392 = vmatpush1.msra.mxu0 0.0
    %393 = vmatprep.subr.mxu0 0.0
    %394 = vmatpush1.msra.mxu0 0.0
    %395 = vmatprep.subr.mxu0 0.0
    %396 = vmatpush1.msra.mxu0 0.0
    %397 = vmatprep.subr.mxu0 0.0
    %398 = vmatpush1.msra.mxu0 0.0
    %399 = vmatprep.subr.mxu0 0.0
    %400 = vmatpush1.msra.mxu0 0.0
    %401 = vmatprep.subr.mxu0 0.0
    %402 = vmatpush1.msra.mxu0 0.0
    %403 = vmatprep.subr.mxu0 0.0
    %404 = vmatpush1.msra.mxu0 0.0
    %405 = vmatprep.subr.mxu0 0.0
    %406 = vmatpush1.msra.mxu0 0.0
    %407 = vmatprep.subr.mxu0 0.0
    %408 = vmatpush1.msra.mxu0 0.0
    %409 = vmatprep.subr.mxu0 0.0
    %410 = vmatpush1.msra.mxu0 0.0
    %411 = vmatprep.subr.mxu0 0.0
    %412 = vmatpush1.msra.mxu0 0.0
    %413 = vmatprep.subr.mxu0 0.0
    %414 = vmatpush1.msra.mxu0 0.0
    %415 = vmatprep.subr.mxu0 0.0
    %416 = vmatpush1.msra.mxu0 0.0
    %417 = vmatprep.subr.mxu0 0.0
    %418 = vmatpush1.msra.mxu0 0.0
    %419 = vmatprep.subr.mxu0 0.0
    %420 = vmatpush1.msra.mxu0 0.0
    %421 = vmatprep.subr.mxu0 0.0
    %422 = vmatpush1.msra.mxu0 0.0
    %423 = vmatprep.subr.mxu0 0.0
    %424 = vmatpush1.msra.mxu0 0.0
    %425 = vmatprep.subr.mxu0 0.0
    %426 = vmatpush1.msra.mxu0 0.0
    %427 = vmatprep.subr.mxu0 0.0
    %428 = vmatpush1.msra.mxu0 0.0
    %429 = vmatprep.mubr.f32.mxu0 0.0
    %430 = vmatmul.mubr.f32.gmra.mrb[0].mxu0 %v357
    %v431 = vpop.f32.mrb[0].mxu0
    %v432 = vadd.f32 0.0, %v431
    %v433 = vpop.f32.mrb[0].mxu0
    %434 = vmatprep.mubr.f32.mxu0 0.0
    %435 = vmatmul.mubr.f32.gmra.mrb[0].mxu0 %v359
    %v436 = vpop.f32.mrb[0].mxu0
    %v437 = vadd.f32 0.0, %v436
    %v438 = vpop.f32.mrb[0].mxu0
    %439 = vmatprep.mubr.f32.mxu0 0.0
    %440 = vmatmul.mubr.f32.gmra.mrb[0].mxu0 %v361
    %v441 = vpop.f32.mrb[0].mxu0
    %v442 = vadd.f32 0.0, %v441
    %v443 = vpop.f32.mrb[0].mxu0
    %444 = vmatprep.mubr.f32.mxu0 0.0
    %445 = vmatmul.mubr.f32.gmra.mrb[0].mxu0 %v363
    %v446 = vpop.f32.mrb[0].mxu0
    %v447 = vadd.f32 0.0, %v446
    %v448 = vpop.f32.mrb[0].mxu0
    %449 = vdwg.mxu0
    %v450 = vadd.f32 %v322, %v432
    %v451 = vadd.f32 %v327, %v437
    %v452 = vadd.f32 %v332, %v442
    %v453 = vadd.f32 %v337, %v447
    %v454 = vld [vmem:[#allocation2 + $0x1] sm:$0xff]
    %v455 = vld [vmem:[#allocation2 + $0x9] sm:$0xff]
    %v456 = vld [vmem:[#allocation2 + $0x19] sm:$0xff]
    %v457 = vld [vmem:[#allocation2 + $0x21] sm:$0xff]
    %s458 = scalar_lea.vmem [#allocation7], 192
    %v459 = vld [vmem:[%s458] sm:$0xff]
    %v460 = vld [vmem:[%s458 + $0x8] sm:$0xff]
    %v461 = vld [vmem:[%s458 + $0x10] sm:$0xff]
    %v462 = vld [vmem:[%s458 + $0x18] sm:$0xff]
    %v463 = vld [vmem:[%s458 + $0x20] sm:$0xff]
    %v464 = vld [vmem:[%s458 + $0x28] sm:$0xff]
    %v465 = vld [vmem:[%s458 + $0x30] sm:$0xff]
    %v466 = vld [vmem:[%s458 + $0x38] sm:$0xff]
    %v468 = vsel %vm153, %v454, 0
    %v471 = vsel %vm153, %v455, 0
    %v474 = vsel %vm153, %v456, 0
    %v477 = vsel %vm153, %v457, 0
    %479 = vmatprep.subr.mxu0 0.0
    %480 = vmatpush1.msra.mxu0 %v459
    %481 = vmatprep.subr.mxu0 0.0
    %482 = vmatpush1.msra.mxu0 %v460
    %483 = vmatprep.subr.mxu0 0.0
    %484 = vmatpush1.msra.mxu0 %v461
    %485 = vmatprep.subr.mxu0 0.0
    %486 = vmatpush1.msra.mxu0 %v462
    %487 = vmatprep.subr.mxu0 0.0
    %488 = vmatpush1.msra.mxu0 %v463
    %489 = vmatprep.subr.mxu0 0.0
    %490 = vmatpush1.msra.mxu0 %v464
    %491 = vmatprep.subr.mxu0 0.0
    %492 = vmatpush1.msra.mxu0 %v465
    %493 = vmatprep.subr.mxu0 0.0
    %494 = vmatpush1.msra.mxu0 %v466
    %495 = vmatprep.subr.mxu0 0.0
    %496 = vmatpush1.msra.mxu0 0.0
    %497 = vmatprep.subr.mxu0 0.0
    %498 = vmatpush1.msra.mxu0 0.0
    %499 = vmatprep.subr.mxu0 0.0
    %500 = vmatpush1.msra.mxu0 0.0
    %501 = vmatprep.subr.mxu0 0.0
    %502 = vmatpush1.msra.mxu0 0.0
    %503 = vmatprep.subr.mxu0 0.0
    %504 = vmatpush1.msra.mxu0 0.0
    %505 = vmatprep.subr.mxu0 0.0
    %506 = vmatpush1.msra.mxu0 0.0
    %507 = vmatprep.subr.mxu0 0.0
    %508 = vmatpush1.msra.mxu0 0.0
    %509 = vmatprep.subr.mxu0 0.0
    %510 = vmatpush1.msra.mxu0 0.0
    %511 = vmatprep.subr.mxu0 0.0
    %512 = vmatpush1.msra.mxu0 0.0
    %513 = vmatprep.subr.mxu0 0.0
    %514 = vmatpush1.msra.mxu0 0.0
    %515 = vmatprep.subr.mxu0 0.0
    %516 = vmatpush1.msra.mxu0 0.0
    %517 = vmatprep.subr.mxu0 0.0
    %518 = vmatpush1.msra.mxu0 0.0
    %519 = vmatprep.subr.mxu0 0.0
    %520 = vmatpush1.msra.mxu0 0.0
    %521 = vmatprep.subr.mxu0 0.0
    %522 = vmatpush1.msra.mxu0 0.0
    %523 = vmatprep.subr.mxu0 0.0
    %524 = vmatpush1.msra.mxu0 0.0
    %525 = vmatprep.subr.mxu0 0.0
    %526 = vmatpush1.msra.mxu0 0.0
    %527 = vmatprep.subr.mxu0 0.0
    %528 = vmatpush1.msra.mxu0 0.0
    %529 = vmatprep.subr.mxu0 0.0
    %530 = vmatpush1.msra.mxu0 0.0
    %531 = vmatprep.subr.mxu0 0.0
    %532 = vmatpush1.msra.mxu0 0.0
    %533 = vmatprep.subr.mxu0 0.0
    %534 = vmatpush1.msra.mxu0 0.0
    %535 = vmatprep.subr.mxu0 0.0
    %536 = vmatpush1.msra.mxu0 0.0
    %537 = vmatprep.subr.mxu0 0.0
    %538 = vmatpush1.msra.mxu0 0.0
    %539 = vmatprep.subr.mxu0 0.0
    %540 = vmatpush1.msra.mxu0 0.0
    %541 = vmatprep.subr.mxu0 0.0
    %542 = vmatpush1.msra.mxu0 0.0
    %543 = vmatprep.mubr.f32.mxu0 0.0
    %544 = vmatmul.mubr.f32.gmra.mrb[0].mxu0 %v468
    %v545 = vpop.f32.mrb[0].mxu0
    %v546 = vadd.f32 0.0, %v545
    %v547 = vpop.f32.mrb[0].mxu0
    %548 = vmatprep.mubr.f32.mxu0 0.0
    %549 = vmatmul.mubr.f32.gmra.mrb[0].mxu0 %v471
    %v550 = vpop.f32.mrb[0].mxu0
    %v551 = vadd.f32 0.0, %v550
    %v552 = vpop.f32.mrb[0].mxu0
    %553 = vmatprep.mubr.f32.mxu0 0.0
    %554 = vmatmul.mubr.f32.gmra.mrb[0].mxu0 %v474
    %v555 = vpop.f32.mrb[0].mxu0
    %v556 = vadd.f32 0.0, %v555
    %v557 = vpop.f32.mrb[0].mxu0
    %558 = vmatprep.mubr.f32.mxu0 0.0
    %559 = vmatmul.mubr.f32.gmra.mrb[0].mxu0 %v477
    %v560 = vpop.f32.mrb[0].mxu0
    %v561 = vadd.f32 0.0, %v560
    %v562 = vpop.f32.mrb[0].mxu0
    %563 = vdwg.mxu0
    %v564 = vadd.f32 %v450, %v546
    %v565 = vadd.f32 %v451, %v551
    %v566 = vadd.f32 %v452, %v556
    %v567 = vadd.f32 %v453, %v561
    %s568 = scalar_lea.vmem [#allocation7], 256
    %v569 = vld [vmem:[%s568] sm:$0xff]
    %v570 = vld [vmem:[%s568 + $0x8] sm:$0xff]
    %v571 = vld [vmem:[%s568 + $0x10] sm:$0xff]
    %v572 = vld [vmem:[%s568 + $0x18] sm:$0xff]
    %v573 = vld [vmem:[%s568 + $0x20] sm:$0xff]
    %v574 = vld [vmem:[%s568 + $0x28] sm:$0xff]
    %v575 = vld [vmem:[%s568 + $0x30] sm:$0xff]
    %v576 = vld [vmem:[%s568 + $0x38] sm:$0xff]
    %577 = vrot.lane.b32.xlu0 %v454, 124
    %v578 = vpop.permute.xlu0 %577
    %579 = vrot.lane.b32.xlu0 %v455, 124
    %v580 = vpop.permute.xlu0 %579
    %581 = vrot.lane.b32.xlu0 %v456, 124
    %v582 = vpop.permute.xlu0 %581
    %583 = vrot.lane.b32.xlu0 %v457, 124
    %v584 = vpop.permute.xlu0 %583
    %v585 = vsel %vm153, %v578, 0
    %v587 = vsel %vm153, %v580, 0
    %v589 = vsel %vm153, %v582, 0
    %v591 = vsel %vm153, %v584, 0
    %593 = vmatprep.subr.mxu0 0.0
    %594 = vmatpush1.msra.mxu0 %v569
    %595 = vmatprep.subr.mxu0 0.0
    %596 = vmatpush1.msra.mxu0 %v570
    %597 = vmatprep.subr.mxu0 0.0
    %598 = vmatpush1.msra.mxu0 %v571
    %599 = vmatprep.subr.mxu0 0.0
    %600 = vmatpush1.msra.mxu0 %v572
    %601 = vmatprep.subr.mxu0 0.0
    %602 = vmatpush1.msra.mxu0 %v573
    %603 = vmatprep.subr.mxu0 0.0
    %604 = vmatpush1.msra.mxu0 %v574
    %605 = vmatprep.subr.mxu0 0.0
    %606 = vmatpush1.msra.mxu0 %v575
    %607 = vmatprep.subr.mxu0 0.0
    %608 = vmatpush1.msra.mxu0 %v576
    %609 = vmatprep.subr.mxu0 0.0
    %610 = vmatpush1.msra.mxu0 0.0
    %611 = vmatprep.subr.mxu0 0.0
    %612 = vmatpush1.msra.mxu0 0.0
    %613 = vmatprep.subr.mxu0 0.0
    %614 = vmatpush1.msra.mxu0 0.0
    %615 = vmatprep.subr.mxu0 0.0
    %616 = vmatpush1.msra.mxu0 0.0
    %617 = vmatprep.subr.mxu0 0.0
    %618 = vmatpush1.msra.mxu0 0.0
    %619 = vmatprep.subr.mxu0 0.0
    %620 = vmatpush1.msra.mxu0 0.0
    %621 = vmatprep.subr.mxu0 0.0
    %622 = vmatpush1.msra.mxu0 0.0
    %623 = vmatprep.subr.mxu0 0.0
    %624 = vmatpush1.msra.mxu0 0.0
    %625 = vmatprep.subr.mxu0 0.0
    %626 = vmatpush1.msra.mxu0 0.0
    %627 = vmatprep.subr.mxu0 0.0
    %628 = vmatpush1.msra.mxu0 0.0
    %629 = vmatprep.subr.mxu0 0.0
    %630 = vmatpush1.msra.mxu0 0.0
    %631 = vmatprep.subr.mxu0 0.0
    %632 = vmatpush1.msra.mxu0 0.0
    %633 = vmatprep.subr.mxu0 0.0
    %634 = vmatpush1.msra.mxu0 0.0
    %635 = vmatprep.subr.mxu0 0.0
    %636 = vmatpush1.msra.mxu0 0.0
    %637 = vmatprep.subr.mxu0 0.0
    %638 = vmatpush1.msra.mxu0 0.0
    %639 = vmatprep.subr.mxu0 0.0
    %640 = vmatpush1.msra.mxu0 0.0
    %641 = vmatprep.subr.mxu0 0.0
    %642 = vmatpush1.msra.mxu0 0.0
    %643 = vmatprep.subr.mxu0 0.0
    %644 = vmatpush1.msra.mxu0 0.0
    %645 = vmatprep.subr.mxu0 0.0
    %646 = vmatpush1.msra.mxu0 0.0
    %647 = vmatprep.subr.mxu0 0.0
    %648 = vmatpush1.msra.mxu0 0.0
    %649 = vmatprep.subr.mxu0 0.0
    %650 = vmatpush1.msra.mxu0 0.0
    %651 = vmatprep.subr.mxu0 0.0
    %652 = vmatpush1.msra.mxu0 0.0
    %653 = vmatprep.subr.mxu0 0.0
    %654 = vmatpush1.msra.mxu0 0.0
    %655 = vmatprep.subr.mxu0 0.0
    %656 = vmatpush1.msra.mxu0 0.0
    %657 = vmatprep.mubr.f32.mxu0 0.0
    %658 = vmatmul.mubr.f32.gmra.mrb[0].mxu0 %v585
    %v659 = vpop.f32.mrb[0].mxu0
    %v660 = vadd.f32 0.0, %v659
    %v661 = vpop.f32.mrb[0].mxu0
    %662 = vmatprep.mubr.f32.mxu0 0.0
    %663 = vmatmul.mubr.f32.gmra.mrb[0].mxu0 %v587
    %v664 = vpop.f32.mrb[0].mxu0
    %v665 = vadd.f32 0.0, %v664
    %v666 = vpop.f32.mrb[0].mxu0
    %667 = vmatprep.mubr.f32.mxu0 0.0
    %668 = vmatmul.mubr.f32.gmra.mrb[0].mxu0 %v589
    %v669 = vpop.f32.mrb[0].mxu0
    %v670 = vadd.f32 0.0, %v669
    %v671 = vpop.f32.mrb[0].mxu0
    %672 = vmatprep.mubr.f32.mxu0 0.0
    %673 = vmatmul.mubr.f32.gmra.mrb[0].mxu0 %v591
    %v674 = vpop.f32.mrb[0].mxu0
    %v675 = vadd.f32 0.0, %v674
    %v676 = vpop.f32.mrb[0].mxu0
    %677 = vdwg.mxu0
    %v678 = vadd.f32 %v564, %v660
    %v679 = vadd.f32 %v565, %v665
    %v680 = vadd.f32 %v566, %v670
    %v681 = vadd.f32 %v567, %v675
    %s682 = scalar_lea.vmem [#allocation7], 320
    %v683 = vld [vmem:[%s682] sm:$0xff]
    %v684 = vld [vmem:[%s682 + $0x8] sm:$0xff]
    %v685 = vld [vmem:[%s682 + $0x10] sm:$0xff]
    %v686 = vld [vmem:[%s682 + $0x18] sm:$0xff]
    %v687 = vld [vmem:[%s682 + $0x20] sm:$0xff]
    %v688 = vld [vmem:[%s682 + $0x28] sm:$0xff]
    %v689 = vld [vmem:[%s682 + $0x30] sm:$0xff]
    %v690 = vld [vmem:[%s682 + $0x38] sm:$0xff]
    %691 = vrot.lane.b32.xlu0 %v454, 120
    %v692 = vpop.permute.xlu0 %691
    %693 = vrot.lane.b32.xlu0 %v455, 120
    %v694 = vpop.permute.xlu0 %693
    %695 = vrot.lane.b32.xlu0 %v456, 120
    %v696 = vpop.permute.xlu0 %695
    %697 = vrot.lane.b32.xlu0 %v457, 120
    %v698 = vpop.permute.xlu0 %697
    %v699 = vsel %vm153, %v692, 0
    %v701 = vsel %vm153, %v694, 0
    %v703 = vsel %vm153, %v696, 0
    %v705 = vsel %vm153, %v698, 0
    %707 = vmatprep.subr.mxu0 0.0
    %708 = vmatpush1.msra.mxu0 %v683
    %709 = vmatprep.subr.mxu0 0.0
    %710 = vmatpush1.msra.mxu0 %v684
    %711 = vmatprep.subr.mxu0 0.0
    %712 = vmatpush1.msra.mxu0 %v685
    %713 = vmatprep.subr.mxu0 0.0
    %714 = vmatpush1.msra.mxu0 %v686
    %715 = vmatprep.subr.mxu0 0.0
    %716 = vmatpush1.msra.mxu0 %v687
    %717 = vmatprep.subr.mxu0 0.0
    %718 = vmatpush1.msra.mxu0 %v688
    %719 = vmatprep.subr.mxu0 0.0
    %720 = vmatpush1.msra.mxu0 %v689
    %721 = vmatprep.subr.mxu0 0.0
    %722 = vmatpush1.msra.mxu0 %v690
    %723 = vmatprep.subr.mxu0 0.0
    %724 = vmatpush1.msra.mxu0 0.0
    %725 = vmatprep.subr.mxu0 0.0
    %726 = vmatpush1.msra.mxu0 0.0
    %727 = vmatprep.subr.mxu0 0.0
    %728 = vmatpush1.msra.mxu0 0.0
    %729 = vmatprep.subr.mxu0 0.0
    %730 = vmatpush1.msra.mxu0 0.0
    %731 = vmatprep.subr.mxu0 0.0
    %732 = vmatpush1.msra.mxu0 0.0
    %733 = vmatprep.subr.mxu0 0.0
    %734 = vmatpush1.msra.mxu0 0.0
    %735 = vmatprep.subr.mxu0 0.0
    %736 = vmatpush1.msra.mxu0 0.0
    %737 = vmatprep.subr.mxu0 0.0
    %738 = vmatpush1.msra.mxu0 0.0
    %739 = vmatprep.subr.mxu0 0.0
    %740 = vmatpush1.msra.mxu0 0.0
    %741 = vmatprep.subr.mxu0 0.0
    %742 = vmatpush1.msra.mxu0 0.0
    %743 = vmatprep.subr.mxu0 0.0
    %744 = vmatpush1.msra.mxu0 0.0
    %745 = vmatprep.subr.mxu0 0.0
    %746 = vmatpush1.msra.mxu0 0.0
    %747 = vmatprep.subr.mxu0 0.0
    %748 = vmatpush1.msra.mxu0 0.0
    %749 = vmatprep.subr.mxu0 0.0
    %750 = vmatpush1.msra.mxu0 0.0
    %751 = vmatprep.subr.mxu0 0.0
    %752 = vmatpush1.msra.mxu0 0.0
    %753 = vmatprep.subr.mxu0 0.0
    %754 = vmatpush1.msra.mxu0 0.0
    %755 = vmatprep.subr.mxu0 0.0
    %756 = vmatpush1.msra.mxu0 0.0
    %757 = vmatprep.subr.mxu0 0.0
    %758 = vmatpush1.msra.mxu0 0.0
    %759 = vmatprep.subr.mxu0 0.0
    %760 = vmatpush1.msra.mxu0 0.0
    %761 = vmatprep.subr.mxu0 0.0
    %762 = vmatpush1.msra.mxu0 0.0
    %763 = vmatprep.subr.mxu0 0.0
    %764 = vmatpush1.msra.mxu0 0.0
    %765 = vmatprep.subr.mxu0 0.0
    %766 = vmatpush1.msra.mxu0 0.0
    %767 = vmatprep.subr.mxu0 0.0
    %768 = vmatpush1.msra.mxu0 0.0
    %769 = vmatprep.subr.mxu0 0.0
    %770 = vmatpush1.msra.mxu0 0.0
    %771 = vmatprep.mubr.f32.mxu0 0.0
    %772 = vmatmul.mubr.f32.gmra.mrb[0].mxu0 %v699
    %v773 = vpop.f32.mrb[0].mxu0
    %v774 = vadd.f32 0.0, %v773
    %v775 = vpop.f32.mrb[0].mxu0
    %776 = vmatprep.mubr.f32.mxu0 0.0
    %777 = vmatmul.mubr.f32.gmra.mrb[0].mxu0 %v701
    %v778 = vpop.f32.mrb[0].mxu0
    %v779 = vadd.f32 0.0, %v778
    %v780 = vpop.f32.mrb[0].mxu0
    %781 = vmatprep.mubr.f32.mxu0 0.0
    %782 = vmatmul.mubr.f32.gmra.mrb[0].mxu0 %v703
    %v783 = vpop.f32.mrb[0].mxu0
    %v784 = vadd.f32 0.0, %v783
    %v785 = vpop.f32.mrb[0].mxu0
    %786 = vmatprep.mubr.f32.mxu0 0.0
    %787 = vmatmul.mubr.f32.gmra.mrb[0].mxu0 %v705
    %v788 = vpop.f32.mrb[0].mxu0
    %v789 = vadd.f32 0.0, %v788
    %v790 = vpop.f32.mrb[0].mxu0
    %791 = vdwg.mxu0
    %v792 = vadd.f32 %v678, %v774
    %v793 = vadd.f32 %v679, %v779
    %v794 = vadd.f32 %v680, %v784
    %v795 = vadd.f32 %v681, %v789
    %v796 = vld [vmem:[#allocation2 + $0x2] sm:$0xff]
    %v797 = vld [vmem:[#allocation2 + $0xa] sm:$0xff]
    %v798 = vld [vmem:[#allocation2 + $0x1a] sm:$0xff]
    %v799 = vld [vmem:[#allocation2 + $0x22] sm:$0xff]
    %s800 = scalar_lea.vmem [#allocation7], 384
    %v801 = vld [vmem:[%s800] sm:$0xff]
    %v802 = vld [vmem:[%s800 + $0x8] sm:$0xff]
    %v803 = vld [vmem:[%s800 + $0x10] sm:$0xff]
    %v804 = vld [vmem:[%s800 + $0x18] sm:$0xff]
    %v805 = vld [vmem:[%s800 + $0x20] sm:$0xff]
    %v806 = vld [vmem:[%s800 + $0x28] sm:$0xff]
    %v807 = vld [vmem:[%s800 + $0x30] sm:$0xff]
    %v808 = vld [vmem:[%s800 + $0x38] sm:$0xff]
    %v810 = vsel %vm153, %v796, 0
    %v813 = vsel %vm153, %v797, 0
    %v816 = vsel %vm153, %v798, 0
    %v819 = vsel %vm153, %v799, 0
    %821 = vmatprep.subr.mxu0 0.0
    %822 = vmatpush1.msra.mxu0 %v801
    %823 = vmatprep.subr.mxu0 0.0
    %824 = vmatpush1.msra.mxu0 %v802
    %825 = vmatprep.subr.mxu0 0.0
    %826 = vmatpush1.msra.mxu0 %v803
    %827 = vmatprep.subr.mxu0 0.0
    %828 = vmatpush1.msra.mxu0 %v804
    %829 = vmatprep.subr.mxu0 0.0
    %830 = vmatpush1.msra.mxu0 %v805
    %831 = vmatprep.subr.mxu0 0.0
    %832 = vmatpush1.msra.mxu0 %v806
    %833 = vmatprep.subr.mxu0 0.0
    %834 = vmatpush1.msra.mxu0 %v807
    %835 = vmatprep.subr.mxu0 0.0
    %836 = vmatpush1.msra.mxu0 %v808
    %837 = vmatprep.subr.mxu0 0.0
    %838 = vmatpush1.msra.mxu0 0.0
    %839 = vmatprep.subr.mxu0 0.0
    %840 = vmatpush1.msra.mxu0 0.0
    %841 = vmatprep.subr.mxu0 0.0
    %842 = vmatpush1.msra.mxu0 0.0
    %843 = vmatprep.subr.mxu0 0.0
    %844 = vmatpush1.msra.mxu0 0.0
    %845 = vmatprep.subr.mxu0 0.0
    %846 = vmatpush1.msra.mxu0 0.0
    %847 = vmatprep.subr.mxu0 0.0
    %848 = vmatpush1.msra.mxu0 0.0
    %849 = vmatprep.subr.mxu0 0.0
    %850 = vmatpush1.msra.mxu0 0.0
    %851 = vmatprep.subr.mxu0 0.0
    %852 = vmatpush1.msra.mxu0 0.0
    %853 = vmatprep.subr.mxu0 0.0
    %854 = vmatpush1.msra.mxu0 0.0
    %855 = vmatprep.subr.mxu0 0.0
    %856 = vmatpush1.msra.mxu0 0.0
    %857 = vmatprep.subr.mxu0 0.0
    %858 = vmatpush1.msra.mxu0 0.0
    %859 = vmatprep.subr.mxu0 0.0
    %860 = vmatpush1.msra.mxu0 0.0
    %861 = vmatprep.subr.mxu0 0.0
    %862 = vmatpush1.msra.mxu0 0.0
    %863 = vmatprep.subr.mxu0 0.0
    %864 = vmatpush1.msra.mxu0 0.0
    %865 = vmatprep.subr.mxu0 0.0
    %866 = vmatpush1.msra.mxu0 0.0
    %867 = vmatprep.subr.mxu0 0.0
    %868 = vmatpush1.msra.mxu0 0.0
    %869 = vmatprep.subr.mxu0 0.0
    %870 = vmatpush1.msra.mxu0 0.0
    %871 = vmatprep.subr.mxu0 0.0
    %872 = vmatpush1.msra.mxu0 0.0
    %873 = vmatprep.subr.mxu0 0.0
    %874 = vmatpush1.msra.mxu0 0.0
    %875 = vmatprep.subr.mxu0 0.0
    %876 = vmatpush1.msra.mxu0 0.0
    %877 = vmatprep.subr.mxu0 0.0
    %878 = vmatpush1.msra.mxu0 0.0
    %879 = vmatprep.subr.mxu0 0.0
    %880 = vmatpush1.msra.mxu0 0.0
    %881 = vmatprep.subr.mxu0 0.0
    %882 = vmatpush1.msra.mxu0 0.0
    %883 = vmatprep.subr.mxu0 0.0
    %884 = vmatpush1.msra.mxu0 0.0
    %885 = vmatprep.mubr.f32.mxu0 0.0
    %886 = vmatmul.mubr.f32.gmra.mrb[0].mxu0 %v810
    %v887 = vpop.f32.mrb[0].mxu0
    %v888 = vadd.f32 0.0, %v887
    %v889 = vpop.f32.mrb[0].mxu0
    %890 = vmatprep.mubr.f32.mxu0 0.0
    %891 = vmatmul.mubr.f32.gmra.mrb[0].mxu0 %v813
    %v892 = vpop.f32.mrb[0].mxu0
    %v893 = vadd.f32 0.0, %v892
    %v894 = vpop.f32.mrb[0].mxu0
    %895 = vmatprep.mubr.f32.mxu0 0.0
    %896 = vmatmul.mubr.f32.gmra.mrb[0].mxu0 %v816
    %v897 = vpop.f32.mrb[0].mxu0
    %v898 = vadd.f32 0.0, %v897
    %v899 = vpop.f32.mrb[0].mxu0
    %900 = vmatprep.mubr.f32.mxu0 0.0
    %901 = vmatmul.mubr.f32.gmra.mrb[0].mxu0 %v819
    %v902 = vpop.f32.mrb[0].mxu0
    %v903 = vadd.f32 0.0, %v902
    %v904 = vpop.f32.mrb[0].mxu0
    %905 = vdwg.mxu0
    %v906 = vadd.f32 %v792, %v888
    %v907 = vadd.f32 %v793, %v893
    %v908 = vadd.f32 %v794, %v898
    %v909 = vadd.f32 %v795, %v903
    %s910 = scalar_lea.vmem [#allocation7], 448
    %v911 = vld [vmem:[%s910] sm:$0xff]
    %v912 = vld [vmem:[%s910 + $0x8] sm:$0xff]
    %v913 = vld [vmem:[%s910 + $0x10] sm:$0xff]
    %v914 = vld [vmem:[%s910 + $0x18] sm:$0xff]
    %v915 = vld [vmem:[%s910 + $0x20] sm:$0xff]
    %v916 = vld [vmem:[%s910 + $0x28] sm:$0xff]
    %v917 = vld [vmem:[%s910 + $0x30] sm:$0xff]
    %v918 = vld [vmem:[%s910 + $0x38] sm:$0xff]
    %919 = vrot.lane.b32.xlu0 %v796, 124
    %v920 = vpop.permute.xlu0 %919
    %921 = vrot.lane.b32.xlu0 %v797, 124
    %v922 = vpop.permute.xlu0 %921
    %923 = vrot.lane.b32.xlu0 %v798, 124
    %v924 = vpop.permute.xlu0 %923
    %925 = vrot.lane.b32.xlu0 %v799, 124
    %v926 = vpop.permute.xlu0 %925
    %v927 = vsel %vm153, %v920, 0
    %v929 = vsel %vm153, %v922, 0
    %v931 = vsel %vm153, %v924, 0
    %v933 = vsel %vm153, %v926, 0
    %935 = vmatprep.subr.mxu0 0.0
    %936 = vmatpush1.msra.mxu0 %v911
    %937 = vmatprep.subr.mxu0 0.0
    %938 = vmatpush1.msra.mxu0 %v912
    %939 = vmatprep.subr.mxu0 0.0
    %940 = vmatpush1.msra.mxu0 %v913
    %941 = vmatprep.subr.mxu0 0.0
    %942 = vmatpush1.msra.mxu0 %v914
    %943 = vmatprep.subr.mxu0 0.0
    %944 = vmatpush1.msra.mxu0 %v915
    %945 = vmatprep.subr.mxu0 0.0
    %946 = vmatpush1.msra.mxu0 %v916
    %947 = vmatprep.subr.mxu0 0.0
    %948 = vmatpush1.msra.mxu0 %v917
    %949 = vmatprep.subr.mxu0 0.0
    %950 = vmatpush1.msra.mxu0 %v918
    %951 = vmatprep.subr.mxu0 0.0
    %952 = vmatpush1.msra.mxu0 0.0
    %953 = vmatprep.subr.mxu0 0.0
    %954 = vmatpush1.msra.mxu0 0.0
    %955 = vmatprep.subr.mxu0 0.0
    %956 = vmatpush1.msra.mxu0 0.0
    %957 = vmatprep.subr.mxu0 0.0
    %958 = vmatpush1.msra.mxu0 0.0
    %959 = vmatprep.subr.mxu0 0.0
    %960 = vmatpush1.msra.mxu0 0.0
    %961 = vmatprep.subr.mxu0 0.0
    %962 = vmatpush1.msra.mxu0 0.0
    %963 = vmatprep.subr.mxu0 0.0
    %964 = vmatpush1.msra.mxu0 0.0
    %965 = vmatprep.subr.mxu0 0.0
    %966 = vmatpush1.msra.mxu0 0.0
    %967 = vmatprep.subr.mxu0 0.0
    %968 = vmatpush1.msra.mxu0 0.0
    %969 = vmatprep.subr.mxu0 0.0
    %970 = vmatpush1.msra.mxu0 0.0
    %971 = vmatprep.subr.mxu0 0.0
    %972 = vmatpush1.msra.mxu0 0.0
    %973 = vmatprep.subr.mxu0 0.0
    %974 = vmatpush1.msra.mxu0 0.0
    %975 = vmatprep.subr.mxu0 0.0
    %976 = vmatpush1.msra.mxu0 0.0
    %977 = vmatprep.subr.mxu0 0.0
    %978 = vmatpush1.msra.mxu0 0.0
    %979 = vmatprep.subr.mxu0 0.0
    %980 = vmatpush1.msra.mxu0 0.0
    %981 = vmatprep.subr.mxu0 0.0
    %982 = vmatpush1.msra.mxu0 0.0
    %983 = vmatprep.subr.mxu0 0.0
    %984 = vmatpush1.msra.mxu0 0.0
    %985 = vmatprep.subr.mxu0 0.0
    %986 = vmatpush1.msra.mxu0 0.0
    %987 = vmatprep.subr.mxu0 0.0
    %988 = vmatpush1.msra.mxu0 0.0
    %989 = vmatprep.subr.mxu0 0.0
    %990 = vmatpush1.msra.mxu0 0.0
    %991 = vmatprep.subr.mxu0 0.0
    %992 = vmatpush1.msra.mxu0 0.0
    %993 = vmatprep.subr.mxu0 0.0
    %994 = vmatpush1.msra.mxu0 0.0
    %995 = vmatprep.subr.mxu0 0.0
    %996 = vmatpush1.msra.mxu0 0.0
    %997 = vmatprep.subr.mxu0 0.0
    %998 = vmatpush1.msra.mxu0 0.0
    %999 = vmatprep.mubr.f32.mxu0 0.0
    %1000 = vmatmul.mubr.f32.gmra.mrb[0].mxu0 %v927
    %v1001 = vpop.f32.mrb[0].mxu0
    %v1002 = vadd.f32 0.0, %v1001
    %v1003 = vpop.f32.mrb[0].mxu0
    %1004 = vmatprep.mubr.f32.mxu0 0.0
    %1005 = vmatmul.mubr.f32.gmra.mrb[0].mxu0 %v929
    %v1006 = vpop.f32.mrb[0].mxu0
    %v1007 = vadd.f32 0.0, %v1006
    %v1008 = vpop.f32.mrb[0].mxu0
    %1009 = vmatprep.mubr.f32.mxu0 0.0
    %1010 = vmatmul.mubr.f32.gmra.mrb[0].mxu0 %v931
    %v1011 = vpop.f32.mrb[0].mxu0
    %v1012 = vadd.f32 0.0, %v1011
    %v1013 = vpop.f32.mrb[0].mxu0
    %1014 = vmatprep.mubr.f32.mxu0 0.0
    %1015 = vmatmul.mubr.f32.gmra.mrb[0].mxu0 %v933
    %v1016 = vpop.f32.mrb[0].mxu0
    %v1017 = vadd.f32 0.0, %v1016
    %v1018 = vpop.f32.mrb[0].mxu0
    %1019 = vdwg.mxu0
    %v1020 = vadd.f32 %v906, %v1002
    %v1021 = vadd.f32 %v907, %v1007
    %v1022 = vadd.f32 %v908, %v1012
    %v1023 = vadd.f32 %v909, %v1017
    %s1024 = scalar_lea.vmem [#allocation7], 512
    %v1025 = vld [vmem:[%s1024] sm:$0xff]
    %v1026 = vld [vmem:[%s1024 + $0x8] sm:$0xff]
    %v1027 = vld [vmem:[%s1024 + $0x10] sm:$0xff]
    %v1028 = vld [vmem:[%s1024 + $0x18] sm:$0xff]
    %v1029 = vld [vmem:[%s1024 + $0x20] sm:$0xff]
    %v1030 = vld [vmem:[%s1024 + $0x28] sm:$0xff]
    %v1031 = vld [vmem:[%s1024 + $0x30] sm:$0xff]
    %v1032 = vld [vmem:[%s1024 + $0x38] sm:$0xff]
    %1033 = vrot.lane.b32.xlu0 %v796, 120
    %v1034 = vpop.permute.xlu0 %1033
    %1035 = vrot.lane.b32.xlu0 %v797, 120
    %v1036 = vpop.permute.xlu0 %1035
    %1037 = vrot.lane.b32.xlu0 %v798, 120
    %v1038 = vpop.permute.xlu0 %1037
    %1039 = vrot.lane.b32.xlu0 %v799, 120
    %v1040 = vpop.permute.xlu0 %1039
    %v1041 = vsel %vm153, %v1034, 0
    %v1043 = vsel %vm153, %v1036, 0
    %v1045 = vsel %vm153, %v1038, 0
    %v1047 = vsel %vm153, %v1040, 0
    %1049 = vmatprep.subr.mxu0 0.0
    %1050 = vmatpush1.msra.mxu0 %v1025
    %1051 = vmatprep.subr.mxu0 0.0
    %1052 = vmatpush1.msra.mxu0 %v1026
    %1053 = vmatprep.subr.mxu0 0.0
    %1054 = vmatpush1.msra.mxu0 %v1027
    %1055 = vmatprep.subr.mxu0 0.0
    %1056 = vmatpush1.msra.mxu0 %v1028
    %1057 = vmatprep.subr.mxu0 0.0
    %1058 = vmatpush1.msra.mxu0 %v1029
    %1059 = vmatprep.subr.mxu0 0.0
    %1060 = vmatpush1.msra.mxu0 %v1030
    %1061 = vmatprep.subr.mxu0 0.0
    %1062 = vmatpush1.msra.mxu0 %v1031
    %1063 = vmatprep.subr.mxu0 0.0
    %1064 = vmatpush1.msra.mxu0 %v1032
    %1065 = vmatprep.subr.mxu0 0.0
    %1066 = vmatpush1.msra.mxu0 0.0
    %1067 = vmatprep.subr.mxu0 0.0
    %1068 = vmatpush1.msra.mxu0 0.0
    %1069 = vmatprep.subr.mxu0 0.0
    %1070 = vmatpush1.msra.mxu0 0.0
    %1071 = vmatprep.subr.mxu0 0.0
    %1072 = vmatpush1.msra.mxu0 0.0
    %1073 = vmatprep.subr.mxu0 0.0
    %1074 = vmatpush1.msra.mxu0 0.0
    %1075 = vmatprep.subr.mxu0 0.0
    %1076 = vmatpush1.msra.mxu0 0.0
    %1077 = vmatprep.subr.mxu0 0.0
    %1078 = vmatpush1.msra.mxu0 0.0
    %1079 = vmatprep.subr.mxu0 0.0
    %1080 = vmatpush1.msra.mxu0 0.0
    %1081 = vmatprep.subr.mxu0 0.0
    %1082 = vmatpush1.msra.mxu0 0.0
    %1083 = vmatprep.subr.mxu0 0.0
    %1084 = vmatpush1.msra.mxu0 0.0
    %1085 = vmatprep.subr.mxu0 0.0
    %1086 = vmatpush1.msra.mxu0 0.0
    %1087 = vmatprep.subr.mxu0 0.0
    %1088 = vmatpush1.msra.mxu0 0.0
    %1089 = vmatprep.subr.mxu0 0.0
    %1090 = vmatpush1.msra.mxu0 0.0
    %1091 = vmatprep.subr.mxu0 0.0
    %1092 = vmatpush1.msra.mxu0 0.0
    %1093 = vmatprep.subr.mxu0 0.0
    %1094 = vmatpush1.msra.mxu0 0.0
    %1095 = vmatprep.subr.mxu0 0.0
    %1096 = vmatpush1.msra.mxu0 0.0
    %1097 = vmatprep.subr.mxu0 0.0
    %1098 = vmatpush1.msra.mxu0 0.0
    %1099 = vmatprep.subr.mxu0 0.0
    %1100 = vmatpush1.msra.mxu0 0.0
    %1101 = vmatprep.subr.mxu0 0.0
    %1102 = vmatpush1.msra.mxu0 0.0
    %1103 = vmatprep.subr.mxu0 0.0
    %1104 = vmatpush1.msra.mxu0 0.0
    %1105 = vmatprep.subr.mxu0 0.0
    %1106 = vmatpush1.msra.mxu0 0.0
    %1107 = vmatprep.subr.mxu0 0.0
    %1108 = vmatpush1.msra.mxu0 0.0
    %1109 = vmatprep.subr.mxu0 0.0
    %1110 = vmatpush1.msra.mxu0 0.0
    %1111 = vmatprep.subr.mxu0 0.0
    %1112 = vmatpush1.msra.mxu0 0.0
    %1113 = vmatprep.mubr.f32.mxu0 0.0
    %1114 = vmatmul.mubr.f32.gmra.mrb[0].mxu0 %v1041
    %v1115 = vpop.f32.mrb[0].mxu0
    %v1116 = vadd.f32 0.0, %v1115
    %v1117 = vpop.f32.mrb[0].mxu0
    %1118 = vmatprep.mubr.f32.mxu0 0.0
    %1119 = vmatmul.mubr.f32.gmra.mrb[0].mxu0 %v1043
    %v1120 = vpop.f32.mrb[0].mxu0
    %v1121 = vadd.f32 0.0, %v1120
    %v1122 = vpop.f32.mrb[0].mxu0
    %1123 = vmatprep.mubr.f32.mxu0 0.0
    %1124 = vmatmul.mubr.f32.gmra.mrb[0].mxu0 %v1045
    %v1125 = vpop.f32.mrb[0].mxu0
    %v1126 = vadd.f32 0.0, %v1125
    %v1127 = vpop.f32.mrb[0].mxu0
    %1128 = vmatprep.mubr.f32.mxu0 0.0
    %1129 = vmatmul.mubr.f32.gmra.mrb[0].mxu0 %v1047
    %v1130 = vpop.f32.mrb[0].mxu0
    %v1131 = vadd.f32 0.0, %v1130
    %v1132 = vpop.f32.mrb[0].mxu0
    %1133 = vdwg.mxu0
    %v1134 = vadd.f32 %v1020, %v1116
    %v1135 = vadd.f32 %v1021, %v1121
    %v1136 = vadd.f32 %v1022, %v1126
    %v1137 = vadd.f32 %v1023, %v1131
    %v1138 = vld [vmem:[%s2] sm:$0x1]
    %v1140 = vlaneseq
    %v1141 = vshrl.u32 %v1140, 7
    %v1142 = vsub.s32 0, %v1141
    %v1143 = vrot.slane %v1138, %v1142
    %v1145 = vadd.f32 %v1134, %v1143
    %v1146 = vadd.f32 %v1135, %v1143
    %v1147 = vadd.f32 %v1136, %v1143
    %v1148 = vadd.f32 %v1137, %v1143
    %vm1149 = vcmp.gt.f32.partialorder %v1145, 0.0
    %vm1150 = vcmp.gt.f32.partialorder %v1146, 0.0
    %vm1151 = vcmp.gt.f32.partialorder %v1147, 0.0
    %vm1152 = vcmp.gt.f32.partialorder %v1148, 0.0
    %v1153 = vmul.f32 %v1145, 0.2
    %v1154 = vmul.f32 %v1146, 0.2
    %v1155 = vmul.f32 %v1147, 0.2
    %v1156 = vmul.f32 %v1148, 0.2
    %v1157 = vsel %vm1149, %v1145, %v1153
    %v1158 = vsel %vm1150, %v1146, %v1154
    %v1159 = vsel %vm1151, %v1147, %v1155
    %v1160 = vsel %vm1152, %v1148, %v1156
    %v1161 = vadd.f32 %v1157, %v1158
    %v1162 = vadd.f32 %v1161, %v1159
    %v1163 = vadd.f32 %v1162, %v1160
    %v1164 = vrot.slane %v1163, 4
    %v1165 = vadd.f32 %v1163, %v1164
    %v1166 = vrot.slane %v1165, 2
    %v1167 = vadd.f32 %v1165, %v1166
    %v1168 = vrot.slane %v1167, 1
    %v1169 = vadd.f32 %v1167, %v1168
    %v1170 = vmul.f32 %v1157, %v1157
    %v1171 = vmul.f32 %v1158, %v1158
    %v1172 = vmul.f32 %v1159, %v1159
    %v1173 = vmul.f32 %v1160, %v1160
    %v1174 = vadd.f32 %v1170, %v1171
    %v1175 = vadd.f32 %v1174, %v1172
    %v1176 = vadd.f32 %v1175, %v1173
    %v1177 = vrot.slane %v1176, 4
    %v1178 = vadd.f32 %v1176, %v1177
    %v1179 = vrot.slane %v1178, 2
    %v1180 = vadd.f32 %v1178, %v1179
    %v1181 = vrot.slane %v1180, 1
    %v1182 = vadd.f32 %v1180, %v1181
    %1184 = vrot.lane.b32.xlu0 %v1169, 120
    %v1185 = vpop.permute.xlu0 %1184
    %v1187 = vadd.f32 %v1169, %v1185
    %1188 = vrot.lane.b32.xlu0 %v1169, 112
    %v1189 = vpop.permute.xlu0 %1188
    %v1191 = vadd.f32 %v1187, %v1189
    %1192 = vrot.lane.b32.xlu0 %v1169, 104
    %v1193 = vpop.permute.xlu0 %1192
    %v1195 = vadd.f32 %v1191, %v1193
    %1196 = vrot.lane.b32.xlu0 %v1169, 96
    %v1197 = vpop.permute.xlu0 %1196
    %v1199 = vadd.f32 %v1195, %v1197
    %1200 = vrot.lane.b32.xlu0 %v1169, 88
    %v1201 = vpop.permute.xlu0 %1200
    %v1203 = vadd.f32 %v1199, %v1201
    %1204 = vrot.lane.b32.xlu0 %v1169, 80
    %v1205 = vpop.permute.xlu0 %1204
    %v1207 = vadd.f32 %v1203, %v1205
    %1208 = vrot.lane.b32.xlu0 %v1169, 72
    %v1209 = vpop.permute.xlu0 %1208
    %v1211 = vadd.f32 %v1207, %v1209
    %1212 = vrot.lane.b32.xlu0 %v1169, 64
    %v1213 = vpop.permute.xlu0 %1212
    %v1215 = vadd.f32 %v1211, %v1213
    %1216 = vrot.lane.b32.xlu0 %v1169, 56
    %v1217 = vpop.permute.xlu0 %1216
    %v1219 = vadd.f32 %v1215, %v1217
    %1220 = vrot.lane.b32.xlu0 %v1169, 48
    %v1221 = vpop.permute.xlu0 %1220
    %v1223 = vadd.f32 %v1219, %v1221
    %1224 = vrot.lane.b32.xlu0 %v1169, 40
    %v1225 = vpop.permute.xlu0 %1224
    %v1227 = vadd.f32 %v1223, %v1225
    %1228 = vrot.lane.b32.xlu0 %v1169, 32
    %v1229 = vpop.permute.xlu0 %1228
    %v1231 = vadd.f32 %v1227, %v1229
    %1232 = vrot.lane.b32.xlu0 %v1169, 24
    %v1233 = vpop.permute.xlu0 %1232
    %v1235 = vadd.f32 %v1231, %v1233
    %1236 = vrot.lane.b32.xlu0 %v1169, 16
    %v1237 = vpop.permute.xlu0 %1236
    %v1239 = vadd.f32 %v1235, %v1237
    %1240 = vrot.lane.b32.xlu0 %v1169, 8
    %v1241 = vpop.permute.xlu0 %1240
    %v1243 = vadd.f32 %v1239, %v1241
    %v1244 = vmul.f32 %v1243, 0.001953125
    %1246 = vrot.lane.b32.xlu0 %v1182, 120
    %v1247 = vpop.permute.xlu0 %1246
    %v1249 = vadd.f32 %v1182, %v1247
    %1250 = vrot.lane.b32.xlu0 %v1182, 112
    %v1251 = vpop.permute.xlu0 %1250
    %v1253 = vadd.f32 %v1249, %v1251
    %1254 = vrot.lane.b32.xlu0 %v1182, 104
    %v1255 = vpop.permute.xlu0 %1254
    %v1257 = vadd.f32 %v1253, %v1255
    %1258 = vrot.lane.b32.xlu0 %v1182, 96
    %v1259 = vpop.permute.xlu0 %1258
    %v1261 = vadd.f32 %v1257, %v1259
    %1262 = vrot.lane.b32.xlu0 %v1182, 88
    %v1263 = vpop.permute.xlu0 %1262
    %v1265 = vadd.f32 %v1261, %v1263
    %1266 = vrot.lane.b32.xlu0 %v1182, 80
    %v1267 = vpop.permute.xlu0 %1266
    %v1269 = vadd.f32 %v1265, %v1267
    %1270 = vrot.lane.b32.xlu0 %v1182, 72
    %v1271 = vpop.permute.xlu0 %1270
    %v1273 = vadd.f32 %v1269, %v1271
    %1274 = vrot.lane.b32.xlu0 %v1182, 64
    %v1275 = vpop.permute.xlu0 %1274
    %v1277 = vadd.f32 %v1273, %v1275
    %1278 = vrot.lane.b32.xlu0 %v1182, 56
    %v1279 = vpop.permute.xlu0 %1278
    %v1281 = vadd.f32 %v1277, %v1279
    %1282 = vrot.lane.b32.xlu0 %v1182, 48
    %v1283 = vpop.permute.xlu0 %1282
    %v1285 = vadd.f32 %v1281, %v1283
    %1286 = vrot.lane.b32.xlu0 %v1182, 40
    %v1287 = vpop.permute.xlu0 %1286
    %v1289 = vadd.f32 %v1285, %v1287
    %1290 = vrot.lane.b32.xlu0 %v1182, 32
    %v1291 = vpop.permute.xlu0 %1290
    %v1293 = vadd.f32 %v1289, %v1291
    %1294 = vrot.lane.b32.xlu0 %v1182, 24
    %v1295 = vpop.permute.xlu0 %1294
    %v1297 = vadd.f32 %v1293, %v1295
    %1298 = vrot.lane.b32.xlu0 %v1182, 16
    %v1299 = vpop.permute.xlu0 %1298
    %v1301 = vadd.f32 %v1297, %v1299
    %1302 = vrot.lane.b32.xlu0 %v1182, 8
    %v1303 = vpop.permute.xlu0 %1302
    %v1305 = vadd.f32 %v1301, %v1303
    %v1306 = vmul.f32 %v1305, 0.001953125
    %v1307 = vmul.f32 %v1244, %v1244
    %v1308 = vsub.f32 %v1306, %v1307
    %v1309 = vmax.f32 %v1308, 0.0
    %v1310 = vld [vmem:[%s3] sm:$0x1]
    %v1311 = vadd.f32 %v1309, 1e-05
    %v1312 = vrsqrt.pop %v1311
    %v1313 = vmul.f32 %v1310, %v1312
    %v1314 = vld [vmem:[%s4] sm:$0x1]
    %v1315 = vmul.f32 %v1244, %v1313
    %v1316 = vsub.f32 %v1314, %v1315
    %v1318 = vlaneseq
    %v1319 = vshrl.u32 %v1318, 7
    %v1320 = vsub.s32 0, %v1319
    %v1321 = vrot.slane %v1313, %v1320
    %1322 = vrot.lane.b32.xlu0 %v1321, 8
    %v1323 = vpop.permute.xlu0 %1322
    %1325 = vrot.lane.b32.xlu0 %v1321, 16
    %v1326 = vpop.permute.xlu0 %1325
    %1328 = vrot.lane.b32.xlu0 %v1321, 24
    %v1329 = vpop.permute.xlu0 %1328
    %1331 = vrot.lane.b32.xlu0 %v1321, 32
    %v1332 = vpop.permute.xlu0 %1331
    %1334 = vrot.lane.b32.xlu0 %v1321, 40
    %v1335 = vpop.permute.xlu0 %1334
    %1337 = vrot.lane.b32.xlu0 %v1321, 48
    %v1338 = vpop.permute.xlu0 %1337
    %1340 = vrot.lane.b32.xlu0 %v1321, 56
    %v1341 = vpop.permute.xlu0 %1340
    %1343 = vrot.lane.b32.xlu0 %v1321, 64
    %v1344 = vpop.permute.xlu0 %1343
    %1346 = vrot.lane.b32.xlu0 %v1321, 72
    %v1347 = vpop.permute.xlu0 %1346
    %1349 = vrot.lane.b32.xlu0 %v1321, 80
    %v1350 = vpop.permute.xlu0 %1349
    %1352 = vrot.lane.b32.xlu0 %v1321, 88
    %v1353 = vpop.permute.xlu0 %1352
    %1355 = vrot.lane.b32.xlu0 %v1321, 96
    %v1356 = vpop.permute.xlu0 %1355
    %1358 = vrot.lane.b32.xlu0 %v1321, 104
    %v1359 = vpop.permute.xlu0 %1358
    %1361 = vrot.lane.b32.xlu0 %v1321, 112
    %v1362 = vpop.permute.xlu0 %1361
    %1364 = vrot.lane.b32.xlu0 %v1321, 120
    %v1365 = vpop.permute.xlu0 %1364
    %vm1367 = vcmask 64512
    %v1368 = vsel %vm1367, %v1313, %v1323
    %vm1369 = vcmask 130048
    %v1370 = vsel %vm1369, %v1368, %v1326
    %vm1371 = vcmask 195584
    %v1372 = vsel %vm1371, %v1370, %v1329
    %vm1373 = vcmask 261120
    %v1374 = vsel %vm1373, %v1372, %v1332
    %vm1375 = vcmask 326656
    %v1376 = vsel %vm1375, %v1374, %v1335
    %vm1377 = vcmask 392192
    %v1378 = vsel %vm1377, %v1376, %v1338
    %vm1379 = vcmask 457728
    %v1380 = vsel %vm1379, %v1378, %v1341
    %v1381 = vsel %vm153, %v1380, %v1344
    %vm1382 = vcmask 588800
    %v1383 = vsel %vm1382, %v1381, %v1347
    %vm1384 = vcmask 654336
    %v1385 = vsel %vm1384, %v1383, %v1350
    %vm1386 = vcmask 719872
    %v1387 = vsel %vm1386, %v1385, %v1353
    %vm1388 = vcmask 785408
    %v1389 = vsel %vm1388, %v1387, %v1356
    %vm1390 = vcmask 850944
    %v1391 = vsel %vm1390, %v1389, %v1359
    %vm1392 = vcmask 916480
    %v1393 = vsel %vm1392, %v1391, %v1362
    %vm1394 = vcmask 982016
    %v1395 = vsel %vm1394, %v1393, %v1365
    %v1396 = vlaneseq
    %v1397 = vshrl.u32 %v1396, 7
    %v1398 = vsub.s32 0, %v1397
    %v1399 = vrot.slane %v1395, %v1398
    %v1400 = vmul.f32 %v1157, %v1399
    %v1401 = vmul.f32 %v1158, %v1399
    %v1402 = vmul.f32 %v1159, %v1399
    %v1403 = vmul.f32 %v1160, %v1399
    %v1405 = vlaneseq
    %v1406 = vshrl.u32 %v1405, 7
    %v1407 = vsub.s32 0, %v1406
    %v1408 = vrot.slane %v1316, %v1407
    %1409 = vrot.lane.b32.xlu0 %v1408, 8
    %v1410 = vpop.permute.xlu0 %1409
    %1412 = vrot.lane.b32.xlu0 %v1408, 16
    %v1413 = vpop.permute.xlu0 %1412
    %1415 = vrot.lane.b32.xlu0 %v1408, 24
    %v1416 = vpop.permute.xlu0 %1415
    %1418 = vrot.lane.b32.xlu0 %v1408, 32
    %v1419 = vpop.permute.xlu0 %1418
    %1421 = vrot.lane.b32.xlu0 %v1408, 40
    %v1422 = vpop.permute.xlu0 %1421
    %1424 = vrot.lane.b32.xlu0 %v1408, 48
    %v1425 = vpop.permute.xlu0 %1424
    %1427 = vrot.lane.b32.xlu0 %v1408, 56
    %v1428 = vpop.permute.xlu0 %1427
    %1430 = vrot.lane.b32.xlu0 %v1408, 64
    %v1431 = vpop.permute.xlu0 %1430
    %1433 = vrot.lane.b32.xlu0 %v1408, 72
    %v1434 = vpop.permute.xlu0 %1433
    %1436 = vrot.lane.b32.xlu0 %v1408, 80
    %v1437 = vpop.permute.xlu0 %1436
    %1439 = vrot.lane.b32.xlu0 %v1408, 88
    %v1440 = vpop.permute.xlu0 %1439
    %1442 = vrot.lane.b32.xlu0 %v1408, 96
    %v1443 = vpop.permute.xlu0 %1442
    %1445 = vrot.lane.b32.xlu0 %v1408, 104
    %v1446 = vpop.permute.xlu0 %1445
    %1448 = vrot.lane.b32.xlu0 %v1408, 112
    %v1449 = vpop.permute.xlu0 %1448
    %1451 = vrot.lane.b32.xlu0 %v1408, 120
    %v1452 = vpop.permute.xlu0 %1451
    %v1454 = vsel %vm1367, %v1316, %v1410
    %v1455 = vsel %vm1369, %v1454, %v1413
    %v1456 = vsel %vm1371, %v1455, %v1416
    %v1457 = vsel %vm1373, %v1456, %v1419
    %v1458 = vsel %vm1375, %v1457, %v1422
    %v1459 = vsel %vm1377, %v1458, %v1425
    %v1460 = vsel %vm1379, %v1459, %v1428
    %v1461 = vsel %vm153, %v1460, %v1431
    %v1462 = vsel %vm1382, %v1461, %v1434
    %v1463 = vsel %vm1384, %v1462, %v1437
    %v1464 = vsel %vm1386, %v1463, %v1440
    %v1465 = vsel %vm1388, %v1464, %v1443
    %v1466 = vsel %vm1390, %v1465, %v1446
    %v1467 = vsel %vm1392, %v1466, %v1449
    %v1468 = vsel %vm1394, %v1467, %v1452
    %v1469 = vlaneseq
    %v1470 = vshrl.u32 %v1469, 7
    %v1471 = vsub.s32 0, %v1470
    %v1472 = vrot.slane %v1468, %v1471
    %v1473 = vadd.f32 %v1400, %v1472
    %v1474 = vadd.f32 %v1401, %v1472
    %v1475 = vadd.f32 %v1402, %v1472
    %v1476 = vadd.f32 %v1403, %v1472
    %v1477 = vlaneseq
    %vm1478 = vcmp.ge.s32.totalorder %v1477, 0
    %vm1479 = vcmp.lt.s32.totalorder %v1477, 144
    %vm1480 = vmand %vm1478, %vm1479
    %1481 = vst.msk [vmem:[#allocation3] ss:$8 sm:$0x3] %vm1480, 0.0
    %1482 = vst.msk [vmem:[#allocation3] ss:$8 sm:$0x0] %vm1480, 0.0
    %s1483 = scalar_lea.vmem [#allocation3], 48
    %1484 = vst.msk [vmem:[%s1483] ss:$8 sm:$0x3] %vm1480, 0.0
    %1485 = vst.msk [vmem:[%s1483] ss:$8 sm:$0x0] %vm1480, 0.0
    %s1486 = scalar_lea.vmem [#allocation3], 33
    %1487 = vst.msk [vmem:[%s1486] ss:$8 sm:$0x3] %vm1480, 0.0
    %1488 = vst.msk [vmem:[%s1486] ss:$8 sm:$0x0] %vm1480, 0.0
    %s1489 = scalar_lea.vmem [#allocation3], 81
    %1490 = vst.msk [vmem:[%s1489] ss:$8 sm:$0x3] %vm1480, 0.0
    %1491 = vst.msk [vmem:[%s1489] ss:$8 sm:$0x0] %vm1480, 0.0
    %1492 = vst.msk [vmem:[#allocation3] sm:$0xff] %vm1367, 0.0
    %1493 = vst.msk [vmem:[#allocation3 + $0x10] sm:$0xff] %vm1367, 0.0
    %vm1494 = vcmask 58368
    %1495 = vst.msk [vmem:[#allocation3 + $0x20] sm:$0x3] %vm1494, 0.0
    %1496 = vst.msk [vmem:[#allocation3 + $0x30] sm:$0xff] %vm1367, 0.0
    %1497 = vst.msk [vmem:[#allocation3 + $0x40] sm:$0xff] %vm1367, 0.0
    %1498 = vst.msk [vmem:[#allocation3 + $0x50] sm:$0x3] %vm1494, 0.0
    %vm1499 = vcmask 130112
    %1500 = vst.msk [vmem:[#allocation3 + $0x8] sm:$0xff] %vm1499, 0.0
    %1501 = vst.msk [vmem:[#allocation3 + $0x18] sm:$0xff] %vm1499, 0.0
    %vm1502 = vcmask 123968
    %1503 = vst.msk [vmem:[#allocation3 + $0x28] sm:$0x3] %vm1502, 0.0
    %1504 = vst.msk [vmem:[#allocation3 + $0x38] sm:$0xff] %vm1499, 0.0
    %1505 = vst.msk [vmem:[#allocation3 + $0x48] sm:$0xff] %vm1499, 0.0
    %1506 = vst.msk [vmem:[#allocation3 + $0x58] sm:$0x3] %vm1502, 0.0
    %vm1511 = vcmask 1040384
    %v1512 = vrot.slane %v1473, 7
    %v1513 = vrot.slane %v1474, 7
    %v1514 = vsel %vm1511, %v1512, %v1513
    %v1515 = vrot.slane %v1475, 7
    %v1516 = vrot.slane %v1476, 7
    %v1517 = vsel %vm1511, %v1515, %v1516
    %1518 = vrot.lane.b32.xlu0 %v1512, 8
    %v1519 = vpop.permute.xlu0 %1518
    %1520 = vrot.lane.b32.xlu0 %v1514, 8
    %v1521 = vpop.permute.xlu0 %1520
    %1522 = vrot.lane.b32.xlu0 %v1513, 8
    %v1523 = vpop.permute.xlu0 %1522
    %1524 = vrot.lane.b32.xlu0 %v1515, 8
    %v1525 = vpop.permute.xlu0 %1524
    %1526 = vrot.lane.b32.xlu0 %v1517, 8
    %v1527 = vpop.permute.xlu0 %1526
    %1528 = vrot.lane.b32.xlu0 %v1516, 8
    %v1529 = vpop.permute.xlu0 %1528
    %vm1536 = vcmask 1047617
    %1537 = vst.msk [vmem:[#allocation3] sm:$0xfe] %vm1536, %v1519
    %vm1538 = vcmask 64513
    %1539 = vst.msk [vmem:[#allocation3 + $0x8] sm:$0xfe] %vm1538, %v1519
    %vm1540 = vcmask 1047616
    %1541 = vst.msk [vmem:[#allocation3 + $0x10] sm:$0xff] %vm1540, %v1521
    %1542 = vst.msk [vmem:[#allocation3 + $0x18] sm:$0xff] %vm1367, %v1521
    %vm1543 = vcmask 1040448
    %1544 = vst.msk [vmem:[#allocation3 + $0x20] sm:$0x1] %vm1543, %v1523
    %vm1545 = vcmask 57344
    %1546 = vst.msk [vmem:[#allocation3 + $0x28] sm:$0x1] %vm1545, %v1523
    %1547 = vst.msk [vmem:[#allocation3 + $0x30] sm:$0xfe] %vm1536, %v1525
    %1548 = vst.msk [vmem:[#allocation3 + $0x38] sm:$0xfe] %vm1538, %v1525
    %1549 = vst.msk [vmem:[#allocation3 + $0x40] sm:$0xff] %vm1540, %v1527
    %1550 = vst.msk [vmem:[#allocation3 + $0x48] sm:$0xff] %vm1367, %v1527
    %1551 = vst.msk [vmem:[#allocation3 + $0x50] sm:$0x1] %vm1543, %v1529
    %1552 = vst.msk [vmem:[#allocation3 + $0x58] sm:$0x1] %vm1545, %v1529
    %v1553 = vld [vmem:[#allocation3] sm:$0xff]
    %v1554 = vld [vmem:[#allocation3 + $0x10] sm:$0xff]
    %v1555 = vld [vmem:[#allocation3 + $0x30] sm:$0xff]
    %v1556 = vld [vmem:[#allocation3 + $0x40] sm:$0xff]
    %v1557 = vld [vmem:[#allocation9] sm:$0xff]
    %v1558 = vld [vmem:[#allocation9 + $0x8] sm:$0xff]
    %v1559 = vld [vmem:[#allocation9 + $0x10] sm:$0xff]
    %v1560 = vld [vmem:[#allocation9 + $0x18] sm:$0xff]
    %v1561 = vld [vmem:[#allocation9 + $0x20] sm:$0xff]
    %v1562 = vld [vmem:[#allocation9 + $0x28] sm:$0xff]
    %v1563 = vld [vmem:[#allocation9 + $0x30] sm:$0xff]
    %v1564 = vld [vmem:[#allocation9 + $0x38] sm:$0xff]
    %v1565 = vld [vmem:[#allocation9 + $0x40] sm:$0xff]
    %v1566 = vld [vmem:[#allocation9 + $0x48] sm:$0xff]
    %v1567 = vld [vmem:[#allocation9 + $0x50] sm:$0xff]
    %v1568 = vld [vmem:[#allocation9 + $0x58] sm:$0xff]
    %v1569 = vld [vmem:[#allocation9 + $0x60] sm:$0xff]
    %v1570 = vld [vmem:[#allocation9 + $0x68] sm:$0xff]
    %v1571 = vld [vmem:[#allocation9 + $0x70] sm:$0xff]
    %v1572 = vld [vmem:[#allocation9 + $0x78] sm:$0xff]
    %v1573 = vld [vmem:[#allocation3 + $0x8] sm:$0xff]
    %v1574 = vld [vmem:[#allocation3 + $0x18] sm:$0xff]
    %v1575 = vld [vmem:[#allocation3 + $0x38] sm:$0xff]
    %v1576 = vld [vmem:[#allocation3 + $0x48] sm:$0xff]
    %s1577 = scalar_lea.vmem [#allocation9], 128
    %v1578 = vld [vmem:[%s1577] sm:$0xff]
    %v1579 = vld [vmem:[%s1577 + $0x8] sm:$0xff]
    %v1580 = vld [vmem:[%s1577 + $0x10] sm:$0xff]
    %v1581 = vld [vmem:[%s1577 + $0x18] sm:$0xff]
    %v1582 = vld [vmem:[%s1577 + $0x20] sm:$0xff]
    %v1583 = vld [vmem:[%s1577 + $0x28] sm:$0xff]
    %v1584 = vld [vmem:[%s1577 + $0x30] sm:$0xff]
    %v1585 = vld [vmem:[%s1577 + $0x38] sm:$0xff]
    %v1586 = vld [vmem:[%s1577 + $0x40] sm:$0xff]
    %v1587 = vld [vmem:[%s1577 + $0x48] sm:$0xff]
    %v1588 = vld [vmem:[%s1577 + $0x50] sm:$0xff]
    %v1589 = vld [vmem:[%s1577 + $0x58] sm:$0xff]
    %v1590 = vld [vmem:[%s1577 + $0x60] sm:$0xff]
    %v1591 = vld [vmem:[%s1577 + $0x68] sm:$0xff]
    %v1592 = vld [vmem:[%s1577 + $0x70] sm:$0xff]
    %v1593 = vld [vmem:[%s1577 + $0x78] sm:$0xff]
    %1602 = vrot.lane.b32.xlu0 %v1553, 120
    %v1603 = vpop.permute.xlu0 %1602
    %1604 = vrot.lane.b32.xlu0 %v1573, 120
    %v1605 = vpop.permute.xlu0 %1604
    %1606 = vrot.lane.b32.xlu0 %v1554, 120
    %v1607 = vpop.permute.xlu0 %1606
    %1608 = vrot.lane.b32.xlu0 %v1574, 120
    %v1609 = vpop.permute.xlu0 %1608
    %1610 = vrot.lane.b32.xlu0 %v1555, 120
    %v1611 = vpop.permute.xlu0 %1610
    %1612 = vrot.lane.b32.xlu0 %v1575, 120
    %v1613 = vpop.permute.xlu0 %1612
    %1614 = vrot.lane.b32.xlu0 %v1556, 120
    %v1615 = vpop.permute.xlu0 %1614
    %1616 = vrot.lane.b32.xlu0 %v1576, 120
    %v1617 = vpop.permute.xlu0 %1616
    %v1618 = vsel %vm1394, %v1603, %v1605
    %v1619 = vsel %vm1394, %v1607, %v1609
    %v1620 = vsel %vm1394, %v1611, %v1613
    %v1621 = vsel %vm1394, %v1615, %v1617
    %1626 = vmatprep.subr.mxu0 0.0
    %1627 = vmatpush1.msra.mxu0 %v1578
    %1628 = vmatprep.subr.mxu0 0.0
    %1629 = vmatpush1.msra.mxu0 %v1579
    %1630 = vmatprep.subr.mxu0 0.0
    %1631 = vmatpush1.msra.mxu0 %v1580
    %1632 = vmatprep.subr.mxu0 0.0
    %1633 = vmatpush1.msra.mxu0 %v1581
    %1634 = vmatprep.subr.mxu0 0.0
    %1635 = vmatpush1.msra.mxu0 %v1582
    %1636 = vmatprep.subr.mxu0 0.0
    %1637 = vmatpush1.msra.mxu0 %v1583
    %1638 = vmatprep.subr.mxu0 0.0
    %1639 = vmatpush1.msra.mxu0 %v1584
    %1640 = vmatprep.subr.mxu0 0.0
    %1641 = vmatpush1.msra.mxu0 %v1585
    %1642 = vmatprep.subr.mxu0 0.0
    %1643 = vmatpush1.msra.mxu0 %v1586
    %1644 = vmatprep.subr.mxu0 0.0
    %1645 = vmatpush1.msra.mxu0 %v1587
    %1646 = vmatprep.subr.mxu0 0.0
    %1647 = vmatpush1.msra.mxu0 %v1588
    %1648 = vmatprep.subr.mxu0 0.0
    %1649 = vmatpush1.msra.mxu0 %v1589
    %1650 = vmatprep.subr.mxu0 0.0
    %1651 = vmatpush1.msra.mxu0 %v1590
    %1652 = vmatprep.subr.mxu0 0.0
    %1653 = vmatpush1.msra.mxu0 %v1591
    %1654 = vmatprep.subr.mxu0 0.0
    %1655 = vmatpush1.msra.mxu0 %v1592
    %1656 = vmatprep.subr.mxu0 0.0
    %1657 = vmatpush1.msra.mxu0 %v1593
    %1658 = vmatprep.subr.mxu0 0.0
    %1659 = vmatpush1.msra.mxu0 0.0
    %1660 = vmatprep.subr.mxu0 0.0
    %1661 = vmatpush1.msra.mxu0 0.0
    %1662 = vmatprep.subr.mxu0 0.0
    %1663 = vmatpush1.msra.mxu0 0.0
    %1664 = vmatprep.subr.mxu0 0.0
    %1665 = vmatpush1.msra.mxu0 0.0
    %1666 = vmatprep.subr.mxu0 0.0
    %1667 = vmatpush1.msra.mxu0 0.0
    %1668 = vmatprep.subr.mxu0 0.0
    %1669 = vmatpush1.msra.mxu0 0.0
    %1670 = vmatprep.subr.mxu0 0.0
    %1671 = vmatpush1.msra.mxu0 0.0
    %1672 = vmatprep.subr.mxu0 0.0
    %1673 = vmatpush1.msra.mxu0 0.0
    %1674 = vmatprep.subr.mxu0 0.0
    %1675 = vmatpush1.msra.mxu0 0.0
    %1676 = vmatprep.subr.mxu0 0.0
    %1677 = vmatpush1.msra.mxu0 0.0
    %1678 = vmatprep.subr.mxu0 0.0
    %1679 = vmatpush1.msra.mxu0 0.0
    %1680 = vmatprep.subr.mxu0 0.0
    %1681 = vmatpush1.msra.mxu0 0.0
    %1682 = vmatprep.subr.mxu0 0.0
    %1683 = vmatpush1.msra.mxu0 0.0
    %1684 = vmatprep.subr.mxu0 0.0
    %1685 = vmatpush1.msra.mxu0 0.0
    %1686 = vmatprep.subr.mxu0 0.0
    %1687 = vmatpush1.msra.mxu0 0.0
    %1688 = vmatprep.subr.mxu0 0.0
    %1689 = vmatpush1.msra.mxu0 0.0
    %1690 = vmatprep.mubr.f32.mxu0 0.0
    %1691 = vmatmul.mubr.f32.gmra.mrb[0].mxu0 %v1618
    %v1692 = vpop.f32.mrb[0].mxu0
    %v1693 = vadd.f32 0.0, %v1692
    %v1694 = vpop.f32.mrb[0].mxu0
    %1695 = vmatprep.mubr.f32.mxu0 0.0
    %1696 = vmatmul.mubr.f32.gmra.mrb[0].mxu0 %v1619
    %v1697 = vpop.f32.mrb[0].mxu0
    %v1698 = vadd.f32 0.0, %v1697
    %v1699 = vpop.f32.mrb[0].mxu0
    %1700 = vmatprep.mubr.f32.mxu0 0.0
    %1701 = vmatmul.mubr.f32.gmra.mrb[0].mxu0 %v1620
    %v1702 = vpop.f32.mrb[0].mxu0
    %v1703 = vadd.f32 0.0, %v1702
    %v1704 = vpop.f32.mrb[0].mxu0
    %1705 = vmatprep.mubr.f32.mxu0 0.0
    %1706 = vmatmul.mubr.f32.gmra.mrb[0].mxu0 %v1621
    %v1707 = vpop.f32.mrb[0].mxu0
    %v1708 = vadd.f32 0.0, %v1707
    %v1709 = vpop.f32.mrb[0].mxu0
    %1710 = vdwg.mxu0
    %1711 = vmatprep.subr.mxu0 0.0
    %1712 = vmatpush1.msra.mxu0 %v1557
    %1713 = vmatprep.subr.mxu0 0.0
    %1714 = vmatpush1.msra.mxu0 %v1558
    %1715 = vmatprep.subr.mxu0 0.0
    %1716 = vmatpush1.msra.mxu0 %v1559
    %1717 = vmatprep.subr.mxu0 0.0
    %1718 = vmatpush1.msra.mxu0 %v1560
    %1719 = vmatprep.subr.mxu0 0.0
    %1720 = vmatpush1.msra.mxu0 %v1561
    %1721 = vmatprep.subr.mxu0 0.0
    %1722 = vmatpush1.msra.mxu0 %v1562
    %1723 = vmatprep.subr.mxu0 0.0
    %1724 = vmatpush1.msra.mxu0 %v1563
    %1725 = vmatprep.subr.mxu0 0.0
    %1726 = vmatpush1.msra.mxu0 %v1564
    %1727 = vmatprep.subr.mxu0 0.0
    %1728 = vmatpush1.msra.mxu0 %v1565
    %1729 = vmatprep.subr.mxu0 0.0
    %1730 = vmatpush1.msra.mxu0 %v1566
    %1731 = vmatprep.subr.mxu0 0.0
    %1732 = vmatpush1.msra.mxu0 %v1567
    %1733 = vmatprep.subr.mxu0 0.0
    %1734 = vmatpush1.msra.mxu0 %v1568
    %1735 = vmatprep.subr.mxu0 0.0
    %1736 = vmatpush1.msra.mxu0 %v1569
    %1737 = vmatprep.subr.mxu0 0.0
    %1738 = vmatpush1.msra.mxu0 %v1570
    %1739 = vmatprep.subr.mxu0 0.0
    %1740 = vmatpush1.msra.mxu0 %v1571
    %1741 = vmatprep.subr.mxu0 0.0
    %1742 = vmatpush1.msra.mxu0 %v1572
    %1743 = vmatprep.subr.mxu0 0.0
    %1744 = vmatpush1.msra.mxu0 0.0
    %1745 = vmatprep.subr.mxu0 0.0
    %1746 = vmatpush1.msra.mxu0 0.0
    %1747 = vmatprep.subr.mxu0 0.0
    %1748 = vmatpush1.msra.mxu0 0.0
    %1749 = vmatprep.subr.mxu0 0.0
    %1750 = vmatpush1.msra.mxu0 0.0
    %1751 = vmatprep.subr.mxu0 0.0
    %1752 = vmatpush1.msra.mxu0 0.0
    %1753 = vmatprep.subr.mxu0 0.0
    %1754 = vmatpush1.msra.mxu0 0.0
    %1755 = vmatprep.subr.mxu0 0.0
    %1756 = vmatpush1.msra.mxu0 0.0
    %1757 = vmatprep.subr.mxu0 0.0
    %1758 = vmatpush1.msra.mxu0 0.0
    %1759 = vmatprep.subr.mxu0 0.0
    %1760 = vmatpush1.msra.mxu0 0.0
    %1761 = vmatprep.subr.mxu0 0.0
    %1762 = vmatpush1.msra.mxu0 0.0
    %1763 = vmatprep.subr.mxu0 0.0
    %1764 = vmatpush1.msra.mxu0 0.0
    %1765 = vmatprep.subr.mxu0 0.0
    %1766 = vmatpush1.msra.mxu0 0.0
    %1767 = vmatprep.subr.mxu0 0.0
    %1768 = vmatpush1.msra.mxu0 0.0
    %1769 = vmatprep.subr.mxu0 0.0
    %1770 = vmatpush1.msra.mxu0 0.0
    %1771 = vmatprep.subr.mxu0 0.0
    %1772 = vmatpush1.msra.mxu0 0.0
    %1773 = vmatprep.subr.mxu0 0.0
    %1774 = vmatpush1.msra.mxu0 0.0
    %1775 = vmatprep.mubr.f32.mxu0 0.0
    %1776 = vmatmul.mubr.f32.gmra.mrb[0].mxu0 %v1553
    %v1777 = vpop.f32.mrb[0].mxu0
    %v1778 = vadd.f32 %v1693, %v1777
    %v1779 = vpop.f32.mrb[0].mxu0
    %1780 = vmatprep.mubr.f32.mxu0 0.0
    %1781 = vmatmul.mubr.f32.gmra.mrb[0].mxu0 %v1554
    %v1782 = vpop.f32.mrb[0].mxu0
    %v1783 = vadd.f32 %v1698, %v1782
    %v1784 = vpop.f32.mrb[0].mxu0
    %1785 = vmatprep.mubr.f32.mxu0 0.0
    %1786 = vmatmul.mubr.f32.gmra.mrb[0].mxu0 %v1555
    %v1787 = vpop.f32.mrb[0].mxu0
    %v1788 = vadd.f32 %v1703, %v1787
    %v1789 = vpop.f32.mrb[0].mxu0
    %1790 = vmatprep.mubr.f32.mxu0 0.0
    %1791 = vmatmul.mubr.f32.gmra.mrb[0].mxu0 %v1556
    %v1792 = vpop.f32.mrb[0].mxu0
    %v1793 = vadd.f32 %v1708, %v1792
    %v1794 = vpop.f32.mrb[0].mxu0
    %1795 = vdwg.mxu0
    %s1796 = scalar_lea.vmem [#allocation9], 256
    %v1797 = vld [vmem:[%s1796] sm:$0xff]
    %v1798 = vld [vmem:[%s1796 + $0x8] sm:$0xff]
    %v1799 = vld [vmem:[%s1796 + $0x10] sm:$0xff]
    %v1800 = vld [vmem:[%s1796 + $0x18] sm:$0xff]
    %v1801 = vld [vmem:[%s1796 + $0x20] sm:$0xff]
    %v1802 = vld [vmem:[%s1796 + $0x28] sm:$0xff]
    %v1803 = vld [vmem:[%s1796 + $0x30] sm:$0xff]
    %v1804 = vld [vmem:[%s1796 + $0x38] sm:$0xff]
    %v1805 = vld [vmem:[%s1796 + $0x40] sm:$0xff]
    %v1806 = vld [vmem:[%s1796 + $0x48] sm:$0xff]
    %v1807 = vld [vmem:[%s1796 + $0x50] sm:$0xff]
    %v1808 = vld [vmem:[%s1796 + $0x58] sm:$0xff]
    %v1809 = vld [vmem:[%s1796 + $0x60] sm:$0xff]
    %v1810 = vld [vmem:[%s1796 + $0x68] sm:$0xff]
    %v1811 = vld [vmem:[%s1796 + $0x70] sm:$0xff]
    %v1812 = vld [vmem:[%s1796 + $0x78] sm:$0xff]
    %1813 = vrot.lane.b32.xlu0 %v1553, 112
    %v1814 = vpop.permute.xlu0 %1813
    %1815 = vrot.lane.b32.xlu0 %v1573, 112
    %v1816 = vpop.permute.xlu0 %1815
    %1817 = vrot.lane.b32.xlu0 %v1554, 112
    %v1818 = vpop.permute.xlu0 %1817
    %1819 = vrot.lane.b32.xlu0 %v1574, 112
    %v1820 = vpop.permute.xlu0 %1819
    %1821 = vrot.lane.b32.xlu0 %v1555, 112
    %v1822 = vpop.permute.xlu0 %1821
    %1823 = vrot.lane.b32.xlu0 %v1575, 112
    %v1824 = vpop.permute.xlu0 %1823
    %1825 = vrot.lane.b32.xlu0 %v1556, 112
    %v1826 = vpop.permute.xlu0 %1825
    %1827 = vrot.lane.b32.xlu0 %v1576, 112
    %v1828 = vpop.permute.xlu0 %1827
    %v1829 = vsel %vm1392, %v1814, %v1816
    %v1830 = vsel %vm1392, %v1818, %v1820
    %v1831 = vsel %vm1392, %v1822, %v1824
    %v1832 = vsel %vm1392, %v1826, %v1828
    %1837 = vmatprep.subr.mxu0 0.0
    %1838 = vmatpush1.msra.mxu0 %v1797
    %1839 = vmatprep.subr.mxu0 0.0
    %1840 = vmatpush1.msra.mxu0 %v1798
    %1841 = vmatprep.subr.mxu0 0.0
    %1842 = vmatpush1.msra.mxu0 %v1799
    %1843 = vmatprep.subr.mxu0 0.0
    %1844 = vmatpush1.msra.mxu0 %v1800
    %1845 = vmatprep.subr.mxu0 0.0
    %1846 = vmatpush1.msra.mxu0 %v1801
    %1847 = vmatprep.subr.mxu0 0.0
    %1848 = vmatpush1.msra.mxu0 %v1802
    %1849 = vmatprep.subr.mxu0 0.0
    %1850 = vmatpush1.msra.mxu0 %v1803
    %1851 = vmatprep.subr.mxu0 0.0
    %1852 = vmatpush1.msra.mxu0 %v1804
    %1853 = vmatprep.subr.mxu0 0.0
    %1854 = vmatpush1.msra.mxu0 %v1805
    %1855 = vmatprep.subr.mxu0 0.0
    %1856 = vmatpush1.msra.mxu0 %v1806
    %1857 = vmatprep.subr.mxu0 0.0
    %1858 = vmatpush1.msra.mxu0 %v1807
    %1859 = vmatprep.subr.mxu0 0.0
    %1860 = vmatpush1.msra.mxu0 %v1808
    %1861 = vmatprep.subr.mxu0 0.0
    %1862 = vmatpush1.msra.mxu0 %v1809
    %1863 = vmatprep.subr.mxu0 0.0
    %1864 = vmatpush1.msra.mxu0 %v1810
    %1865 = vmatprep.subr.mxu0 0.0
    %1866 = vmatpush1.msra.mxu0 %v1811
    %1867 = vmatprep.subr.mxu0 0.0
    %1868 = vmatpush1.msra.mxu0 %v1812
    %1869 = vmatprep.subr.mxu0 0.0
    %1870 = vmatpush1.msra.mxu0 0.0
    %1871 = vmatprep.subr.mxu0 0.0
    %1872 = vmatpush1.msra.mxu0 0.0
    %1873 = vmatprep.subr.mxu0 0.0
    %1874 = vmatpush1.msra.mxu0 0.0
    %1875 = vmatprep.subr.mxu0 0.0
    %1876 = vmatpush1.msra.mxu0 0.0
    %1877 = vmatprep.subr.mxu0 0.0
    %1878 = vmatpush1.msra.mxu0 0.0
    %1879 = vmatprep.subr.mxu0 0.0
    %1880 = vmatpush1.msra.mxu0 0.0
    %1881 = vmatprep.subr.mxu0 0.0
    %1882 = vmatpush1.msra.mxu0 0.0
    %1883 = vmatprep.subr.mxu0 0.0
    %1884 = vmatpush1.msra.mxu0 0.0
    %1885 = vmatprep.subr.mxu0 0.0
    %1886 = vmatpush1.msra.mxu0 0.0
    %1887 = vmatprep.subr.mxu0 0.0
    %1888 = vmatpush1.msra.mxu0 0.0
    %1889 = vmatprep.subr.mxu0 0.0
    %1890 = vmatpush1.msra.mxu0 0.0
    %1891 = vmatprep.subr.mxu0 0.0
    %1892 = vmatpush1.msra.mxu0 0.0
    %1893 = vmatprep.subr.mxu0 0.0
    %1894 = vmatpush1.msra.mxu0 0.0
    %1895 = vmatprep.subr.mxu0 0.0
    %1896 = vmatpush1.msra.mxu0 0.0
    %1897 = vmatprep.subr.mxu0 0.0
    %1898 = vmatpush1.msra.mxu0 0.0
    %1899 = vmatprep.subr.mxu0 0.0
    %1900 = vmatpush1.msra.mxu0 0.0
    %1901 = vmatprep.mubr.f32.mxu0 0.0
    %1902 = vmatmul.mubr.f32.gmra.mrb[0].mxu0 %v1829
    %v1903 = vpop.f32.mrb[0].mxu0
    %v1904 = vadd.f32 0.0, %v1903
    %v1905 = vpop.f32.mrb[0].mxu0
    %1906 = vmatprep.mubr.f32.mxu0 0.0
    %1907 = vmatmul.mubr.f32.gmra.mrb[0].mxu0 %v1830
    %v1908 = vpop.f32.mrb[0].mxu0
    %v1909 = vadd.f32 0.0, %v1908
    %v1910 = vpop.f32.mrb[0].mxu0
    %1911 = vmatprep.mubr.f32.mxu0 0.0
    %1912 = vmatmul.mubr.f32.gmra.mrb[0].mxu0 %v1831
    %v1913 = vpop.f32.mrb[0].mxu0
    %v1914 = vadd.f32 0.0, %v1913
    %v1915 = vpop.f32.mrb[0].mxu0
    %1916 = vmatprep.mubr.f32.mxu0 0.0
    %1917 = vmatmul.mubr.f32.gmra.mrb[0].mxu0 %v1832
    %v1918 = vpop.f32.mrb[0].mxu0
    %v1919 = vadd.f32 0.0, %v1918
    %v1920 = vpop.f32.mrb[0].mxu0
    %1921 = vdwg.mxu0
    %v1922 = vadd.f32 %v1778, %v1904
    %v1923 = vadd.f32 %v1783, %v1909
    %v1924 = vadd.f32 %v1788, %v1914
    %v1925 = vadd.f32 %v1793, %v1919
    %v1926 = vld [vmem:[#allocation3] sm:$0xfe]
    %v1927 = vld [vmem:[#allocation3 + $0x10] sm:$0xff]
    %v1928 = vld [vmem:[#allocation3 + $0x20] sm:$0x1]
    %v1929 = vld [vmem:[#allocation3 + $0x30] sm:$0xfe]
    %v1930 = vld [vmem:[#allocation3 + $0x40] sm:$0xff]
    %v1931 = vld [vmem:[#allocation3 + $0x50] sm:$0x1]
    %vm1938 = vcmask 1046528
    %v1939 = vrot.slane %v1926, 1
    %v1940 = vrot.slane %v1927, 1
    %v1941 = vsel %vm1938, %v1939, %v1940
    %v1942 = vrot.slane %v1928, 1
    %v1943 = vsel %vm1938, %v1940, %v1942
    %v1944 = vrot.slane %v1929, 1
    %v1945 = vrot.slane %v1930, 1
    %v1946 = vsel %vm1938, %v1944, %v1945
    %v1947 = vrot.slane %v1931, 1
    %v1948 = vsel %vm1938, %v1945, %v1947
    %s1953 = scalar_lea.vmem [#allocation9], 384
    %v1954 = vld [vmem:[%s1953] sm:$0xff]
    %v1955 = vld [vmem:[%s1953 + $0x8] sm:$0xff]
    %v1956 = vld [vmem:[%s1953 + $0x10] sm:$0xff]
    %v1957 = vld [vmem:[%s1953 + $0x18] sm:$0xff]
    %v1958 = vld [vmem:[%s1953 + $0x20] sm:$0xff]
    %v1959 = vld [vmem:[%s1953 + $0x28] sm:$0xff]
    %v1960 = vld [vmem:[%s1953 + $0x30] sm:$0xff]
    %v1961 = vld [vmem:[%s1953 + $0x38] sm:$0xff]
    %v1962 = vld [vmem:[%s1953 + $0x40] sm:$0xff]
    %v1963 = vld [vmem:[%s1953 + $0x48] sm:$0xff]
    %v1964 = vld [vmem:[%s1953 + $0x50] sm:$0xff]
    %v1965 = vld [vmem:[%s1953 + $0x58] sm:$0xff]
    %v1966 = vld [vmem:[%s1953 + $0x60] sm:$0xff]
    %v1967 = vld [vmem:[%s1953 + $0x68] sm:$0xff]
    %v1968 = vld [vmem:[%s1953 + $0x70] sm:$0xff]
    %v1969 = vld [vmem:[%s1953 + $0x78] sm:$0xff]
    %1970 = vmatprep.subr.mxu0 0.0
    %1971 = vmatpush1.msra.mxu0 %v1954
    %1972 = vmatprep.subr.mxu0 0.0
    %1973 = vmatpush1.msra.mxu0 %v1955
    %1974 = vmatprep.subr.mxu0 0.0
    %1975 = vmatpush1.msra.mxu0 %v1956
    %1976 = vmatprep.subr.mxu0 0.0
    %1977 = vmatpush1.msra.mxu0 %v1957
    %1978 = vmatprep.subr.mxu0 0.0
    %1979 = vmatpush1.msra.mxu0 %v1958
    %1980 = vmatprep.subr.mxu0 0.0
    %1981 = vmatpush1.msra.mxu0 %v1959
    %1982 = vmatprep.subr.mxu0 0.0
    %1983 = vmatpush1.msra.mxu0 %v1960
    %1984 = vmatprep.subr.mxu0 0.0
    %1985 = vmatpush1.msra.mxu0 %v1961
    %1986 = vmatprep.subr.mxu0 0.0
    %1987 = vmatpush1.msra.mxu0 %v1962
    %1988 = vmatprep.subr.mxu0 0.0
    %1989 = vmatpush1.msra.mxu0 %v1963
    %1990 = vmatprep.subr.mxu0 0.0
    %1991 = vmatpush1.msra.mxu0 %v1964
    %1992 = vmatprep.subr.mxu0 0.0
    %1993 = vmatpush1.msra.mxu0 %v1965
    %1994 = vmatprep.subr.mxu0 0.0
    %1995 = vmatpush1.msra.mxu0 %v1966
    %1996 = vmatprep.subr.mxu0 0.0
    %1997 = vmatpush1.msra.mxu0 %v1967
    %1998 = vmatprep.subr.mxu0 0.0
    %1999 = vmatpush1.msra.mxu0 %v1968
    %2000 = vmatprep.subr.mxu0 0.0
    %2001 = vmatpush1.msra.mxu0 %v1969
    %2002 = vmatprep.subr.mxu0 0.0
    %2003 = vmatpush1.msra.mxu0 0.0
    %2004 = vmatprep.subr.mxu0 0.0
    %2005 = vmatpush1.msra.mxu0 0.0
    %2006 = vmatprep.subr.mxu0 0.0
    %2007 = vmatpush1.msra.mxu0 0.0
    %2008 = vmatprep.subr.mxu0 0.0
    %2009 = vmatpush1.msra.mxu0 0.0
    %2010 = vmatprep.subr.mxu0 0.0
    %2011 = vmatpush1.msra.mxu0 0.0
    %2012 = vmatprep.subr.mxu0 0.0
    %2013 = vmatpush1.msra.mxu0 0.0
    %2014 = vmatprep.subr.mxu0 0.0
    %2015 = vmatpush1.msra.mxu0 0.0
    %2016 = vmatprep.subr.mxu0 0.0
    %2017 = vmatpush1.msra.mxu0 0.0
    %2018 = vmatprep.subr.mxu0 0.0
    %2019 = vmatpush1.msra.mxu0 0.0
    %2020 = vmatprep.subr.mxu0 0.0
    %2021 = vmatpush1.msra.mxu0 0.0
    %2022 = vmatprep.subr.mxu0 0.0
    %2023 = vmatpush1.msra.mxu0 0.0
    %2024 = vmatprep.subr.mxu0 0.0
    %2025 = vmatpush1.msra.mxu0 0.0
    %2026 = vmatprep.subr.mxu0 0.0
    %2027 = vmatpush1.msra.mxu0 0.0
    %2028 = vmatprep.subr.mxu0 0.0
    %2029 = vmatpush1.msra.mxu0 0.0
    %2030 = vmatprep.subr.mxu0 0.0
    %2031 = vmatpush1.msra.mxu0 0.0
    %2032 = vmatprep.subr.mxu0 0.0
    %2033 = vmatpush1.msra.mxu0 0.0
    %2034 = vmatprep.mubr.f32.mxu0 0.0
    %2035 = vmatmul.mubr.f32.gmra.mrb[0].mxu0 %v1941
    %v2036 = vpop.f32.mrb[0].mxu0
    %v2037 = vadd.f32 0.0, %v2036
    %v2038 = vpop.f32.mrb[0].mxu0
    %2039 = vmatprep.mubr.f32.mxu0 0.0
    %2040 = vmatmul.mubr.f32.gmra.mrb[0].mxu0 %v1943
    %v2041 = vpop.f32.mrb[0].mxu0
    %v2042 = vadd.f32 0.0, %v2041
    %v2043 = vpop.f32.mrb[0].mxu0
    %2044 = vmatprep.mubr.f32.mxu0 0.0
    %2045 = vmatmul.mubr.f32.gmra.mrb[0].mxu0 %v1946
    %v2046 = vpop.f32.mrb[0].mxu0
    %v2047 = vadd.f32 0.0, %v2046
    %v2048 = vpop.f32.mrb[0].mxu0
    %2049 = vmatprep.mubr.f32.mxu0 0.0
    %2050 = vmatmul.mubr.f32.gmra.mrb[0].mxu0 %v1948
    %v2051 = vpop.f32.mrb[0].mxu0
    %v2052 = vadd.f32 0.0, %v2051
    %v2053 = vpop.f32.mrb[0].mxu0
    %2054 = vdwg.mxu0
    %v2055 = vadd.f32 %v1922, %v2037
    %v2056 = vadd.f32 %v1923, %v2042
    %v2057 = vadd.f32 %v1924, %v2047
    %v2058 = vadd.f32 %v1925, %v2052
    %v2059 = vld [vmem:[#allocation3] sm:$0xfe]
    %v2060 = vld [vmem:[#allocation3 + $0x8] sm:$0xfe]
    %v2061 = vld [vmem:[#allocation3 + $0x10] sm:$0xff]
    %v2062 = vld [vmem:[#allocation3 + $0x18] sm:$0xff]
    %v2063 = vld [vmem:[#allocation3 + $0x20] sm:$0x1]
    %v2064 = vld [vmem:[#allocation3 + $0x28] sm:$0x1]
    %v2065 = vld [vmem:[#allocation3 + $0x30] sm:$0xfe]
    %v2066 = vld [vmem:[#allocation3 + $0x38] sm:$0xfe]
    %v2067 = vld [vmem:[#allocation3 + $0x40] sm:$0xff]
    %v2068 = vld [vmem:[#allocation3 + $0x48] sm:$0xff]
    %v2069 = vld [vmem:[#allocation3 + $0x50] sm:$0x1]
    %v2070 = vld [vmem:[#allocation3 + $0x58] sm:$0x1]
    %v2083 = vrot.slane %v2059, 1
    %v2084 = vrot.slane %v2061, 1
    %v2085 = vsel %vm1938, %v2083, %v2084
    %v2086 = vrot.slane %v2060, 1
    %v2087 = vrot.slane %v2062, 1
    %v2088 = vsel %vm1938, %v2086, %v2087
    %v2089 = vrot.slane %v2063, 1
    %v2090 = vsel %vm1938, %v2084, %v2089
    %v2091 = vrot.slane %v2064, 1
    %v2092 = vsel %vm1938, %v2087, %v2091
    %v2093 = vrot.slane %v2065, 1
    %v2094 = vrot.slane %v2067, 1
    %v2095 = vsel %vm1938, %v2093, %v2094
    %v2096 = vrot.slane %v2066, 1
    %v2097 = vrot.slane %v2068, 1
    %v2098 = vsel %vm1938, %v2096, %v2097
    %v2099 = vrot.slane %v2069, 1
    %v2100 = vsel %vm1938, %v2094, %v2099
    %v2101 = vrot.slane %v2070, 1
    %v2102 = vsel %vm1938, %v2097, %v2101
    %s2103 = scalar_lea.vmem [#allocation9], 512
    %v2104 = vld [vmem:[%s2103] sm:$0xff]
    %v2105 = vld [vmem:[%s2103 + $0x8] sm:$0xff]
    %v2106 = vld [vmem:[%s2103 + $0x10] sm:$0xff]
    %v2107 = vld [vmem:[%s2103 + $0x18] sm:$0xff]
    %v2108 = vld [vmem:[%s2103 + $0x20] sm:$0xff]
    %v2109 = vld [vmem:[%s2103 + $0x28] sm:$0xff]
    %v2110 = vld [vmem:[%s2103 + $0x30] sm:$0xff]
    %v2111 = vld [vmem:[%s2103 + $0x38] sm:$0xff]
    %v2112 = vld [vmem:[%s2103 + $0x40] sm:$0xff]
    %v2113 = vld [vmem:[%s2103 + $0x48] sm:$0xff]
    %v2114 = vld [vmem:[%s2103 + $0x50] sm:$0xff]
    %v2115 = vld [vmem:[%s2103 + $0x58] sm:$0xff]
    %v2116 = vld [vmem:[%s2103 + $0x60] sm:$0xff]
    %v2117 = vld [vmem:[%s2103 + $0x68] sm:$0xff]
    %v2118 = vld [vmem:[%s2103 + $0x70] sm:$0xff]
    %v2119 = vld [vmem:[%s2103 + $0x78] sm:$0xff]
    %2120 = vrot.lane.b32.xlu0 %v2085, 120
    %v2121 = vpop.permute.xlu0 %2120
    %2122 = vrot.lane.b32.xlu0 %v2088, 120
    %v2123 = vpop.permute.xlu0 %2122
    %2124 = vrot.lane.b32.xlu0 %v2090, 120
    %v2125 = vpop.permute.xlu0 %2124
    %2126 = vrot.lane.b32.xlu0 %v2092, 120
    %v2127 = vpop.permute.xlu0 %2126
    %2128 = vrot.lane.b32.xlu0 %v2095, 120
    %v2129 = vpop.permute.xlu0 %2128
    %2130 = vrot.lane.b32.xlu0 %v2098, 120
    %v2131 = vpop.permute.xlu0 %2130
    %2132 = vrot.lane.b32.xlu0 %v2100, 120
    %v2133 = vpop.permute.xlu0 %2132
    %2134 = vrot.lane.b32.xlu0 %v2102, 120
    %v2135 = vpop.permute.xlu0 %2134
    %v2136 = vsel %vm1394, %v2121, %v2123
    %v2137 = vsel %vm1394, %v2125, %v2127
    %v2138 = vsel %vm1394, %v2129, %v2131
    %v2139 = vsel %vm1394, %v2133, %v2135
    %2144 = vmatprep.subr.mxu0 0.0
    %2145 = vmatpush1.msra.mxu0 %v2104
    %2146 = vmatprep.subr.mxu0 0.0
    %2147 = vmatpush1.msra.mxu0 %v2105
    %2148 = vmatprep.subr.mxu0 0.0
    %2149 = vmatpush1.msra.mxu0 %v2106
    %2150 = vmatprep.subr.mxu0 0.0
    %2151 = vmatpush1.msra.mxu0 %v2107
    %2152 = vmatprep.subr.mxu0 0.0
    %2153 = vmatpush1.msra.mxu0 %v2108
    %2154 = vmatprep.subr.mxu0 0.0
    %2155 = vmatpush1.msra.mxu0 %v2109
    %2156 = vmatprep.subr.mxu0 0.0
    %2157 = vmatpush1.msra.mxu0 %v2110
    %2158 = vmatprep.subr.mxu0 0.0
    %2159 = vmatpush1.msra.mxu0 %v2111
    %2160 = vmatprep.subr.mxu0 0.0
    %2161 = vmatpush1.msra.mxu0 %v2112
    %2162 = vmatprep.subr.mxu0 0.0
    %2163 = vmatpush1.msra.mxu0 %v2113
    %2164 = vmatprep.subr.mxu0 0.0
    %2165 = vmatpush1.msra.mxu0 %v2114
    %2166 = vmatprep.subr.mxu0 0.0
    %2167 = vmatpush1.msra.mxu0 %v2115
    %2168 = vmatprep.subr.mxu0 0.0
    %2169 = vmatpush1.msra.mxu0 %v2116
    %2170 = vmatprep.subr.mxu0 0.0
    %2171 = vmatpush1.msra.mxu0 %v2117
    %2172 = vmatprep.subr.mxu0 0.0
    %2173 = vmatpush1.msra.mxu0 %v2118
    %2174 = vmatprep.subr.mxu0 0.0
    %2175 = vmatpush1.msra.mxu0 %v2119
    %2176 = vmatprep.subr.mxu0 0.0
    %2177 = vmatpush1.msra.mxu0 0.0
    %2178 = vmatprep.subr.mxu0 0.0
    %2179 = vmatpush1.msra.mxu0 0.0
    %2180 = vmatprep.subr.mxu0 0.0
    %2181 = vmatpush1.msra.mxu0 0.0
    %2182 = vmatprep.subr.mxu0 0.0
    %2183 = vmatpush1.msra.mxu0 0.0
    %2184 = vmatprep.subr.mxu0 0.0
    %2185 = vmatpush1.msra.mxu0 0.0
    %2186 = vmatprep.subr.mxu0 0.0
    %2187 = vmatpush1.msra.mxu0 0.0
    %2188 = vmatprep.subr.mxu0 0.0
    %2189 = vmatpush1.msra.mxu0 0.0
    %2190 = vmatprep.subr.mxu0 0.0
    %2191 = vmatpush1.msra.mxu0 0.0
    %2192 = vmatprep.subr.mxu0 0.0
    %2193 = vmatpush1.msra.mxu0 0.0
    %2194 = vmatprep.subr.mxu0 0.0
    %2195 = vmatpush1.msra.mxu0 0.0
    %2196 = vmatprep.subr.mxu0 0.0
    %2197 = vmatpush1.msra.mxu0 0.0
    %2198 = vmatprep.subr.mxu0 0.0
    %2199 = vmatpush1.msra.mxu0 0.0
    %2200 = vmatprep.subr.mxu0 0.0
    %2201 = vmatpush1.msra.mxu0 0.0
    %2202 = vmatprep.subr.mxu0 0.0
    %2203 = vmatpush1.msra.mxu0 0.0
    %2204 = vmatprep.subr.mxu0 0.0
    %2205 = vmatpush1.msra.mxu0 0.0
    %2206 = vmatprep.subr.mxu0 0.0
    %2207 = vmatpush1.msra.mxu0 0.0
    %2208 = vmatprep.mubr.f32.mxu0 0.0
    %2209 = vmatmul.mubr.f32.gmra.mrb[0].mxu0 %v2136
    %v2210 = vpop.f32.mrb[0].mxu0
    %v2211 = vadd.f32 0.0, %v2210
    %v2212 = vpop.f32.mrb[0].mxu0
    %2213 = vmatprep.mubr.f32.mxu0 0.0
    %2214 = vmatmul.mubr.f32.gmra.mrb[0].mxu0 %v2137
    %v2215 = vpop.f32.mrb[0].mxu0
    %v2216 = vadd.f32 0.0, %v2215
    %v2217 = vpop.f32.mrb[0].mxu0
    %2218 = vmatprep.mubr.f32.mxu0 0.0
    %2219 = vmatmul.mubr.f32.gmra.mrb[0].mxu0 %v2138
    %v2220 = vpop.f32.mrb[0].mxu0
    %v2221 = vadd.f32 0.0, %v2220
    %v2222 = vpop.f32.mrb[0].mxu0
    %2223 = vmatprep.mubr.f32.mxu0 0.0
    %2224 = vmatmul.mubr.f32.gmra.mrb[0].mxu0 %v2139
    %v2225 = vpop.f32.mrb[0].mxu0
    %v2226 = vadd.f32 0.0, %v2225
    %v2227 = vpop.f32.mrb[0].mxu0
    %2228 = vdwg.mxu0
    %v2229 = vadd.f32 %v2055, %v2211
    %v2230 = vadd.f32 %v2056, %v2216
    %v2231 = vadd.f32 %v2057, %v2221
    %v2232 = vadd.f32 %v2058, %v2226
    %s2233 = scalar_lea.vmem [#allocation9], 640
    %v2234 = vld [vmem:[%s2233] sm:$0xff]
    %v2235 = vld [vmem:[%s2233 + $0x8] sm:$0xff]
    %v2236 = vld [vmem:[%s2233 + $0x10] sm:$0xff]
    %v2237 = vld [vmem:[%s2233 + $0x18] sm:$0xff]
    %v2238 = vld [vmem:[%s2233 + $0x20] sm:$0xff]
    %v2239 = vld [vmem:[%s2233 + $0x28] sm:$0xff]
    %v2240 = vld [vmem:[%s2233 + $0x30] sm:$0xff]
    %v2241 = vld [vmem:[%s2233 + $0x38] sm:$0xff]
    %v2242 = vld [vmem:[%s2233 + $0x40] sm:$0xff]
    %v2243 = vld [vmem:[%s2233 + $0x48] sm:$0xff]
    %v2244 = vld [vmem:[%s2233 + $0x50] sm:$0xff]
    %v2245 = vld [vmem:[%s2233 + $0x58] sm:$0xff]
    %v2246 = vld [vmem:[%s2233 + $0x60] sm:$0xff]
    %v2247 = vld [vmem:[%s2233 + $0x68] sm:$0xff]
    %v2248 = vld [vmem:[%s2233 + $0x70] sm:$0xff]
    %v2249 = vld [vmem:[%s2233 + $0x78] sm:$0xff]
    %2250 = vrot.lane.b32.xlu0 %v2085, 112
    %v2251 = vpop.permute.xlu0 %2250
    %2252 = vrot.lane.b32.xlu0 %v2088, 112
    %v2253 = vpop.permute.xlu0 %2252
    %2254 = vrot.lane.b32.xlu0 %v2090, 112
    %v2255 = vpop.permute.xlu0 %2254
    %2256 = vrot.lane.b32.xlu0 %v2092, 112
    %v2257 = vpop.permute.xlu0 %2256
    %2258 = vrot.lane.b32.xlu0 %v2095, 112
    %v2259 = vpop.permute.xlu0 %2258
    %2260 = vrot.lane.b32.xlu0 %v2098, 112
    %v2261 = vpop.permute.xlu0 %2260
    %2262 = vrot.lane.b32.xlu0 %v2100, 112
    %v2263 = vpop.permute.xlu0 %2262
    %2264 = vrot.lane.b32.xlu0 %v2102, 112
    %v2265 = vpop.permute.xlu0 %2264
    %v2266 = vsel %vm1392, %v2251, %v2253
    %v2267 = vsel %vm1392, %v2255, %v2257
    %v2268 = vsel %vm1392, %v2259, %v2261
    %v2269 = vsel %vm1392, %v2263, %v2265
    %2274 = vmatprep.subr.mxu0 0.0
    %2275 = vmatpush1.msra.mxu0 %v2234
    %2276 = vmatprep.subr.mxu0 0.0
    %2277 = vmatpush1.msra.mxu0 %v2235
    %2278 = vmatprep.subr.mxu0 0.0
    %2279 = vmatpush1.msra.mxu0 %v2236
    %2280 = vmatprep.subr.mxu0 0.0
    %2281 = vmatpush1.msra.mxu0 %v2237
    %2282 = vmatprep.subr.mxu0 0.0
    %2283 = vmatpush1.msra.mxu0 %v2238
    %2284 = vmatprep.subr.mxu0 0.0
    %2285 = vmatpush1.msra.mxu0 %v2239
    %2286 = vmatprep.subr.mxu0 0.0
    %2287 = vmatpush1.msra.mxu0 %v2240
    %2288 = vmatprep.subr.mxu0 0.0
    %2289 = vmatpush1.msra.mxu0 %v2241
    %2290 = vmatprep.subr.mxu0 0.0
    %2291 = vmatpush1.msra.mxu0 %v2242
    %2292 = vmatprep.subr.mxu0 0.0
    %2293 = vmatpush1.msra.mxu0 %v2243
    %2294 = vmatprep.subr.mxu0 0.0
    %2295 = vmatpush1.msra.mxu0 %v2244
    %2296 = vmatprep.subr.mxu0 0.0
    %2297 = vmatpush1.msra.mxu0 %v2245
    %2298 = vmatprep.subr.mxu0 0.0
    %2299 = vmatpush1.msra.mxu0 %v2246
    %2300 = vmatprep.subr.mxu0 0.0
    %2301 = vmatpush1.msra.mxu0 %v2247
    %2302 = vmatprep.subr.mxu0 0.0
    %2303 = vmatpush1.msra.mxu0 %v2248
    %2304 = vmatprep.subr.mxu0 0.0
    %2305 = vmatpush1.msra.mxu0 %v2249
    %2306 = vmatprep.subr.mxu0 0.0
    %2307 = vmatpush1.msra.mxu0 0.0
    %2308 = vmatprep.subr.mxu0 0.0
    %2309 = vmatpush1.msra.mxu0 0.0
    %2310 = vmatprep.subr.mxu0 0.0
    %2311 = vmatpush1.msra.mxu0 0.0
    %2312 = vmatprep.subr.mxu0 0.0
    %2313 = vmatpush1.msra.mxu0 0.0
    %2314 = vmatprep.subr.mxu0 0.0
    %2315 = vmatpush1.msra.mxu0 0.0
    %2316 = vmatprep.subr.mxu0 0.0
    %2317 = vmatpush1.msra.mxu0 0.0
    %2318 = vmatprep.subr.mxu0 0.0
    %2319 = vmatpush1.msra.mxu0 0.0
    %2320 = vmatprep.subr.mxu0 0.0
    %2321 = vmatpush1.msra.mxu0 0.0
    %2322 = vmatprep.subr.mxu0 0.0
    %2323 = vmatpush1.msra.mxu0 0.0
    %2324 = vmatprep.subr.mxu0 0.0
    %2325 = vmatpush1.msra.mxu0 0.0
    %2326 = vmatprep.subr.mxu0 0.0
    %2327 = vmatpush1.msra.mxu0 0.0
    %2328 = vmatprep.subr.mxu0 0.0
    %2329 = vmatpush1.msra.mxu0 0.0
    %2330 = vmatprep.subr.mxu0 0.0
    %2331 = vmatpush1.msra.mxu0 0.0
    %2332 = vmatprep.subr.mxu0 0.0
    %2333 = vmatpush1.msra.mxu0 0.0
    %2334 = vmatprep.subr.mxu0 0.0
    %2335 = vmatpush1.msra.mxu0 0.0
    %2336 = vmatprep.subr.mxu0 0.0
    %2337 = vmatpush1.msra.mxu0 0.0
    %2338 = vmatprep.mubr.f32.mxu0 0.0
    %2339 = vmatmul.mubr.f32.gmra.mrb[0].mxu0 %v2266
    %v2340 = vpop.f32.mrb[0].mxu0
    %v2341 = vadd.f32 0.0, %v2340
    %v2342 = vpop.f32.mrb[0].mxu0
    %2343 = vmatprep.mubr.f32.mxu0 0.0
    %2344 = vmatmul.mubr.f32.gmra.mrb[0].mxu0 %v2267
    %v2345 = vpop.f32.mrb[0].mxu0
    %v2346 = vadd.f32 0.0, %v2345
    %v2347 = vpop.f32.mrb[0].mxu0
    %2348 = vmatprep.mubr.f32.mxu0 0.0
    %2349 = vmatmul.mubr.f32.gmra.mrb[0].mxu0 %v2268
    %v2350 = vpop.f32.mrb[0].mxu0
    %v2351 = vadd.f32 0.0, %v2350
    %v2352 = vpop.f32.mrb[0].mxu0
    %2353 = vmatprep.mubr.f32.mxu0 0.0
    %2354 = vmatmul.mubr.f32.gmra.mrb[0].mxu0 %v2269
    %v2355 = vpop.f32.mrb[0].mxu0
    %v2356 = vadd.f32 0.0, %v2355
    %v2357 = vpop.f32.mrb[0].mxu0
    %2358 = vdwg.mxu0
    %v2359 = vadd.f32 %v2229, %v2341
    %v2360 = vadd.f32 %v2230, %v2346
    %v2361 = vadd.f32 %v2231, %v2351
    %v2362 = vadd.f32 %v2232, %v2356
    %v2363 = vld [vmem:[#allocation3] sm:$0xfc]
    %v2364 = vld [vmem:[#allocation3 + $0x20] sm:$0x3]
    %v2365 = vld [vmem:[#allocation3 + $0x30] sm:$0xfc]
    %v2366 = vld [vmem:[#allocation3 + $0x50] sm:$0x3]
    %vm2371 = vcmask 1045504
    %v2372 = vrot.slane %v2363, 2
    %v2373 = vrot.slane %v1927, 2
    %v2374 = vsel %vm2371, %v2372, %v2373
    %v2375 = vrot.slane %v2364, 2
    %v2376 = vsel %vm2371, %v2373, %v2375
    %v2377 = vrot.slane %v2365, 2
    %v2378 = vrot.slane %v1930, 2
    %v2379 = vsel %vm2371, %v2377, %v2378
    %v2380 = vrot.slane %v2366, 2
    %v2381 = vsel %vm2371, %v2378, %v2380
    %s2386 = scalar_lea.vmem [#allocation9], 768
    %v2387 = vld [vmem:[%s2386] sm:$0xff]
    %v2388 = vld [vmem:[%s2386 + $0x8] sm:$0xff]
    %v2389 = vld [vmem:[%s2386 + $0x10] sm:$0xff]
    %v2390 = vld [vmem:[%s2386 + $0x18] sm:$0xff]
    %v2391 = vld [vmem:[%s2386 + $0x20] sm:$0xff]
    %v2392 = vld [vmem:[%s2386 + $0x28] sm:$0xff]
    %v2393 = vld [vmem:[%s2386 + $0x30] sm:$0xff]
    %v2394 = vld [vmem:[%s2386 + $0x38] sm:$0xff]
    %v2395 = vld [vmem:[%s2386 + $0x40] sm:$0xff]
    %v2396 = vld [vmem:[%s2386 + $0x48] sm:$0xff]
    %v2397 = vld [vmem:[%s2386 + $0x50] sm:$0xff]
    %v2398 = vld [vmem:[%s2386 + $0x58] sm:$0xff]
    %v2399 = vld [vmem:[%s2386 + $0x60] sm:$0xff]
    %v2400 = vld [vmem:[%s2386 + $0x68] sm:$0xff]
    %v2401 = vld [vmem:[%s2386 + $0x70] sm:$0xff]
    %v2402 = vld [vmem:[%s2386 + $0x78] sm:$0xff]
    %2403 = vmatprep.subr.mxu0 0.0
    %2404 = vmatpush1.msra.mxu0 %v2387
    %2405 = vmatprep.subr.mxu0 0.0
    %2406 = vmatpush1.msra.mxu0 %v2388
    %2407 = vmatprep.subr.mxu0 0.0
    %2408 = vmatpush1.msra.mxu0 %v2389
    %2409 = vmatprep.subr.mxu0 0.0
    %2410 = vmatpush1.msra.mxu0 %v2390
    %2411 = vmatprep.subr.mxu0 0.0
    %2412 = vmatpush1.msra.mxu0 %v2391
    %2413 = vmatprep.subr.mxu0 0.0
    %2414 = vmatpush1.msra.mxu0 %v2392
    %2415 = vmatprep.subr.mxu0 0.0
    %2416 = vmatpush1.msra.mxu0 %v2393
    %2417 = vmatprep.subr.mxu0 0.0
    %2418 = vmatpush1.msra.mxu0 %v2394
    %2419 = vmatprep.subr.mxu0 0.0
    %2420 = vmatpush1.msra.mxu0 %v2395
    %2421 = vmatprep.subr.mxu0 0.0
    %2422 = vmatpush1.msra.mxu0 %v2396
    %2423 = vmatprep.subr.mxu0 0.0
    %2424 = vmatpush1.msra.mxu0 %v2397
    %2425 = vmatprep.subr.mxu0 0.0
    %2426 = vmatpush1.msra.mxu0 %v2398
    %2427 = vmatprep.subr.mxu0 0.0
    %2428 = vmatpush1.msra.mxu0 %v2399
    %2429 = vmatprep.subr.mxu0 0.0
    %2430 = vmatpush1.msra.mxu0 %v2400
    %2431 = vmatprep.subr.mxu0 0.0
    %2432 = vmatpush1.msra.mxu0 %v2401
    %2433 = vmatprep.subr.mxu0 0.0
    %2434 = vmatpush1.msra.mxu0 %v2402
    %2435 = vmatprep.subr.mxu0 0.0
    %2436 = vmatpush1.msra.mxu0 0.0
    %2437 = vmatprep.subr.mxu0 0.0
    %2438 = vmatpush1.msra.mxu0 0.0
    %2439 = vmatprep.subr.mxu0 0.0
    %2440 = vmatpush1.msra.mxu0 0.0
    %2441 = vmatprep.subr.mxu0 0.0
    %2442 = vmatpush1.msra.mxu0 0.0
    %2443 = vmatprep.subr.mxu0 0.0
    %2444 = vmatpush1.msra.mxu0 0.0
    %2445 = vmatprep.subr.mxu0 0.0
    %2446 = vmatpush1.msra.mxu0 0.0
    %2447 = vmatprep.subr.mxu0 0.0
    %2448 = vmatpush1.msra.mxu0 0.0
    %2449 = vmatprep.subr.mxu0 0.0
    %2450 = vmatpush1.msra.mxu0 0.0
    %2451 = vmatprep.subr.mxu0 0.0
    %2452 = vmatpush1.msra.mxu0 0.0
    %2453 = vmatprep.subr.mxu0 0.0
    %2454 = vmatpush1.msra.mxu0 0.0
    %2455 = vmatprep.subr.mxu0 0.0
    %2456 = vmatpush1.msra.mxu0 0.0
    %2457 = vmatprep.subr.mxu0 0.0
    %2458 = vmatpush1.msra.mxu0 0.0
    %2459 = vmatprep.subr.mxu0 0.0
    %2460 = vmatpush1.msra.mxu0 0.0
    %2461 = vmatprep.subr.mxu0 0.0
    %2462 = vmatpush1.msra.mxu0 0.0
    %2463 = vmatprep.subr.mxu0 0.0
    %2464 = vmatpush1.msra.mxu0 0.0
    %2465 = vmatprep.subr.mxu0 0.0
    %2466 = vmatpush1.msra.mxu0 0.0
    %2467 = vmatprep.mubr.f32.mxu0 0.0
    %2468 = vmatmul.mubr.f32.gmra.mrb[0].mxu0 %v2374
    %v2469 = vpop.f32.mrb[0].mxu0
    %v2470 = vadd.f32 0.0, %v2469
    %v2471 = vpop.f32.mrb[0].mxu0
    %2472 = vmatprep.mubr.f32.mxu0 0.0
    %2473 = vmatmul.mubr.f32.gmra.mrb[0].mxu0 %v2376
    %v2474 = vpop.f32.mrb[0].mxu0
    %v2475 = vadd.f32 0.0, %v2474
    %v2476 = vpop.f32.mrb[0].mxu0
    %2477 = vmatprep.mubr.f32.mxu0 0.0
    %2478 = vmatmul.mubr.f32.gmra.mrb[0].mxu0 %v2379
    %v2479 = vpop.f32.mrb[0].mxu0
    %v2480 = vadd.f32 0.0, %v2479
    %v2481 = vpop.f32.mrb[0].mxu0
    %2482 = vmatprep.mubr.f32.mxu0 0.0
    %2483 = vmatmul.mubr.f32.gmra.mrb[0].mxu0 %v2381
    %v2484 = vpop.f32.mrb[0].mxu0
    %v2485 = vadd.f32 0.0, %v2484
    %v2486 = vpop.f32.mrb[0].mxu0
    %2487 = vdwg.mxu0
    %v2488 = vadd.f32 %v2359, %v2470
    %v2489 = vadd.f32 %v2360, %v2475
    %v2490 = vadd.f32 %v2361, %v2480
    %v2491 = vadd.f32 %v2362, %v2485
    %v2492 = vld [vmem:[#allocation3] sm:$0xfc]
    %v2493 = vld [vmem:[#allocation3 + $0x8] sm:$0xfc]
    %v2494 = vld [vmem:[#allocation3 + $0x20] sm:$0x3]
    %v2495 = vld [vmem:[#allocation3 + $0x28] sm:$0x3]
    %v2496 = vld [vmem:[#allocation3 + $0x30] sm:$0xfc]
    %v2497 = vld [vmem:[#allocation3 + $0x38] sm:$0xfc]
    %v2498 = vld [vmem:[#allocation3 + $0x50] sm:$0x3]
    %v2499 = vld [vmem:[#allocation3 + $0x58] sm:$0x3]
    %v2508 = vrot.slane %v2492, 2
    %v2509 = vrot.slane %v2061, 2
    %v2510 = vsel %vm2371, %v2508, %v2509
    %v2511 = vrot.slane %v2493, 2
    %v2512 = vrot.slane %v2062, 2
    %v2513 = vsel %vm2371, %v2511, %v2512
    %v2514 = vrot.slane %v2494, 2
    %v2515 = vsel %vm2371, %v2509, %v2514
    %v2516 = vrot.slane %v2495, 2
    %v2517 = vsel %vm2371, %v2512, %v2516
    %v2518 = vrot.slane %v2496, 2
    %v2519 = vrot.slane %v2067, 2
    %v2520 = vsel %vm2371, %v2518, %v2519
    %v2521 = vrot.slane %v2497, 2
    %v2522 = vrot.slane %v2068, 2
    %v2523 = vsel %vm2371, %v2521, %v2522
    %v2524 = vrot.slane %v2498, 2
    %v2525 = vsel %vm2371, %v2519, %v2524
    %v2526 = vrot.slane %v2499, 2
    %v2527 = vsel %vm2371, %v2522, %v2526
    %s2528 = scalar_lea.vmem [#allocation9], 896
    %v2529 = vld [vmem:[%s2528] sm:$0xff]
    %v2530 = vld [vmem:[%s2528 + $0x8] sm:$0xff]
    %v2531 = vld [vmem:[%s2528 + $0x10] sm:$0xff]
    %v2532 = vld [vmem:[%s2528 + $0x18] sm:$0xff]
    %v2533 = vld [vmem:[%s2528 + $0x20] sm:$0xff]
    %v2534 = vld [vmem:[%s2528 + $0x28] sm:$0xff]
    %v2535 = vld [vmem:[%s2528 + $0x30] sm:$0xff]
    %v2536 = vld [vmem:[%s2528 + $0x38] sm:$0xff]
    %v2537 = vld [vmem:[%s2528 + $0x40] sm:$0xff]
    %v2538 = vld [vmem:[%s2528 + $0x48] sm:$0xff]
    %v2539 = vld [vmem:[%s2528 + $0x50] sm:$0xff]
    %v2540 = vld [vmem:[%s2528 + $0x58] sm:$0xff]
    %v2541 = vld [vmem:[%s2528 + $0x60] sm:$0xff]
    %v2542 = vld [vmem:[%s2528 + $0x68] sm:$0xff]
    %v2543 = vld [vmem:[%s2528 + $0x70] sm:$0xff]
    %v2544 = vld [vmem:[%s2528 + $0x78] sm:$0xff]
    %2545 = vrot.lane.b32.xlu0 %v2510, 120
    %v2546 = vpop.permute.xlu0 %2545
    %2547 = vrot.lane.b32.xlu0 %v2513, 120
    %v2548 = vpop.permute.xlu0 %2547
    %2549 = vrot.lane.b32.xlu0 %v2515, 120
    %v2550 = vpop.permute.xlu0 %2549
    %2551 = vrot.lane.b32.xlu0 %v2517, 120
    %v2552 = vpop.permute.xlu0 %2551
    %2553 = vrot.lane.b32.xlu0 %v2520, 120
    %v2554 = vpop.permute.xlu0 %2553
    %2555 = vrot.lane.b32.xlu0 %v2523, 120
    %v2556 = vpop.permute.xlu0 %2555
    %2557 = vrot.lane.b32.xlu0 %v2525, 120
    %v2558 = vpop.permute.xlu0 %2557
    %2559 = vrot.lane.b32.xlu0 %v2527, 120
    %v2560 = vpop.permute.xlu0 %2559
    %v2561 = vsel %vm1394, %v2546, %v2548
    %v2562 = vsel %vm1394, %v2550, %v2552
    %v2563 = vsel %vm1394, %v2554, %v2556
    %v2564 = vsel %vm1394, %v2558, %v2560
    %2569 = vmatprep.subr.mxu0 0.0
    %2570 = vmatpush1.msra.mxu0 %v2529
    %2571 = vmatprep.subr.mxu0 0.0
    %2572 = vmatpush1.msra.mxu0 %v2530
    %2573 = vmatprep.subr.mxu0 0.0
    %2574 = vmatpush1.msra.mxu0 %v2531
    %2575 = vmatprep.subr.mxu0 0.0
    %2576 = vmatpush1.msra.mxu0 %v2532
    %2577 = vmatprep.subr.mxu0 0.0
    %2578 = vmatpush1.msra.mxu0 %v2533
    %2579 = vmatprep.subr.mxu0 0.0
    %2580 = vmatpush1.msra.mxu0 %v2534
    %2581 = vmatprep.subr.mxu0 0.0
    %2582 = vmatpush1.msra.mxu0 %v2535
    %2583 = vmatprep.subr.mxu0 0.0
    %2584 = vmatpush1.msra.mxu0 %v2536
    %2585 = vmatprep.subr.mxu0 0.0
    %2586 = vmatpush1.msra.mxu0 %v2537
    %2587 = vmatprep.subr.mxu0 0.0
    %2588 = vmatpush1.msra.mxu0 %v2538
    %2589 = vmatprep.subr.mxu0 0.0
    %2590 = vmatpush1.msra.mxu0 %v2539
    %2591 = vmatprep.subr.mxu0 0.0
    %2592 = vmatpush1.msra.mxu0 %v2540
    %2593 = vmatprep.subr.mxu0 0.0
    %2594 = vmatpush1.msra.mxu0 %v2541
    %2595 = vmatprep.subr.mxu0 0.0
    %2596 = vmatpush1.msra.mxu0 %v2542
    %2597 = vmatprep.subr.mxu0 0.0
    %2598 = vmatpush1.msra.mxu0 %v2543
    %2599 = vmatprep.subr.mxu0 0.0
    %2600 = vmatpush1.msra.mxu0 %v2544
    %2601 = vmatprep.subr.mxu0 0.0
    %2602 = vmatpush1.msra.mxu0 0.0
    %2603 = vmatprep.subr.mxu0 0.0
    %2604 = vmatpush1.msra.mxu0 0.0
    %2605 = vmatprep.subr.mxu0 0.0
    %2606 = vmatpush1.msra.mxu0 0.0
    %2607 = vmatprep.subr.mxu0 0.0
    %2608 = vmatpush1.msra.mxu0 0.0
    %2609 = vmatprep.subr.mxu0 0.0
    %2610 = vmatpush1.msra.mxu0 0.0
    %2611 = vmatprep.subr.mxu0 0.0
    %2612 = vmatpush1.msra.mxu0 0.0
    %2613 = vmatprep.subr.mxu0 0.0
    %2614 = vmatpush1.msra.mxu0 0.0
    %2615 = vmatprep.subr.mxu0 0.0
    %2616 = vmatpush1.msra.mxu0 0.0
    %2617 = vmatprep.subr.mxu0 0.0
    %2618 = vmatpush1.msra.mxu0 0.0
    %2619 = vmatprep.subr.mxu0 0.0
    %2620 = vmatpush1.msra.mxu0 0.0
    %2621 = vmatprep.subr.mxu0 0.0
    %2622 = vmatpush1.msra.mxu0 0.0
    %2623 = vmatprep.subr.mxu0 0.0
    %2624 = vmatpush1.msra.mxu0 0.0
    %2625 = vmatprep.subr.mxu0 0.0
    %2626 = vmatpush1.msra.mxu0 0.0
    %2627 = vmatprep.subr.mxu0 0.0
    %2628 = vmatpush1.msra.mxu0 0.0
    %2629 = vmatprep.subr.mxu0 0.0
    %2630 = vmatpush1.msra.mxu0 0.0
    %2631 = vmatprep.subr.mxu0 0.0
    %2632 = vmatpush1.msra.mxu0 0.0
    %2633 = vmatprep.mubr.f32.mxu0 0.0
    %2634 = vmatmul.mubr.f32.gmra.mrb[0].mxu0 %v2561
    %v2635 = vpop.f32.mrb[0].mxu0
    %v2636 = vadd.f32 0.0, %v2635
    %v2637 = vpop.f32.mrb[0].mxu0
    %2638 = vmatprep.mubr.f32.mxu0 0.0
    %2639 = vmatmul.mubr.f32.gmra.mrb[0].mxu0 %v2562
    %v2640 = vpop.f32.mrb[0].mxu0
    %v2641 = vadd.f32 0.0, %v2640
    %v2642 = vpop.f32.mrb[0].mxu0
    %2643 = vmatprep.mubr.f32.mxu0 0.0
    %2644 = vmatmul.mubr.f32.gmra.mrb[0].mxu0 %v2563
    %v2645 = vpop.f32.mrb[0].mxu0
    %v2646 = vadd.f32 0.0, %v2645
    %v2647 = vpop.f32.mrb[0].mxu0
    %2648 = vmatprep.mubr.f32.mxu0 0.0
    %2649 = vmatmul.mubr.f32.gmra.mrb[0].mxu0 %v2564
    %v2650 = vpop.f32.mrb[0].mxu0
    %v2651 = vadd.f32 0.0, %v2650
    %v2652 = vpop.f32.mrb[0].mxu0
    %2653 = vdwg.mxu0
    %v2654 = vadd.f32 %v2488, %v2636
    %v2655 = vadd.f32 %v2489, %v2641
    %v2656 = vadd.f32 %v2490, %v2646
    %v2657 = vadd.f32 %v2491, %v2651
    %s2658 = scalar_lea.vmem [#allocation9], 1024
    %v2659 = vld [vmem:[%s2658] sm:$0xff]
    %v2660 = vld [vmem:[%s2658 + $0x8] sm:$0xff]
    %v2661 = vld [vmem:[%s2658 + $0x10] sm:$0xff]
    %v2662 = vld [vmem:[%s2658 + $0x18] sm:$0xff]
    %v2663 = vld [vmem:[%s2658 + $0x20] sm:$0xff]
    %v2664 = vld [vmem:[%s2658 + $0x28] sm:$0xff]
    %v2665 = vld [vmem:[%s2658 + $0x30] sm:$0xff]
    %v2666 = vld [vmem:[%s2658 + $0x38] sm:$0xff]
    %v2667 = vld [vmem:[%s2658 + $0x40] sm:$0xff]
    %v2668 = vld [vmem:[%s2658 + $0x48] sm:$0xff]
    %v2669 = vld [vmem:[%s2658 + $0x50] sm:$0xff]
    %v2670 = vld [vmem:[%s2658 + $0x58] sm:$0xff]
    %v2671 = vld [vmem:[%s2658 + $0x60] sm:$0xff]
    %v2672 = vld [vmem:[%s2658 + $0x68] sm:$0xff]
    %v2673 = vld [vmem:[%s2658 + $0x70] sm:$0xff]
    %v2674 = vld [vmem:[%s2658 + $0x78] sm:$0xff]
    %2675 = vrot.lane.b32.xlu0 %v2510, 112
    %v2676 = vpop.permute.xlu0 %2675
    %2677 = vrot.lane.b32.xlu0 %v2513, 112
    %v2678 = vpop.permute.xlu0 %2677
    %2679 = vrot.lane.b32.xlu0 %v2515, 112
    %v2680 = vpop.permute.xlu0 %2679
    %2681 = vrot.lane.b32.xlu0 %v2517, 112
    %v2682 = vpop.permute.xlu0 %2681
    %2683 = vrot.lane.b32.xlu0 %v2520, 112
    %v2684 = vpop.permute.xlu0 %2683
    %2685 = vrot.lane.b32.xlu0 %v2523, 112
    %v2686 = vpop.permute.xlu0 %2685
    %2687 = vrot.lane.b32.xlu0 %v2525, 112
    %v2688 = vpop.permute.xlu0 %2687
    %2689 = vrot.lane.b32.xlu0 %v2527, 112
    %v2690 = vpop.permute.xlu0 %2689
    %v2691 = vsel %vm1392, %v2676, %v2678
    %v2692 = vsel %vm1392, %v2680, %v2682
    %v2693 = vsel %vm1392, %v2684, %v2686
    %v2694 = vsel %vm1392, %v2688, %v2690
    %2699 = vmatprep.subr.mxu0 0.0
    %2700 = vmatpush1.msra.mxu0 %v2659
    %2701 = vmatprep.subr.mxu0 0.0
    %2702 = vmatpush1.msra.mxu0 %v2660
    %2703 = vmatprep.subr.mxu0 0.0
    %2704 = vmatpush1.msra.mxu0 %v2661
    %2705 = vmatprep.subr.mxu0 0.0
    %2706 = vmatpush1.msra.mxu0 %v2662
    %2707 = vmatprep.subr.mxu0 0.0
    %2708 = vmatpush1.msra.mxu0 %v2663
    %2709 = vmatprep.subr.mxu0 0.0
    %2710 = vmatpush1.msra.mxu0 %v2664
    %2711 = vmatprep.subr.mxu0 0.0
    %2712 = vmatpush1.msra.mxu0 %v2665
    %2713 = vmatprep.subr.mxu0 0.0
    %2714 = vmatpush1.msra.mxu0 %v2666
    %2715 = vmatprep.subr.mxu0 0.0
    %2716 = vmatpush1.msra.mxu0 %v2667
    %2717 = vmatprep.subr.mxu0 0.0
    %2718 = vmatpush1.msra.mxu0 %v2668
    %2719 = vmatprep.subr.mxu0 0.0
    %2720 = vmatpush1.msra.mxu0 %v2669
    %2721 = vmatprep.subr.mxu0 0.0
    %2722 = vmatpush1.msra.mxu0 %v2670
    %2723 = vmatprep.subr.mxu0 0.0
    %2724 = vmatpush1.msra.mxu0 %v2671
    %2725 = vmatprep.subr.mxu0 0.0
    %2726 = vmatpush1.msra.mxu0 %v2672
    %2727 = vmatprep.subr.mxu0 0.0
    %2728 = vmatpush1.msra.mxu0 %v2673
    %2729 = vmatprep.subr.mxu0 0.0
    %2730 = vmatpush1.msra.mxu0 %v2674
    %2731 = vmatprep.subr.mxu0 0.0
    %2732 = vmatpush1.msra.mxu0 0.0
    %2733 = vmatprep.subr.mxu0 0.0
    %2734 = vmatpush1.msra.mxu0 0.0
    %2735 = vmatprep.subr.mxu0 0.0
    %2736 = vmatpush1.msra.mxu0 0.0
    %2737 = vmatprep.subr.mxu0 0.0
    %2738 = vmatpush1.msra.mxu0 0.0
    %2739 = vmatprep.subr.mxu0 0.0
    %2740 = vmatpush1.msra.mxu0 0.0
    %2741 = vmatprep.subr.mxu0 0.0
    %2742 = vmatpush1.msra.mxu0 0.0
    %2743 = vmatprep.subr.mxu0 0.0
    %2744 = vmatpush1.msra.mxu0 0.0
    %2745 = vmatprep.subr.mxu0 0.0
    %2746 = vmatpush1.msra.mxu0 0.0
    %2747 = vmatprep.subr.mxu0 0.0
    %2748 = vmatpush1.msra.mxu0 0.0
    %2749 = vmatprep.subr.mxu0 0.0
    %2750 = vmatpush1.msra.mxu0 0.0
    %2751 = vmatprep.subr.mxu0 0.0
    %2752 = vmatpush1.msra.mxu0 0.0
    %2753 = vmatprep.subr.mxu0 0.0
    %2754 = vmatpush1.msra.mxu0 0.0
    %2755 = vmatprep.subr.mxu0 0.0
    %2756 = vmatpush1.msra.mxu0 0.0
    %2757 = vmatprep.subr.mxu0 0.0
    %2758 = vmatpush1.msra.mxu0 0.0
    %2759 = vmatprep.subr.mxu0 0.0
    %2760 = vmatpush1.msra.mxu0 0.0
    %2761 = vmatprep.subr.mxu0 0.0
    %2762 = vmatpush1.msra.mxu0 0.0
    %2763 = vmatprep.mubr.f32.mxu0 0.0
    %2764 = vmatmul.mubr.f32.gmra.mrb[0].mxu0 %v2691
    %v2765 = vpop.f32.mrb[0].mxu0
    %v2766 = vadd.f32 0.0, %v2765
    %v2767 = vpop.f32.mrb[0].mxu0
    %2768 = vmatprep.mubr.f32.mxu0 0.0
    %2769 = vmatmul.mubr.f32.gmra.mrb[0].mxu0 %v2692
    %v2770 = vpop.f32.mrb[0].mxu0
    %v2771 = vadd.f32 0.0, %v2770
    %v2772 = vpop.f32.mrb[0].mxu0
    %2773 = vmatprep.mubr.f32.mxu0 0.0
    %2774 = vmatmul.mubr.f32.gmra.mrb[0].mxu0 %v2693
    %v2775 = vpop.f32.mrb[0].mxu0
    %v2776 = vadd.f32 0.0, %v2775
    %v2777 = vpop.f32.mrb[0].mxu0
    %2778 = vmatprep.mubr.f32.mxu0 0.0
    %2779 = vmatmul.mubr.f32.gmra.mrb[0].mxu0 %v2694
    %v2780 = vpop.f32.mrb[0].mxu0
    %v2781 = vadd.f32 0.0, %v2780
    %v2782 = vpop.f32.mrb[0].mxu0
    %2783 = vdwg.mxu0
    %v2784 = vadd.f32 %v2654, %v2766
    %v2785 = vadd.f32 %v2655, %v2771
    %v2786 = vadd.f32 %v2656, %v2776
    %v2787 = vadd.f32 %v2657, %v2781
    %v2788 = vld [vmem:[%s6] sm:$0x1]
    %v2790 = vlaneseq
    %v2791 = vshrl.u32 %v2790, 7
    %v2792 = vsub.s32 0, %v2791
    %v2793 = vrot.slane %v2788, %v2792
    %v2795 = vadd.f32 %v2784, %v2793
    %v2796 = vadd.f32 %v2785, %v2793
    %v2797 = vadd.f32 %v2786, %v2793
    %v2798 = vadd.f32 %v2787, %v2793
    %vm2799 = vcmp.gt.f32.partialorder %v2795, 0.0
    %vm2800 = vcmp.gt.f32.partialorder %v2796, 0.0
    %vm2801 = vcmp.gt.f32.partialorder %v2797, 0.0
    %vm2802 = vcmp.gt.f32.partialorder %v2798, 0.0
    %v2803 = vmul.f32 %v2795, 0.2
    %v2804 = vmul.f32 %v2796, 0.2
    %v2805 = vmul.f32 %v2797, 0.2
    %v2806 = vmul.f32 %v2798, 0.2
    %v2807 = vsel %vm2799, %v2795, %v2803
    %v2808 = vsel %vm2800, %v2796, %v2804
    %v2809 = vsel %vm2801, %v2797, %v2805
    %v2810 = vsel %vm2802, %v2798, %v2806
    %v2811 = vadd.f32 %v2807, %v2808
    %v2812 = vadd.f32 %v2811, %v2809
    %v2813 = vadd.f32 %v2812, %v2810
    %v2814 = vrot.slane %v2813, 4
    %v2815 = vadd.f32 %v2813, %v2814
    %v2816 = vrot.slane %v2815, 2
    %v2817 = vadd.f32 %v2815, %v2816
    %v2818 = vrot.slane %v2817, 1
    %v2819 = vadd.f32 %v2817, %v2818
    %v2820 = vmul.f32 %v2807, %v2807
    %v2821 = vmul.f32 %v2808, %v2808
    %v2822 = vmul.f32 %v2809, %v2809
    %v2823 = vmul.f32 %v2810, %v2810
    %v2824 = vadd.f32 %v2820, %v2821
    %v2825 = vadd.f32 %v2824, %v2822
    %v2826 = vadd.f32 %v2825, %v2823
    %v2827 = vrot.slane %v2826, 4
    %v2828 = vadd.f32 %v2826, %v2827
    %v2829 = vrot.slane %v2828, 2
    %v2830 = vadd.f32 %v2828, %v2829
    %v2831 = vrot.slane %v2830, 1
    %v2832 = vadd.f32 %v2830, %v2831
    %2834 = vrot.lane.b32.xlu0 %v2819, 120
    %v2835 = vpop.permute.xlu0 %2834
    %v2837 = vadd.f32 %v2819, %v2835
    %2838 = vrot.lane.b32.xlu0 %v2819, 112
    %v2839 = vpop.permute.xlu0 %2838
    %v2841 = vadd.f32 %v2837, %v2839
    %2842 = vrot.lane.b32.xlu0 %v2819, 104
    %v2843 = vpop.permute.xlu0 %2842
    %v2845 = vadd.f32 %v2841, %v2843
    %2846 = vrot.lane.b32.xlu0 %v2819, 96
    %v2847 = vpop.permute.xlu0 %2846
    %v2849 = vadd.f32 %v2845, %v2847
    %2850 = vrot.lane.b32.xlu0 %v2819, 88
    %v2851 = vpop.permute.xlu0 %2850
    %v2853 = vadd.f32 %v2849, %v2851
    %2854 = vrot.lane.b32.xlu0 %v2819, 80
    %v2855 = vpop.permute.xlu0 %2854
    %v2857 = vadd.f32 %v2853, %v2855
    %2858 = vrot.lane.b32.xlu0 %v2819, 72
    %v2859 = vpop.permute.xlu0 %2858
    %v2861 = vadd.f32 %v2857, %v2859
    %2862 = vrot.lane.b32.xlu0 %v2819, 64
    %v2863 = vpop.permute.xlu0 %2862
    %v2865 = vadd.f32 %v2861, %v2863
    %2866 = vrot.lane.b32.xlu0 %v2819, 56
    %v2867 = vpop.permute.xlu0 %2866
    %v2869 = vadd.f32 %v2865, %v2867
    %2870 = vrot.lane.b32.xlu0 %v2819, 48
    %v2871 = vpop.permute.xlu0 %2870
    %v2873 = vadd.f32 %v2869, %v2871
    %2874 = vrot.lane.b32.xlu0 %v2819, 40
    %v2875 = vpop.permute.xlu0 %2874
    %v2877 = vadd.f32 %v2873, %v2875
    %2878 = vrot.lane.b32.xlu0 %v2819, 32
    %v2879 = vpop.permute.xlu0 %2878
    %v2881 = vadd.f32 %v2877, %v2879
    %2882 = vrot.lane.b32.xlu0 %v2819, 24
    %v2883 = vpop.permute.xlu0 %2882
    %v2885 = vadd.f32 %v2881, %v2883
    %2886 = vrot.lane.b32.xlu0 %v2819, 16
    %v2887 = vpop.permute.xlu0 %2886
    %v2889 = vadd.f32 %v2885, %v2887
    %2890 = vrot.lane.b32.xlu0 %v2819, 8
    %v2891 = vpop.permute.xlu0 %2890
    %v2893 = vadd.f32 %v2889, %v2891
    %v2894 = vmul.f32 %v2893, 0.001953125
    %2896 = vrot.lane.b32.xlu0 %v2832, 120
    %v2897 = vpop.permute.xlu0 %2896
    %v2899 = vadd.f32 %v2832, %v2897
    %2900 = vrot.lane.b32.xlu0 %v2832, 112
    %v2901 = vpop.permute.xlu0 %2900
    %v2903 = vadd.f32 %v2899, %v2901
    %2904 = vrot.lane.b32.xlu0 %v2832, 104
    %v2905 = vpop.permute.xlu0 %2904
    %v2907 = vadd.f32 %v2903, %v2905
    %2908 = vrot.lane.b32.xlu0 %v2832, 96
    %v2909 = vpop.permute.xlu0 %2908
    %v2911 = vadd.f32 %v2907, %v2909
    %2912 = vrot.lane.b32.xlu0 %v2832, 88
    %v2913 = vpop.permute.xlu0 %2912
    %v2915 = vadd.f32 %v2911, %v2913
    %2916 = vrot.lane.b32.xlu0 %v2832, 80
    %v2917 = vpop.permute.xlu0 %2916
    %v2919 = vadd.f32 %v2915, %v2917
    %2920 = vrot.lane.b32.xlu0 %v2832, 72
    %v2921 = vpop.permute.xlu0 %2920
    %v2923 = vadd.f32 %v2919, %v2921
    %2924 = vrot.lane.b32.xlu0 %v2832, 64
    %v2925 = vpop.permute.xlu0 %2924
    %v2927 = vadd.f32 %v2923, %v2925
    %2928 = vrot.lane.b32.xlu0 %v2832, 56
    %v2929 = vpop.permute.xlu0 %2928
    %v2931 = vadd.f32 %v2927, %v2929
    %2932 = vrot.lane.b32.xlu0 %v2832, 48
    %v2933 = vpop.permute.xlu0 %2932
    %v2935 = vadd.f32 %v2931, %v2933
    %2936 = vrot.lane.b32.xlu0 %v2832, 40
    %v2937 = vpop.permute.xlu0 %2936
    %v2939 = vadd.f32 %v2935, %v2937
    %2940 = vrot.lane.b32.xlu0 %v2832, 32
    %v2941 = vpop.permute.xlu0 %2940
    %v2943 = vadd.f32 %v2939, %v2941
    %2944 = vrot.lane.b32.xlu0 %v2832, 24
    %v2945 = vpop.permute.xlu0 %2944
    %v2947 = vadd.f32 %v2943, %v2945
    %2948 = vrot.lane.b32.xlu0 %v2832, 16
    %v2949 = vpop.permute.xlu0 %2948
    %v2951 = vadd.f32 %v2947, %v2949
    %2952 = vrot.lane.b32.xlu0 %v2832, 8
    %v2953 = vpop.permute.xlu0 %2952
    %v2955 = vadd.f32 %v2951, %v2953
    %v2956 = vmul.f32 %v2955, 0.001953125
    %v2957 = vmul.f32 %v2894, %v2894
    %v2958 = vsub.f32 %v2956, %v2957
    %v2959 = vmax.f32 %v2958, 0.0
    %v2960 = vld [vmem:[%s7] sm:$0x1]
    %v2961 = vadd.f32 %v2959, 1e-05
    %v2962 = vrsqrt.pop %v2961
    %v2963 = vmul.f32 %v2960, %v2962
    %v2964 = vld [vmem:[%s8] sm:$0x1]
    %v2965 = vmul.f32 %v2894, %v2963
    %v2966 = vsub.f32 %v2964, %v2965
    %v2968 = vlaneseq
    %v2969 = vshrl.u32 %v2968, 7
    %v2970 = vsub.s32 0, %v2969
    %v2971 = vrot.slane %v2963, %v2970
    %2972 = vrot.lane.b32.xlu0 %v2971, 8
    %v2973 = vpop.permute.xlu0 %2972
    %2975 = vrot.lane.b32.xlu0 %v2971, 16
    %v2976 = vpop.permute.xlu0 %2975
    %2978 = vrot.lane.b32.xlu0 %v2971, 24
    %v2979 = vpop.permute.xlu0 %2978
    %2981 = vrot.lane.b32.xlu0 %v2971, 32
    %v2982 = vpop.permute.xlu0 %2981
    %2984 = vrot.lane.b32.xlu0 %v2971, 40
    %v2985 = vpop.permute.xlu0 %2984
    %2987 = vrot.lane.b32.xlu0 %v2971, 48
    %v2988 = vpop.permute.xlu0 %2987
    %2990 = vrot.lane.b32.xlu0 %v2971, 56
    %v2991 = vpop.permute.xlu0 %2990
    %2993 = vrot.lane.b32.xlu0 %v2971, 64
    %v2994 = vpop.permute.xlu0 %2993
    %2996 = vrot.lane.b32.xlu0 %v2971, 72
    %v2997 = vpop.permute.xlu0 %2996
    %2999 = vrot.lane.b32.xlu0 %v2971, 80
    %v3000 = vpop.permute.xlu0 %2999
    %3002 = vrot.lane.b32.xlu0 %v2971, 88
    %v3003 = vpop.permute.xlu0 %3002
    %3005 = vrot.lane.b32.xlu0 %v2971, 96
    %v3006 = vpop.permute.xlu0 %3005
    %3008 = vrot.lane.b32.xlu0 %v2971, 104
    %v3009 = vpop.permute.xlu0 %3008
    %3011 = vrot.lane.b32.xlu0 %v2971, 112
    %v3012 = vpop.permute.xlu0 %3011
    %3014 = vrot.lane.b32.xlu0 %v2971, 120
    %v3015 = vpop.permute.xlu0 %3014
    %v3017 = vsel %vm1367, %v2963, %v2973
    %v3018 = vsel %vm1369, %v3017, %v2976
    %v3019 = vsel %vm1371, %v3018, %v2979
    %v3020 = vsel %vm1373, %v3019, %v2982
    %v3021 = vsel %vm1375, %v3020, %v2985
    %v3022 = vsel %vm1377, %v3021, %v2988
    %v3023 = vsel %vm1379, %v3022, %v2991
    %v3024 = vsel %vm153, %v3023, %v2994
    %v3025 = vsel %vm1382, %v3024, %v2997
    %v3026 = vsel %vm1384, %v3025, %v3000
    %v3027 = vsel %vm1386, %v3026, %v3003
    %v3028 = vsel %vm1388, %v3027, %v3006
    %v3029 = vsel %vm1390, %v3028, %v3009
    %v3030 = vsel %vm1392, %v3029, %v3012
    %v3031 = vsel %vm1394, %v3030, %v3015
    %v3032 = vlaneseq
    %v3033 = vshrl.u32 %v3032, 7
    %v3034 = vsub.s32 0, %v3033
    %v3035 = vrot.slane %v3031, %v3034
    %v3036 = vmul.f32 %v2807, %v3035
    %v3037 = vmul.f32 %v2808, %v3035
    %v3038 = vmul.f32 %v2809, %v3035
    %v3039 = vmul.f32 %v2810, %v3035
    %v3041 = vlaneseq
    %v3042 = vshrl.u32 %v3041, 7
    %v3043 = vsub.s32 0, %v3042
    %v3044 = vrot.slane %v2966, %v3043
    %3045 = vrot.lane.b32.xlu0 %v3044, 8
    %v3046 = vpop.permute.xlu0 %3045
    %3048 = vrot.lane.b32.xlu0 %v3044, 16
    %v3049 = vpop.permute.xlu0 %3048
    %3051 = vrot.lane.b32.xlu0 %v3044, 24
    %v3052 = vpop.permute.xlu0 %3051
    %3054 = vrot.lane.b32.xlu0 %v3044, 32
    %v3055 = vpop.permute.xlu0 %3054
    %3057 = vrot.lane.b32.xlu0 %v3044, 40
    %v3058 = vpop.permute.xlu0 %3057
    %3060 = vrot.lane.b32.xlu0 %v3044, 48
    %v3061 = vpop.permute.xlu0 %3060
    %3063 = vrot.lane.b32.xlu0 %v3044, 56
    %v3064 = vpop.permute.xlu0 %3063
    %3066 = vrot.lane.b32.xlu0 %v3044, 64
    %v3067 = vpop.permute.xlu0 %3066
    %3069 = vrot.lane.b32.xlu0 %v3044, 72
    %v3070 = vpop.permute.xlu0 %3069
    %3072 = vrot.lane.b32.xlu0 %v3044, 80
    %v3073 = vpop.permute.xlu0 %3072
    %3075 = vrot.lane.b32.xlu0 %v3044, 88
    %v3076 = vpop.permute.xlu0 %3075
    %3078 = vrot.lane.b32.xlu0 %v3044, 96
    %v3079 = vpop.permute.xlu0 %3078
    %3081 = vrot.lane.b32.xlu0 %v3044, 104
    %v3082 = vpop.permute.xlu0 %3081
    %3084 = vrot.lane.b32.xlu0 %v3044, 112
    %v3085 = vpop.permute.xlu0 %3084
    %3087 = vrot.lane.b32.xlu0 %v3044, 120
    %v3088 = vpop.permute.xlu0 %3087
    %v3090 = vsel %vm1367, %v2966, %v3046
    %v3091 = vsel %vm1369, %v3090, %v3049
    %v3092 = vsel %vm1371, %v3091, %v3052
    %v3093 = vsel %vm1373, %v3092, %v3055
    %v3094 = vsel %vm1375, %v3093, %v3058
    %v3095 = vsel %vm1377, %v3094, %v3061
    %v3096 = vsel %vm1379, %v3095, %v3064
    %v3097 = vsel %vm153, %v3096, %v3067
    %v3098 = vsel %vm1382, %v3097, %v3070
    %v3099 = vsel %vm1384, %v3098, %v3073
    %v3100 = vsel %vm1386, %v3099, %v3076
    %v3101 = vsel %vm1388, %v3100, %v3079
    %v3102 = vsel %vm1390, %v3101, %v3082
    %v3103 = vsel %vm1392, %v3102, %v3085
    %v3104 = vsel %vm1394, %v3103, %v3088
    %v3105 = vlaneseq
    %v3106 = vshrl.u32 %v3105, 7
    %v3107 = vsub.s32 0, %v3106
    %v3108 = vrot.slane %v3104, %v3107
    %v3109 = vadd.f32 %v3036, %v3108
    %v3110 = vadd.f32 %v3037, %v3108
    %v3111 = vadd.f32 %v3038, %v3108
    %v3112 = vadd.f32 %v3039, %v3108
    %3113 = vst [vmem:[#allocation10] sm:$0xff] %v3109
    %3114 = vst [vmem:[#allocation10 + $0x8] sm:$0xff] %v3110
    %3115 = vst [vmem:[#allocation10 + $0x10] sm:$0xff] %v3111
    %3116 = vst [vmem:[#allocation10 + $0x18] sm:$0xff] %v3112
    // Predicated region
    $region50: #{tpu_custom_call.1} parent=1 // pred_check
      _
    $region51: #{tpu_custom_call.1} parent=1 // pred_check_branch
      %3118 = sbr.rel (0) target = $region53
    $region52: #{tpu_custom_call.1} parent=1 // pred_region
      %s3120 = ssub.s32 512, 512
      %3121 = vsyncadd [#allocation6], %s3120
      %s3122 = sshll.u32 [#allocation10], 4
      %s3123 = int_to_ptr.vmem [resolvable:$true] %s3122
      %3128 = dma.vmem_to_hbm [thread:$0]  %s3123, 512, %s9, [#allocation6], 128, 128, 8
    $region53: #{tpu_custom_call.1} parent=1 // pred_fallthru
      _
    // Predicated region
    $region54: #{tpu_custom_call.1} parent=1 // pred_check
      _
    $region55: #{tpu_custom_call.1} parent=1 // pred_check_branch
      %3130 = sbr.rel (0) target = $region57
    $region56: #{tpu_custom_call.1} parent=1 // pred_region
      %3131 = dma.done [#allocation6], 512
    $region57: #{tpu_custom_call.1} parent=1 // pred_fallthru
      _
    %3132 = vsyncpa [#allocation5], 1
    %3133 = vsyncpa [#allocation8], 1
    %3134 = vsyncpa [#allocation6], 1

</llo_original>
